<compile_context>
chip_gen: v5e
topology: v5e:2x2
jax: 0.10.0
libtpu: 0.0.40
codegen_flags: <defaults>
</compile_context>

<pallas_src>
import functools
import math

import jax
import jax.numpy as jnp
from jax.experimental import pallas as pl
from jax.experimental.pallas import tpu as pltpu


# ----------------------------------------------------------------------------
# Pallas kernel: one full ResidualAttentionBlock for a tile of batch elements.
# ----------------------------------------------------------------------------
def _block_kernel(*refs, n_head, has_mask):
    if has_mask:
        (x_ref, ln1g_ref, ln1b_ref, wqkv_ref, bqkv_ref, wout_ref, bout_ref,
         ln2g_ref, ln2b_ref, wfc_ref, bfc_ref, wproj_ref, bproj_ref,
         mask_ref, o_ref) = refs
    else:
        (x_ref, ln1g_ref, ln1b_ref, wqkv_ref, bqkv_ref, wout_ref, bout_ref,
         ln2g_ref, ln2b_ref, wfc_ref, bfc_ref, wproj_ref, bproj_ref,
         o_ref) = refs
        mask_ref = None

    B, L, D = x_ref.shape
    hd = D // n_head
    M = B * L
    f32 = jnp.float32
    mx_dtype = wqkv_ref.dtype                       # bf16 for the MXU operands

    # Flatten the batch tile so every dense matmul sees M = B_tile*L rows.
    x = x_ref[...].astype(f32).reshape(M, D)

    def layernorm(v, g, b):
        # LayerNorm always computed in fp32 (matches CLIP's LayerNorm subclass).
        mu = jnp.mean(v, axis=-1, keepdims=True)
        var = jnp.mean((v - mu) * (v - mu), axis=-1, keepdims=True)
        return (v - mu) * jax.lax.rsqrt(var + 1e-5) * g + b

    # ---- attention branch ---------------------------------------------------
    h = layernorm(x, ln1g_ref[0].astype(f32), ln1b_ref[0].astype(f32))
    # QK scale is pre-folded into the Q columns of w_qkv / b_qkv (host side).
    qkv = jnp.dot(h.astype(mx_dtype), wqkv_ref[...],
                  preferred_element_type=f32) + bqkv_ref[0]               # (M, 3D)

    q_all = qkv[:, :D]                  # lane-aligned full-width slabs
    k_all = qkv[:, D:2 * D]
    v_all = qkv[:, 2 * D:]

    if has_mask:
        mask = mask_ref[...]                                              # (L, L) additive

    # Per head: batched (over the batch tile) QK^T / softmax / PV.  The output
    # projection is fused into the loop: each head's (M, hd) output multiplies
    # the sublane-aligned row slice w_out[h*hd:(h+1)*hd, :] and accumulates
    # straight into the residual -- no attention scratch, no sub-128-lane
    # stores.  (Static unroll; for very large head counts a fori_loop over a
    # VMEM-staged qkv would further bound live ranges.)
    acc = x + bout_ref[0]                                                 # residual + out-proj bias
    for hh in range(n_head):
        lo = hh * hd
        qh = q_all[:, lo:lo + hd].reshape(B, L, hd)
        kh = k_all[:, lo:lo + hd].reshape(B, L, hd)
        vh = v_all[:, lo:lo + hd].reshape(B, L, hd)

        s = jnp.einsum("bqd,bkd->bqk",
                       qh.astype(mx_dtype), kh.astype(mx_dtype),
                       preferred_element_type=f32)                        # (B, L, L) fp32
        if has_mask:
            s = s + mask
        s = s - jnp.max(s, axis=-1, keepdims=True)
        p = jnp.exp(s)
        inv = pl.reciprocal(jnp.sum(p, axis=-1, keepdims=True), approx=True)  # (B, L, 1)
        oh = jnp.einsum("bqk,bkd->bqd",
                        p.astype(mx_dtype), vh.astype(mx_dtype),
                        preferred_element_type=f32) * inv                 # (B, L, hd)
        acc = acc + jnp.dot(oh.reshape(M, hd).astype(mx_dtype),
                            wout_ref[lo:lo + hd, :],
                            preferred_element_type=f32)
    x = acc                                                               # residual 1 done

    # ---- MLP branch ----------------------------------------------------------
    h2 = layernorm(x, ln2g_ref[0].astype(f32), ln2b_ref[0].astype(f32))
    ff = jnp.dot(h2.astype(mx_dtype), wfc_ref[...],
                 preferred_element_type=f32) + bfc_ref[0]                 # (M, 4D)
    ff = ff * jax.nn.sigmoid(1.702 * ff)                                  # QuickGELU (fp32)
    ff = jnp.dot(ff.astype(mx_dtype), wproj_ref[...],
                 preferred_element_type=f32) + bproj_ref[0]               # (M, D)
    o_ref[...] = (x + ff).reshape(B, L, D).astype(o_ref.dtype)            # residual 2


# ----------------------------------------------------------------------------
# pallas_call wrapper for one ResidualAttentionBlock.
# ----------------------------------------------------------------------------
_PARAM_ORDER = ("ln1_g", "ln1_b", "w_qkv", "b_qkv", "w_out", "b_out",
                "ln2_g", "ln2_b", "w_fc", "b_fc", "w_proj", "b_proj")


def _tpu_vmem_capacity():
    try:
        return int(pltpu.get_tpu_info().vmem_capacity_bytes)
    except Exception:                                   # be generation-safe
        return 64 << 20


def _estimate_vmem_bytes(b_tile, L, D, has_mask, single_buffer_consts):
    """Rough per-grid-step VMEM footprint estimate (bytes)."""
    m = b_tile * L
    wbytes = 24 * D * D                                  # bf16 weights: qkv(6)+out(2)+fc(8)+proj(8) D^2
    cbytes = 13 * D * 4                                  # biases + LN params fp32
    mbytes = L * L * 4 if has_mask else 0
    const = (wbytes + cbytes + mbytes) * (1 if single_buffer_consts else 2)
    io = 2 * 2 * m * D * 4                               # x / out blocks, double-buffered
    temps = m * D * 4 * 11                               # h, qkv(3), acc, h2, ff(4), out
    temps += b_tile * L * L * 4 * 3                      # per-head score/prob temps
    return const + io + temps + (8 << 20)                # + compiler slop


def _pick_b_tile(N, L, D, has_mask, vmem_cap, single_buffer_consts):
    """Largest batch-tile divisor of N that fits VMEM and fills the MXU M dim,
    keeping >= 2 grid steps when the batch allows (v7x has 2 TensorCores)."""
    budget = int(vmem_cap * 0.85)
    target_rows = 512 if vmem_cap >= (96 << 20) else 256
    best = 1
    for c in range(1, N + 1):
        if N % c:
            continue
        if c * L > max(target_rows, L):
            continue
        if _estimate_vmem_bytes(c, L, D, has_mask, single_buffer_consts) > budget:
            continue
        if N >= 2 and N // c < 2 and N // best >= 2:
            continue                                     # keep both TCs busy on v7x
        best = c
    return best


def _vmem_limit_bytes(b_tile, L, D, has_mask, vmem_cap, single_buffer_consts):
    need = _estimate_vmem_bytes(b_tile, L, D, has_mask, single_buffer_consts)
    return int(min(max(need, 32 << 20), int(vmem_cap * 0.85)))


def _fold_qk_scale(params, n_head):
    """Fold 1/sqrt(head_dim) into the Q columns of w_qkv / b_qkv (host side)."""
    D = params["w_out"].shape[0]
    hd = D // n_head
    scale = 1.0 / math.sqrt(hd)
    w, b = params["w_qkv"], params["b_qkv"]
    w_q = (w[:, :D].astype(jnp.float32) * scale).astype(w.dtype)
    b_q = (b[:, :D].astype(jnp.float32) * scale).astype(b.dtype)
    out = dict(params)
    out["w_qkv"] = jnp.concatenate([w_q, w[:, D:]], axis=1)
    out["b_qkv"] = jnp.concatenate([b_q, b[:, D:]], axis=1)
    return out


def _residual_block(x_nld, params, mask, n_head, b_tile, vmem_limit,
                    out_dtype, single_buffer_consts):
    """Run one ResidualAttentionBlock.  x_nld: (N, L, D)."""
    N, L, D = x_nld.shape
    assert N % b_tile == 0
    has_mask = mask is not None

    def const_spec(shape):
        nd = len(shape)
        if single_buffer_consts:
            # Constant across the batch grid -> single-buffer to halve VMEM.
            return pl.BlockSpec(shape, lambda b, nd=nd: (0,) * nd,
                                pipeline_mode=pl.Buffered(1))
        return pl.BlockSpec(shape, lambda b, nd=nd: (0,) * nd)

    weight_args = [params[k] for k in _PARAM_ORDER]
    in_specs = [pl.BlockSpec((b_tile, L, D), lambda b: (b, 0, 0))]        # x
    in_specs += [const_spec(w.shape) for w in weight_args]
    operands = [x_nld] + weight_args
    if has_mask:
        in_specs.append(const_spec(mask.shape))
        operands.append(mask)

    out_spec = pl.BlockSpec((b_tile, L, D), lambda b: (b, 0, 0))
    kernel = functools.partial(_block_kernel, n_head=n_head, has_mask=has_mask)
    return pl.pallas_call(
        kernel,
        out_shape=jax.ShapeDtypeStruct((N, L, D), out_dtype),
        grid_spec=pltpu.PrefetchScalarGridSpec(
            num_scalar_prefetch=0,
            grid=(N // b_tile,),
            in_specs=in_specs,
            out_specs=out_spec,
        ),
        compiler_params=pltpu.CompilerParams(
            dimension_semantics=("parallel",),
            vmem_limit_bytes=vmem_limit),
    )(*operands)


def transformer_forward(x_lnd, layer_params, n_head, attn_mask=None,
                        activation_dtype=jnp.bfloat16):
    """CLIP Transformer forward.  x_lnd: (L, N, D) like the PyTorch module.

    Inter-layer activations are handed between layers in `activation_dtype`
    (bf16 by default, halving HBM traffic); all in-kernel math stays fp32.
    """
    L, N, D = x_lnd.shape
    orig_dtype = x_lnd.dtype

    # Pad L to a sublane multiple; padded key positions are masked in every
    # layer so they never contribute to real rows.
    L_pad = ((L + 7) // 8) * 8
    padded = L_pad != L

    mask = None
    if attn_mask is not None or padded:
        mask = jnp.zeros((L_pad, L_pad), jnp.float32)
        if attn_mask is not None:
            mask = mask.at[:L, :L].set(attn_mask.astype(jnp.float32))
        if padded:
            mask = mask.at[:, L:].set(-1e9)

    x = jnp.transpose(x_lnd, (1, 0, 2))                     # (N, L, D)
    if padded:
        x = jnp.pad(x, ((0, 0), (0, L_pad - L), (0, 0)))

    vmem_cap = _tpu_vmem_capacity()
    has_mask = mask is not None
    single_buffer = True
    b_tile = _pick_b_tile(N, L_pad, D, has_mask, vmem_cap, single_buffer)
    vmem_limit = _vmem_limit_bytes(b_tile, L_pad, D, has_mask, vmem_cap,
                                   single_buffer)

    n_layers = len(layer_params)
    for i, params in enumerate(layer_params):
        kparams = _fold_qk_scale(params, n_head)
        out_dtype = orig_dtype if i == n_layers - 1 else activation_dtype
        if single_buffer:
            try:
                x = _residual_block(x, kparams, mask, n_head, b_tile,
                                    vmem_limit, out_dtype, True)
                continue
            except Exception:
                # pl.Buffered(1) not supported by this JAX build -- fall back
                # to default double-buffered constant operands.
                single_buffer = False
                vmem_limit = _vmem_limit_bytes(b_tile, L_pad, D, has_mask,
                                               vmem_cap, False)
        x = _residual_block(x, kparams, mask, n_head, b_tile, vmem_limit,
                            out_dtype, False)

    if padded:
        x = x[:, :L, :]
    return jnp.transpose(x, (1, 0, 2))                      # back to (L, N, D)


# ----------------------------------------------------------------------------
# Deterministic parameter construction (synthetic, not a checkpoint load).
# Weights are stored in bf16 (MXU operands); biases / LN params stay fp32.
# ----------------------------------------------------------------------------
def make_params(key, width, layers):
    layer_params = []
    for _ in range(layers):
        key, *ks = jax.random.split(key, 5)
        p = {
            "ln1_g": jnp.ones((1, width), jnp.float32),
            "ln1_b": jnp.zeros((1, width), jnp.float32),
            "w_qkv": (0.02 * jax.random.normal(ks[0], (width, 3 * width))).astype(jnp.bfloat16),
            "b_qkv": jnp.zeros((1, 3 * width), jnp.float32),
            "w_out": (0.02 * jax.random.normal(ks[1], (width, width))).astype(jnp.bfloat16),
            "b_out": jnp.zeros((1, width), jnp.float32),
            "ln2_g": jnp.ones((1, width), jnp.float32),
            "ln2_b": jnp.zeros((1, width), jnp.float32),
            "w_fc": (0.02 * jax.random.normal(ks[2], (width, 4 * width))).astype(jnp.bfloat16),
            "b_fc": jnp.zeros((1, 4 * width), jnp.float32),
            "w_proj": (0.02 * jax.random.normal(ks[3], (4 * width, width))).astype(jnp.bfloat16),
            "b_proj": jnp.zeros((1, width), jnp.float32),
        }
        layer_params.append(p)
    return layer_params


# ----------------------------------------------------------------------------
# Pure-JAX reference (same bf16 weights, fp32 math) for a sanity check.
# ----------------------------------------------------------------------------
def _ref_block(x, p, mask, n_head):      # x: (N, L, D)
    def ln(v, g, b):
        mu = v.mean(-1, keepdims=True)
        var = ((v - mu) ** 2).mean(-1, keepdims=True)
        return (v - mu) / jnp.sqrt(var + 1e-5) * g + b

    f32 = lambda a: a.astype(jnp.float32)
    N, L, D = x.shape
    hd = D // n_head
    h = ln(x, p["ln1_g"][0], p["ln1_b"][0])
    qkv = h @ f32(p["w_qkv"]) + p["b_qkv"][0]
    q, k, v = qkv[..., :D], qkv[..., D:2 * D], qkv[..., 2 * D:]
    q = q.reshape(N, L, n_head, hd).transpose(0, 2, 1, 3) / math.sqrt(hd)
    k = k.reshape(N, L, n_head, hd).transpose(0, 2, 1, 3)
    v = v.reshape(N, L, n_head, hd).transpose(0, 2, 1, 3)
    s = jnp.einsum("nhqd,nhkd->nhqk", q, k)
    if mask is not None:
        s = s + mask
    pattn = jax.nn.softmax(s, axis=-1)
    o = jnp.einsum("nhqk,nhkd->nhqd", pattn, v).transpose(0, 2, 1, 3).reshape(N, L, D)
    x = x + o @ f32(p["w_out"]) + p["b_out"][0]
    h2 = ln(x, p["ln2_g"][0], p["ln2_b"][0])
    ff = h2 @ f32(p["w_fc"]) + p["b_fc"][0]
    ff = ff * jax.nn.sigmoid(1.702 * ff)
    return x + ff @ f32(p["w_proj"]) + p["b_proj"][0]


def transformer_ref(x_lnd, layer_params, n_head, attn_mask=None):
    mask = None if attn_mask is None else attn_mask.astype(jnp.float32)
    x = jnp.transpose(x_lnd, (1, 0, 2))
    for p in layer_params:
        x = _ref_block(x, p, mask, n_head)
    return jnp.transpose(x, (1, 0, 2))


# ----------------------------------------------------------------------------
if __name__ == "__main__":
    L, N, D = 8, 2, 32        # seq, batch, width
    heads, layers = 4, 2

    key = jax.random.PRNGKey(0)
    kx, kx2, kp = jax.random.split(key, 3)
    x = jax.random.normal(kx, (L, N, D), jnp.float32)
    params = make_params(kp, D, layers)

    # 1) No-mask (ViT) path, fp32 inter-layer activations (exact structural ref).
    out = jax.block_until_ready(
        transformer_forward(x, params, heads, attn_mask=None,
                            activation_dtype=jnp.float32))
    ref = transformer_ref(x, params, heads, attn_mask=None)
    assert out.shape == (L, N, D)
    assert bool(jnp.all(jnp.isfinite(out)))
    assert bool(jnp.allclose(out, ref, atol=2e-2, rtol=2e-2)), "mismatch (no mask)"

    # 2) Causal-mask (text encoder) path.
    causal = jnp.triu(jnp.full((L, L), -1e9, jnp.float32), k=1)
    out_m = jax.block_until_ready(
        transformer_forward(x, params, heads, attn_mask=causal,
                            activation_dtype=jnp.float32))
    ref_m = transformer_ref(x, params, heads, attn_mask=causal)
    assert bool(jnp.all(jnp.isfinite(out_m)))
    assert bool(jnp.allclose(out_m, ref_m, atol=2e-2, rtol=2e-2)), "mismatch (mask)"

    # 3) Default perf path: bf16 inter-layer activations (looser tolerance for
    #    the bf16 residual-stream handoff).
    out_bf = jax.block_until_ready(transformer_forward(x, params, heads))
    assert bool(jnp.all(jnp.isfinite(out_bf)))
    assert bool(jnp.allclose(out_bf, ref, atol=3e-2, rtol=3e-2)), "mismatch (bf16 act)"

    # 4) Non-multiple-of-8 sequence length exercises the padding + key-mask path.
    L2 = 7
    x2 = jax.random.normal(kx2, (L2, N, D), jnp.float32)
    out_p = jax.block_until_ready(
        transformer_forward(x2, params, heads, attn_mask=None,
                            activation_dtype=jnp.float32))
    ref_p = transformer_ref(x2, params, heads, attn_mask=None)
    assert out_p.shape == (L2, N, D)
    assert bool(jnp.all(jnp.isfinite(out_p)))
    assert bool(jnp.allclose(out_p, ref_p, atol=2e-2, rtol=2e-2)), "mismatch (padded L)"

    print("KERNEL_OK")
</pallas_src>

<mosaic_0001>
module attributes {stable_mosaic.version = 11 : i64} {
  func.func @_block_kernel(%arg0: i32, %arg1: memref<1x8x32xf32, #tpu.memory_space<vmem>>, %arg2: memref<1x32xf32, #tpu.memory_space<vmem>>, %arg3: memref<1x32xf32, #tpu.memory_space<vmem>>, %arg4: memref<32x96xbf16, #tpu.memory_space<vmem>>, %arg5: memref<1x96xf32, #tpu.memory_space<vmem>>, %arg6: memref<32x32xbf16, #tpu.memory_space<vmem>>, %arg7: memref<1x32xf32, #tpu.memory_space<vmem>>, %arg8: memref<1x32xf32, #tpu.memory_space<vmem>>, %arg9: memref<1x32xf32, #tpu.memory_space<vmem>>, %arg10: memref<32x128xbf16, #tpu.memory_space<vmem>>, %arg11: memref<1x128xf32, #tpu.memory_space<vmem>>, %arg12: memref<128x32xbf16, #tpu.memory_space<vmem>>, %arg13: memref<1x32xf32, #tpu.memory_space<vmem>>, %arg14: memref<1x8x32xf32, #tpu.memory_space<vmem>>) attributes {dimension_semantics = [#tpu.dimension_semantics<parallel>], iteration_bounds = array<i64: 2>, scalar_prefetch = 0 : i64, scratch_operands = 0 : i64, tpu.core_type = #tpu.core_type<tc>, window_params = [{transform_indices = @transform_0, window_bounds = array<i64: 1, 8, 32>}, {pipeline_mode = #tpu.pipeline_mode<synchronous>, transform_indices = @transform_1, window_bounds = array<i64: 1, 32>}, {pipeline_mode = #tpu.pipeline_mode<synchronous>, transform_indices = @transform_2, window_bounds = array<i64: 1, 32>}, {pipeline_mode = #tpu.pipeline_mode<synchronous>, transform_indices = @transform_3, window_bounds = array<i64: 32, 96>}, {pipeline_mode = #tpu.pipeline_mode<synchronous>, transform_indices = @transform_4, window_bounds = array<i64: 1, 96>}, {pipeline_mode = #tpu.pipeline_mode<synchronous>, transform_indices = @transform_5, window_bounds = array<i64: 32, 32>}, {pipeline_mode = #tpu.pipeline_mode<synchronous>, transform_indices = @transform_6, window_bounds = array<i64: 1, 32>}, {pipeline_mode = #tpu.pipeline_mode<synchronous>, transform_indices = @transform_7, window_bounds = array<i64: 1, 32>}, {pipeline_mode = #tpu.pipeline_mode<synchronous>, transform_indices = @transform_8, window_bounds = array<i64: 1, 32>}, {pipeline_mode = #tpu.pipeline_mode<synchronous>, transform_indices = @transform_9, window_bounds = array<i64: 32, 128>}, {pipeline_mode = #tpu.pipeline_mode<synchronous>, transform_indices = @transform_10, window_bounds = array<i64: 1, 128>}, {pipeline_mode = #tpu.pipeline_mode<synchronous>, transform_indices = @transform_11, window_bounds = array<i64: 128, 32>}, {pipeline_mode = #tpu.pipeline_mode<synchronous>, transform_indices = @transform_12, window_bounds = array<i64: 1, 32>}, {transform_indices = @transform_13, window_bounds = array<i64: 1, 8, 32>}]} {
    %c0 = arith.constant 0 : index
    %c0_0 = arith.constant 0 : index
    %c0_1 = arith.constant 0 : index
    %0 = vector.load %arg1[%c0, %c0_0, %c0_1] : memref<1x8x32xf32, #tpu.memory_space<vmem>>, vector<1x8x32xf32>
    %1 = vector.shape_cast %0 : vector<1x8x32xf32> to vector<8x32xf32>
    %c0_2 = arith.constant 0 : index
    %c0_3 = arith.constant 0 : index
    %2 = vector.load %arg2[%c0_2, %c0_3] : memref<1x32xf32, #tpu.memory_space<vmem>>, vector<1x32xf32>
    %3 = vector.shape_cast %2 : vector<1x32xf32> to vector<32xf32>
    %c0_4 = arith.constant 0 : index
    %c0_5 = arith.constant 0 : index
    %4 = vector.load %arg3[%c0_4, %c0_5] : memref<1x32xf32, #tpu.memory_space<vmem>>, vector<1x32xf32>
    %5 = vector.shape_cast %4 : vector<1x32xf32> to vector<32xf32>
    %cst = arith.constant dense<0.000000e+00> : vector<8xf32>
    %6 = vector.multi_reduction <add>, %1, %cst [1] : vector<8x32xf32> to vector<8xf32>
    %7 = vector.shape_cast %6 : vector<8xf32> to vector<8x1xf32>
    %cst_6 = arith.constant 3.200000e+01 : f32
    %8 = vector.broadcast %cst_6 : f32 to vector<8x1xf32>
    %9 = arith.divf %7, %8 : vector<8x1xf32>
    %10 = vector.broadcast %9 : vector<8x1xf32> to vector<8x32xf32>
    %11 = arith.subf %1, %10 : vector<8x32xf32>
    %12 = vector.broadcast %9 : vector<8x1xf32> to vector<8x32xf32>
    %13 = arith.subf %1, %12 : vector<8x32xf32>
    %14 = arith.mulf %11, %13 : vector<8x32xf32>
    %cst_7 = arith.constant dense<0.000000e+00> : vector<8xf32>
    %15 = vector.multi_reduction <add>, %14, %cst_7 [1] : vector<8x32xf32> to vector<8xf32>
    %16 = vector.shape_cast %15 : vector<8xf32> to vector<8x1xf32>
    %cst_8 = arith.constant 3.200000e+01 : f32
    %17 = vector.broadcast %cst_8 : f32 to vector<8x1xf32>
    %18 = arith.divf %16, %17 : vector<8x1xf32>
    %19 = vector.broadcast %9 : vector<8x1xf32> to vector<8x32xf32>
    %20 = arith.subf %1, %19 : vector<8x32xf32>
    %cst_9 = arith.constant 9.99999974E-6 : f32
    %21 = vector.broadcast %cst_9 : f32 to vector<8x1xf32>
    %22 = arith.addf %18, %21 : vector<8x1xf32>
    %23 = math.rsqrt %22 : vector<8x1xf32>
    %24 = vector.broadcast %23 : vector<8x1xf32> to vector<8x32xf32>
    %25 = arith.mulf %20, %24 : vector<8x32xf32>
    %26 = vector.shape_cast %3 : vector<32xf32> to vector<1x32xf32>
    %27 = vector.broadcast %26 : vector<1x32xf32> to vector<8x32xf32>
    %28 = arith.mulf %25, %27 : vector<8x32xf32>
    %29 = vector.shape_cast %5 : vector<32xf32> to vector<1x32xf32>
    %30 = vector.broadcast %29 : vector<1x32xf32> to vector<8x32xf32>
    %31 = arith.addf %28, %30 : vector<8x32xf32>
    %32 = arith.truncf %31 : vector<8x32xf32> to vector<8x32xbf16>
    %c0_10 = arith.constant 0 : index
    %c0_11 = arith.constant 0 : index
    %33 = vector.load %arg4[%c0_10, %c0_11] : memref<32x96xbf16, #tpu.memory_space<vmem>>, vector<32x96xbf16>
    %cst_12 = arith.constant dense<0.000000e+00> : vector<8x96xf32>
    %34 = tpu.matmul %32, %33, %cst_12 {dimension_numbers = #tpu.dot_dimension_numbers<[1], [0], [0], [1], [0, 0, 1, 1], [], []>} : vector<8x32xbf16>, vector<32x96xbf16>, vector<8x96xf32> -> vector<8x96xf32>
    %c0_13 = arith.constant 0 : index
    %c0_14 = arith.constant 0 : index
    %35 = vector.load %arg5[%c0_13, %c0_14] : memref<1x96xf32, #tpu.memory_space<vmem>>, vector<1x96xf32>
    %36 = vector.shape_cast %35 : vector<1x96xf32> to vector<96xf32>
    %37 = vector.shape_cast %36 : vector<96xf32> to vector<1x96xf32>
    %38 = vector.broadcast %37 : vector<1x96xf32> to vector<8x96xf32>
    %39 = arith.addf %34, %38 : vector<8x96xf32>
    %40 = vector.extract_strided_slice %39 {offsets = [0, 0], sizes = [8, 32], strides = [1, 1]} : vector<8x96xf32> to vector<8x32xf32>
    %41 = vector.extract_strided_slice %39 {offsets = [0, 32], sizes = [8, 32], strides = [1, 1]} : vector<8x96xf32> to vector<8x32xf32>
    %42 = vector.extract_strided_slice %39 {offsets = [0, 64], sizes = [8, 32], strides = [1, 1]} : vector<8x96xf32> to vector<8x32xf32>
    %c0_15 = arith.constant 0 : index
    %c0_16 = arith.constant 0 : index
    %43 = vector.load %arg7[%c0_15, %c0_16] : memref<1x32xf32, #tpu.memory_space<vmem>>, vector<1x32xf32>
    %44 = vector.shape_cast %43 : vector<1x32xf32> to vector<32xf32>
    %45 = vector.shape_cast %44 : vector<32xf32> to vector<1x32xf32>
    %46 = vector.broadcast %45 : vector<1x32xf32> to vector<8x32xf32>
    %47 = arith.addf %1, %46 : vector<8x32xf32>
    %48 = vector.extract_strided_slice %40 {offsets = [0, 0], sizes = [8, 8], strides = [1, 1]} : vector<8x32xf32> to vector<8x8xf32>
    %49 = vector.shape_cast %48 : vector<8x8xf32> to vector<1x8x8xf32>
    %50 = vector.extract_strided_slice %41 {offsets = [0, 0], sizes = [8, 8], strides = [1, 1]} : vector<8x32xf32> to vector<8x8xf32>
    %51 = vector.shape_cast %50 : vector<8x8xf32> to vector<1x8x8xf32>
    %52 = vector.extract_strided_slice %42 {offsets = [0, 0], sizes = [8, 8], strides = [1, 1]} : vector<8x32xf32> to vector<8x8xf32>
    %53 = vector.shape_cast %52 : vector<8x8xf32> to vector<1x8x8xf32>
    %54 = arith.truncf %49 : vector<1x8x8xf32> to vector<1x8x8xbf16>
    %55 = arith.truncf %51 : vector<1x8x8xf32> to vector<1x8x8xbf16>
    "tpu.trace_start"() <{level = 10 : i32, message = "bqd,bkd->bqk"}> : () -> ()
    %cst_17 = arith.constant dense<0.000000e+00> : vector<1x8x8xf32>
    %56 = tpu.matmul %54, %55, %cst_17 {dimension_numbers = #tpu.dot_dimension_numbers<[2], [2], [1], [1], [0, 0, 0, 1, 1, 1], [0], [0]>} : vector<1x8x8xbf16>, vector<1x8x8xbf16>, vector<1x8x8xf32> -> vector<1x8x8xf32>
    "tpu.trace_stop"() : () -> ()
    %cst_18 = arith.constant dense<0xFF800000> : vector<1x8xf32>
    %57 = vector.multi_reduction <maximumf>, %56, %cst_18 [2] : vector<1x8x8xf32> to vector<1x8xf32>
    %58 = vector.shape_cast %57 : vector<1x8xf32> to vector<1x8x1xf32>
    %59 = vector.broadcast %58 : vector<1x8x1xf32> to vector<1x8x8xf32>
    %60 = arith.subf %56, %59 : vector<1x8x8xf32>
    %61 = math.exp %60 : vector<1x8x8xf32>
    %cst_19 = arith.constant dense<0.000000e+00> : vector<1x8xf32>
    %62 = vector.multi_reduction <add>, %61, %cst_19 [2] : vector<1x8x8xf32> to vector<1x8xf32>
    %63 = vector.shape_cast %62 : vector<1x8xf32> to vector<1x8x1xf32>
    %64 = tpu.reciprocal %63 {approx = true} : vector<1x8x1xf32> -> vector<1x8x1xf32>
    %65 = arith.truncf %61 : vector<1x8x8xf32> to vector<1x8x8xbf16>
    %66 = arith.truncf %53 : vector<1x8x8xf32> to vector<1x8x8xbf16>
    "tpu.trace_start"() <{level = 10 : i32, message = "bqk,bkd->bqd"}> : () -> ()
    %cst_20 = arith.constant dense<0.000000e+00> : vector<1x8x8xf32>
    %67 = tpu.matmul %65, %66, %cst_20 {dimension_numbers = #tpu.dot_dimension_numbers<[2], [1], [1], [2], [0, 0, 0, 1, 1, 2], [0], [0]>} : vector<1x8x8xbf16>, vector<1x8x8xbf16>, vector<1x8x8xf32> -> vector<1x8x8xf32>
    "tpu.trace_stop"() : () -> ()
    %68 = vector.broadcast %64 : vector<1x8x1xf32> to vector<1x8x8xf32>
    %69 = arith.mulf %67, %68 : vector<1x8x8xf32>
    %70 = vector.shape_cast %69 : vector<1x8x8xf32> to vector<8x8xf32>
    %71 = arith.truncf %70 : vector<8x8xf32> to vector<8x8xbf16>
    %c0_21 = arith.constant 0 : index
    %c0_22 = arith.constant 0 : index
    %72 = vector.load %arg6[%c0_21, %c0_22] : memref<32x32xbf16, #tpu.memory_space<vmem>>, vector<8x32xbf16>
    %cst_23 = arith.constant dense<0.000000e+00> : vector<8x32xf32>
    %73 = tpu.matmul %71, %72, %cst_23 {dimension_numbers = #tpu.dot_dimension_numbers<[1], [0], [0], [1], [0, 0, 1, 1], [], []>} : vector<8x8xbf16>, vector<8x32xbf16>, vector<8x32xf32> -> vector<8x32xf32>
    %74 = arith.addf %47, %73 : vector<8x32xf32>
    %75 = vector.extract_strided_slice %40 {offsets = [0, 8], sizes = [8, 8], strides = [1, 1]} : vector<8x32xf32> to vector<8x8xf32>
    %76 = vector.shape_cast %75 : vector<8x8xf32> to vector<1x8x8xf32>
    %77 = vector.extract_strided_slice %41 {offsets = [0, 8], sizes = [8, 8], strides = [1, 1]} : vector<8x32xf32> to vector<8x8xf32>
    %78 = vector.shape_cast %77 : vector<8x8xf32> to vector<1x8x8xf32>
    %79 = vector.extract_strided_slice %42 {offsets = [0, 8], sizes = [8, 8], strides = [1, 1]} : vector<8x32xf32> to vector<8x8xf32>
    %80 = vector.shape_cast %79 : vector<8x8xf32> to vector<1x8x8xf32>
    %81 = arith.truncf %76 : vector<1x8x8xf32> to vector<1x8x8xbf16>
    %82 = arith.truncf %78 : vector<1x8x8xf32> to vector<1x8x8xbf16>
    "tpu.trace_start"() <{level = 10 : i32, message = "bqd,bkd->bqk"}> : () -> ()
    %cst_24 = arith.constant dense<0.000000e+00> : vector<1x8x8xf32>
    %83 = tpu.matmul %81, %82, %cst_24 {dimension_numbers = #tpu.dot_dimension_numbers<[2], [2], [1], [1], [0, 0, 0, 1, 1, 1], [0], [0]>} : vector<1x8x8xbf16>, vector<1x8x8xbf16>, vector<1x8x8xf32> -> vector<1x8x8xf32>
    "tpu.trace_stop"() : () -> ()
    %cst_25 = arith.constant dense<0xFF800000> : vector<1x8xf32>
    %84 = vector.multi_reduction <maximumf>, %83, %cst_25 [2] : vector<1x8x8xf32> to vector<1x8xf32>
    %85 = vector.shape_cast %84 : vector<1x8xf32> to vector<1x8x1xf32>
    %86 = vector.broadcast %85 : vector<1x8x1xf32> to vector<1x8x8xf32>
    %87 = arith.subf %83, %86 : vector<1x8x8xf32>
    %88 = math.exp %87 : vector<1x8x8xf32>
    %cst_26 = arith.constant dense<0.000000e+00> : vector<1x8xf32>
    %89 = vector.multi_reduction <add>, %88, %cst_26 [2] : vector<1x8x8xf32> to vector<1x8xf32>
    %90 = vector.shape_cast %89 : vector<1x8xf32> to vector<1x8x1xf32>
    %91 = tpu.reciprocal %90 {approx = true} : vector<1x8x1xf32> -> vector<1x8x1xf32>
    %92 = arith.truncf %88 : vector<1x8x8xf32> to vector<1x8x8xbf16>
    %93 = arith.truncf %80 : vector<1x8x8xf32> to vector<1x8x8xbf16>
    "tpu.trace_start"() <{level = 10 : i32, message = "bqk,bkd->bqd"}> : () -> ()
    %cst_27 = arith.constant dense<0.000000e+00> : vector<1x8x8xf32>
    %94 = tpu.matmul %92, %93, %cst_27 {dimension_numbers = #tpu.dot_dimension_numbers<[2], [1], [1], [2], [0, 0, 0, 1, 1, 2], [0], [0]>} : vector<1x8x8xbf16>, vector<1x8x8xbf16>, vector<1x8x8xf32> -> vector<1x8x8xf32>
    "tpu.trace_stop"() : () -> ()
    %95 = vector.broadcast %91 : vector<1x8x1xf32> to vector<1x8x8xf32>
    %96 = arith.mulf %94, %95 : vector<1x8x8xf32>
    %97 = vector.shape_cast %96 : vector<1x8x8xf32> to vector<8x8xf32>
    %98 = arith.truncf %97 : vector<8x8xf32> to vector<8x8xbf16>
    %c8 = arith.constant 8 : index
    %c0_28 = arith.constant 0 : index
    %99 = vector.load %arg6[%c8, %c0_28] : memref<32x32xbf16, #tpu.memory_space<vmem>>, vector<8x32xbf16>
    %cst_29 = arith.constant dense<0.000000e+00> : vector<8x32xf32>
    %100 = tpu.matmul %98, %99, %cst_29 {dimension_numbers = #tpu.dot_dimension_numbers<[1], [0], [0], [1], [0, 0, 1, 1], [], []>} : vector<8x8xbf16>, vector<8x32xbf16>, vector<8x32xf32> -> vector<8x32xf32>
    %101 = arith.addf %74, %100 : vector<8x32xf32>
    %102 = vector.extract_strided_slice %40 {offsets = [0, 16], sizes = [8, 8], strides = [1, 1]} : vector<8x32xf32> to vector<8x8xf32>
    %103 = vector.shape_cast %102 : vector<8x8xf32> to vector<1x8x8xf32>
    %104 = vector.extract_strided_slice %41 {offsets = [0, 16], sizes = [8, 8], strides = [1, 1]} : vector<8x32xf32> to vector<8x8xf32>
    %105 = vector.shape_cast %104 : vector<8x8xf32> to vector<1x8x8xf32>
    %106 = vector.extract_strided_slice %42 {offsets = [0, 16], sizes = [8, 8], strides = [1, 1]} : vector<8x32xf32> to vector<8x8xf32>
    %107 = vector.shape_cast %106 : vector<8x8xf32> to vector<1x8x8xf32>
    %108 = arith.truncf %103 : vector<1x8x8xf32> to vector<1x8x8xbf16>
    %109 = arith.truncf %105 : vector<1x8x8xf32> to vector<1x8x8xbf16>
    "tpu.trace_start"() <{level = 10 : i32, message = "bqd,bkd->bqk"}> : () -> ()
    %cst_30 = arith.constant dense<0.000000e+00> : vector<1x8x8xf32>
    %110 = tpu.matmul %108, %109, %cst_30 {dimension_numbers = #tpu.dot_dimension_numbers<[2], [2], [1], [1], [0, 0, 0, 1, 1, 1], [0], [0]>} : vector<1x8x8xbf16>, vector<1x8x8xbf16>, vector<1x8x8xf32> -> vector<1x8x8xf32>
    "tpu.trace_stop"() : () -> ()
    %cst_31 = arith.constant dense<0xFF800000> : vector<1x8xf32>
    %111 = vector.multi_reduction <maximumf>, %110, %cst_31 [2] : vector<1x8x8xf32> to vector<1x8xf32>
    %112 = vector.shape_cast %111 : vector<1x8xf32> to vector<1x8x1xf32>
    %113 = vector.broadcast %112 : vector<1x8x1xf32> to vector<1x8x8xf32>
    %114 = arith.subf %110, %113 : vector<1x8x8xf32>
    %115 = math.exp %114 : vector<1x8x8xf32>
    %cst_32 = arith.constant dense<0.000000e+00> : vector<1x8xf32>
    %116 = vector.multi_reduction <add>, %115, %cst_32 [2] : vector<1x8x8xf32> to vector<1x8xf32>
    %117 = vector.shape_cast %116 : vector<1x8xf32> to vector<1x8x1xf32>
    %118 = tpu.reciprocal %117 {approx = true} : vector<1x8x1xf32> -> vector<1x8x1xf32>
    %119 = arith.truncf %115 : vector<1x8x8xf32> to vector<1x8x8xbf16>
    %120 = arith.truncf %107 : vector<1x8x8xf32> to vector<1x8x8xbf16>
    "tpu.trace_start"() <{level = 10 : i32, message = "bqk,bkd->bqd"}> : () -> ()
    %cst_33 = arith.constant dense<0.000000e+00> : vector<1x8x8xf32>
    %121 = tpu.matmul %119, %120, %cst_33 {dimension_numbers = #tpu.dot_dimension_numbers<[2], [1], [1], [2], [0, 0, 0, 1, 1, 2], [0], [0]>} : vector<1x8x8xbf16>, vector<1x8x8xbf16>, vector<1x8x8xf32> -> vector<1x8x8xf32>
    "tpu.trace_stop"() : () -> ()
    %122 = vector.broadcast %118 : vector<1x8x1xf32> to vector<1x8x8xf32>
    %123 = arith.mulf %121, %122 : vector<1x8x8xf32>
    %124 = vector.shape_cast %123 : vector<1x8x8xf32> to vector<8x8xf32>
    %125 = arith.truncf %124 : vector<8x8xf32> to vector<8x8xbf16>
    %c16 = arith.constant 16 : index
    %c0_34 = arith.constant 0 : index
    %126 = vector.load %arg6[%c16, %c0_34] : memref<32x32xbf16, #tpu.memory_space<vmem>>, vector<8x32xbf16>
    %cst_35 = arith.constant dense<0.000000e+00> : vector<8x32xf32>
    %127 = tpu.matmul %125, %126, %cst_35 {dimension_numbers = #tpu.dot_dimension_numbers<[1], [0], [0], [1], [0, 0, 1, 1], [], []>} : vector<8x8xbf16>, vector<8x32xbf16>, vector<8x32xf32> -> vector<8x32xf32>
    %128 = arith.addf %101, %127 : vector<8x32xf32>
    %129 = vector.extract_strided_slice %40 {offsets = [0, 24], sizes = [8, 8], strides = [1, 1]} : vector<8x32xf32> to vector<8x8xf32>
    %130 = vector.shape_cast %129 : vector<8x8xf32> to vector<1x8x8xf32>
    %131 = vector.extract_strided_slice %41 {offsets = [0, 24], sizes = [8, 8], strides = [1, 1]} : vector<8x32xf32> to vector<8x8xf32>
    %132 = vector.shape_cast %131 : vector<8x8xf32> to vector<1x8x8xf32>
    %133 = vector.extract_strided_slice %42 {offsets = [0, 24], sizes = [8, 8], strides = [1, 1]} : vector<8x32xf32> to vector<8x8xf32>
    %134 = vector.shape_cast %133 : vector<8x8xf32> to vector<1x8x8xf32>
    %135 = arith.truncf %130 : vector<1x8x8xf32> to vector<1x8x8xbf16>
    %136 = arith.truncf %132 : vector<1x8x8xf32> to vector<1x8x8xbf16>
    "tpu.trace_start"() <{level = 10 : i32, message = "bqd,bkd->bqk"}> : () -> ()
    %cst_36 = arith.constant dense<0.000000e+00> : vector<1x8x8xf32>
    %137 = tpu.matmul %135, %136, %cst_36 {dimension_numbers = #tpu.dot_dimension_numbers<[2], [2], [1], [1], [0, 0, 0, 1, 1, 1], [0], [0]>} : vector<1x8x8xbf16>, vector<1x8x8xbf16>, vector<1x8x8xf32> -> vector<1x8x8xf32>
    "tpu.trace_stop"() : () -> ()
    %cst_37 = arith.constant dense<0xFF800000> : vector<1x8xf32>
    %138 = vector.multi_reduction <maximumf>, %137, %cst_37 [2] : vector<1x8x8xf32> to vector<1x8xf32>
    %139 = vector.shape_cast %138 : vector<1x8xf32> to vector<1x8x1xf32>
    %140 = vector.broadcast %139 : vector<1x8x1xf32> to vector<1x8x8xf32>
    %141 = arith.subf %137, %140 : vector<1x8x8xf32>
    %142 = math.exp %141 : vector<1x8x8xf32>
    %cst_38 = arith.constant dense<0.000000e+00> : vector<1x8xf32>
    %143 = vector.multi_reduction <add>, %142, %cst_38 [2] : vector<1x8x8xf32> to vector<1x8xf32>
    %144 = vector.shape_cast %143 : vector<1x8xf32> to vector<1x8x1xf32>
    %145 = tpu.reciprocal %144 {approx = true} : vector<1x8x1xf32> -> vector<1x8x1xf32>
    %146 = arith.truncf %142 : vector<1x8x8xf32> to vector<1x8x8xbf16>
    %147 = arith.truncf %134 : vector<1x8x8xf32> to vector<1x8x8xbf16>
    "tpu.trace_start"() <{level = 10 : i32, message = "bqk,bkd->bqd"}> : () -> ()
    %cst_39 = arith.constant dense<0.000000e+00> : vector<1x8x8xf32>
    %148 = tpu.matmul %146, %147, %cst_39 {dimension_numbers = #tpu.dot_dimension_numbers<[2], [1], [1], [2], [0, 0, 0, 1, 1, 2], [0], [0]>} : vector<1x8x8xbf16>, vector<1x8x8xbf16>, vector<1x8x8xf32> -> vector<1x8x8xf32>
    "tpu.trace_stop"() : () -> ()
    %149 = vector.broadcast %145 : vector<1x8x1xf32> to vector<1x8x8xf32>
    %150 = arith.mulf %148, %149 : vector<1x8x8xf32>
    %151 = vector.shape_cast %150 : vector<1x8x8xf32> to vector<8x8xf32>
    %152 = arith.truncf %151 : vector<8x8xf32> to vector<8x8xbf16>
    %c24 = arith.constant 24 : index
    %c0_40 = arith.constant 0 : index
    %153 = vector.load %arg6[%c24, %c0_40] : memref<32x32xbf16, #tpu.memory_space<vmem>>, vector<8x32xbf16>
    %cst_41 = arith.constant dense<0.000000e+00> : vector<8x32xf32>
    %154 = tpu.matmul %152, %153, %cst_41 {dimension_numbers = #tpu.dot_dimension_numbers<[1], [0], [0], [1], [0, 0, 1, 1], [], []>} : vector<8x8xbf16>, vector<8x32xbf16>, vector<8x32xf32> -> vector<8x32xf32>
    %155 = arith.addf %128, %154 : vector<8x32xf32>
    %c0_42 = arith.constant 0 : index
    %c0_43 = arith.constant 0 : index
    %156 = vector.load %arg8[%c0_42, %c0_43] : memref<1x32xf32, #tpu.memory_space<vmem>>, vector<1x32xf32>
    %157 = vector.shape_cast %156 : vector<1x32xf32> to vector<32xf32>
    %c0_44 = arith.constant 0 : index
    %c0_45 = arith.constant 0 : index
    %158 = vector.load %arg9[%c0_44, %c0_45] : memref<1x32xf32, #tpu.memory_space<vmem>>, vector<1x32xf32>
    %159 = vector.shape_cast %158 : vector<1x32xf32> to vector<32xf32>
    %cst_46 = arith.constant dense<0.000000e+00> : vector<8xf32>
    %160 = vector.multi_reduction <add>, %155, %cst_46 [1] : vector<8x32xf32> to vector<8xf32>
    %161 = vector.shape_cast %160 : vector<8xf32> to vector<8x1xf32>
    %cst_47 = arith.constant 3.200000e+01 : f32
    %162 = vector.broadcast %cst_47 : f32 to vector<8x1xf32>
    %163 = arith.divf %161, %162 : vector<8x1xf32>
    %164 = vector.broadcast %163 : vector<8x1xf32> to vector<8x32xf32>
    %165 = arith.subf %155, %164 : vector<8x32xf32>
    %166 = vector.broadcast %163 : vector<8x1xf32> to vector<8x32xf32>
    %167 = arith.subf %155, %166 : vector<8x32xf32>
    %168 = arith.mulf %165, %167 : vector<8x32xf32>
    %cst_48 = arith.constant dense<0.000000e+00> : vector<8xf32>
    %169 = vector.multi_reduction <add>, %168, %cst_48 [1] : vector<8x32xf32> to vector<8xf32>
    %170 = vector.shape_cast %169 : vector<8xf32> to vector<8x1xf32>
    %cst_49 = arith.constant 3.200000e+01 : f32
    %171 = vector.broadcast %cst_49 : f32 to vector<8x1xf32>
    %172 = arith.divf %170, %171 : vector<8x1xf32>
    %173 = vector.broadcast %163 : vector<8x1xf32> to vector<8x32xf32>
    %174 = arith.subf %155, %173 : vector<8x32xf32>
    %cst_50 = arith.constant 9.99999974E-6 : f32
    %175 = vector.broadcast %cst_50 : f32 to vector<8x1xf32>
    %176 = arith.addf %172, %175 : vector<8x1xf32>
    %177 = math.rsqrt %176 : vector<8x1xf32>
    %178 = vector.broadcast %177 : vector<8x1xf32> to vector<8x32xf32>
    %179 = arith.mulf %174, %178 : vector<8x32xf32>
    %180 = vector.shape_cast %157 : vector<32xf32> to vector<1x32xf32>
    %181 = vector.broadcast %180 : vector<1x32xf32> to vector<8x32xf32>
    %182 = arith.mulf %179, %181 : vector<8x32xf32>
    %183 = vector.shape_cast %159 : vector<32xf32> to vector<1x32xf32>
    %184 = vector.broadcast %183 : vector<1x32xf32> to vector<8x32xf32>
    %185 = arith.addf %182, %184 : vector<8x32xf32>
    %186 = arith.truncf %185 : vector<8x32xf32> to vector<8x32xbf16>
    %c0_51 = arith.constant 0 : index
    %c0_52 = arith.constant 0 : index
    %187 = vector.load %arg10[%c0_51, %c0_52] : memref<32x128xbf16, #tpu.memory_space<vmem>>, vector<32x128xbf16>
    %cst_53 = arith.constant dense<0.000000e+00> : vector<8x128xf32>
    %188 = tpu.matmul %186, %187, %cst_53 {dimension_numbers = #tpu.dot_dimension_numbers<[1], [0], [0], [1], [0, 0, 1, 1], [], []>} : vector<8x32xbf16>, vector<32x128xbf16>, vector<8x128xf32> -> vector<8x128xf32>
    %c0_54 = arith.constant 0 : index
    %c0_55 = arith.constant 0 : index
    %189 = vector.load %arg11[%c0_54, %c0_55] : memref<1x128xf32, #tpu.memory_space<vmem>>, vector<1x128xf32>
    %190 = vector.shape_cast %189 : vector<1x128xf32> to vector<128xf32>
    %191 = vector.shape_cast %190 : vector<128xf32> to vector<1x128xf32>
    %192 = vector.broadcast %191 : vector<1x128xf32> to vector<8x128xf32>
    %193 = arith.addf %188, %192 : vector<8x128xf32>
    %cst_56 = arith.constant 1.702000e+00 : f32
    %194 = vector.broadcast %cst_56 : f32 to vector<8x128xf32>
    %195 = arith.mulf %194, %193 : vector<8x128xf32>
    %196 = arith.negf %195 : vector<8x128xf32>
    %197 = math.exp %196 : vector<8x128xf32>
    %cst_57 = arith.constant 1.000000e+00 : f32
    %198 = vector.broadcast %cst_57 : f32 to vector<8x128xf32>
    %199 = arith.addf %198, %197 : vector<8x128xf32>
    %200 = arith.divf %198, %199 : vector<8x128xf32>
    %201 = arith.mulf %193, %200 : vector<8x128xf32>
    %202 = arith.truncf %201 : vector<8x128xf32> to vector<8x128xbf16>
    %c0_58 = arith.constant 0 : index
    %c0_59 = arith.constant 0 : index
    %203 = vector.load %arg12[%c0_58, %c0_59] : memref<128x32xbf16, #tpu.memory_space<vmem>>, vector<128x32xbf16>
    %cst_60 = arith.constant dense<0.000000e+00> : vector<8x32xf32>
    %204 = tpu.matmul %202, %203, %cst_60 {dimension_numbers = #tpu.dot_dimension_numbers<[1], [0], [0], [1], [0, 0, 1, 1], [], []>} : vector<8x128xbf16>, vector<128x32xbf16>, vector<8x32xf32> -> vector<8x32xf32>
    %c0_61 = arith.constant 0 : index
    %c0_62 = arith.constant 0 : index
    %205 = vector.load %arg13[%c0_61, %c0_62] : memref<1x32xf32, #tpu.memory_space<vmem>>, vector<1x32xf32>
    %206 = vector.shape_cast %205 : vector<1x32xf32> to vector<32xf32>
    %207 = vector.shape_cast %206 : vector<32xf32> to vector<1x32xf32>
    %208 = vector.broadcast %207 : vector<1x32xf32> to vector<8x32xf32>
    %209 = arith.addf %204, %208 : vector<8x32xf32>
    %210 = arith.addf %155, %209 : vector<8x32xf32>
    %211 = vector.shape_cast %210 : vector<8x32xf32> to vector<1x8x32xf32>
    %c0_63 = arith.constant 0 : index
    %c0_64 = arith.constant 0 : index
    %c0_65 = arith.constant 0 : index
    %212 = vector.load %arg14[%c0_63, %c0_64, %c0_65] : memref<1x8x32xf32, #tpu.memory_space<vmem>>, vector<1x8x32xf32>
    tpu.vector_store %arg14[%c0_63, %c0_64, %c0_65], %211 {strides = array<i32>} : memref<1x8x32xf32, #tpu.memory_space<vmem>>, vector<1x8x32xf32>,
    return
  }
  func.func @transform_0(%arg0: i32) -> (i32, i32, i32) {
    %c0_i32 = arith.constant 0 : i32
    %c0_i32_0 = arith.constant 0 : i32
    %c0_i32_1 = arith.constant 0 : i32
    return %arg0, %c0_i32, %c0_i32_0 : i32, i32, i32
  }
  func.func @transform_1(%arg0: i32) -> (i32, i32) {
    %c0_i32 = arith.constant 0 : i32
    %c0_i32_0 = arith.constant 0 : i32
    %c0_i32_1 = arith.constant 0 : i32
    return %c0_i32, %c0_i32_0 : i32, i32
  }
  func.func @transform_2(%arg0: i32) -> (i32, i32) {
    %c0_i32 = arith.constant 0 : i32
    %c0_i32_0 = arith.constant 0 : i32
    %c0_i32_1 = arith.constant 0 : i32
    return %c0_i32, %c0_i32_0 : i32, i32
  }
  func.func @transform_3(%arg0: i32) -> (i32, i32) {
    %c0_i32 = arith.constant 0 : i32
    %c0_i32_0 = arith.constant 0 : i32
    %c0_i32_1 = arith.constant 0 : i32
    return %c0_i32, %c0_i32_0 : i32, i32
  }
  func.func @transform_4(%arg0: i32) -> (i32, i32) {
    %c0_i32 = arith.constant 0 : i32
    %c0_i32_0 = arith.constant 0 : i32
    %c0_i32_1 = arith.constant 0 : i32
    return %c0_i32, %c0_i32_0 : i32, i32
  }
  func.func @transform_5(%arg0: i32) -> (i32, i32) {
    %c0_i32 = arith.constant 0 : i32
    %c0_i32_0 = arith.constant 0 : i32
    %c0_i32_1 = arith.constant 0 : i32
    return %c0_i32, %c0_i32_0 : i32, i32
  }
  func.func @transform_6(%arg0: i32) -> (i32, i32) {
    %c0_i32 = arith.constant 0 : i32
    %c0_i32_0 = arith.constant 0 : i32
    %c0_i32_1 = arith.constant 0 : i32
    return %c0_i32, %c0_i32_0 : i32, i32
  }
  func.func @transform_7(%arg0: i32) -> (i32, i32) {
    %c0_i32 = arith.constant 0 : i32
    %c0_i32_0 = arith.constant 0 : i32
    %c0_i32_1 = arith.constant 0 : i32
    return %c0_i32, %c0_i32_0 : i32, i32
  }
  func.func @transform_8(%arg0: i32) -> (i32, i32) {
    %c0_i32 = arith.constant 0 : i32
    %c0_i32_0 = arith.constant 0 : i32
    %c0_i32_1 = arith.constant 0 : i32
    return %c0_i32, %c0_i32_0 : i32, i32
  }
  func.func @transform_9(%arg0: i32) -> (i32, i32) {
    %c0_i32 = arith.constant 0 : i32
    %c0_i32_0 = arith.constant 0 : i32
    %c0_i32_1 = arith.constant 0 : i32
    return %c0_i32, %c0_i32_0 : i32, i32
  }
  func.func @transform_10(%arg0: i32) -> (i32, i32) {
    %c0_i32 = arith.constant 0 : i32
    %c0_i32_0 = arith.constant 0 : i32
    %c0_i32_1 = arith.constant 0 : i32
    return %c0_i32, %c0_i32_0 : i32, i32
  }
  func.func @transform_11(%arg0: i32) -> (i32, i32) {
    %c0_i32 = arith.constant 0 : i32
    %c0_i32_0 = arith.constant 0 : i32
    %c0_i32_1 = arith.constant 0 : i32
    return %c0_i32, %c0_i32_0 : i32, i32
  }
  func.func @transform_12(%arg0: i32) -> (i32, i32) {
    %c0_i32 = arith.constant 0 : i32
    %c0_i32_0 = arith.constant 0 : i32
    %c0_i32_1 = arith.constant 0 : i32
    return %c0_i32, %c0_i32_0 : i32, i32
  }
  func.func @transform_13(%arg0: i32) -> (i32, i32, i32) {
    %c0_i32 = arith.constant 0 : i32
    %c0_i32_0 = arith.constant 0 : i32
    %c0_i32_1 = arith.constant 0 : i32
    return %arg0, %c0_i32, %c0_i32_0 : i32, i32, i32
  }
}

module attributes {stable_mosaic.version = 11 : i64} {
  func.func @_block_kernel(%arg0: i32, %arg1: memref<1x8x32xf32, #tpu.memory_space<vmem>>, %arg2: memref<1x32xf32, #tpu.memory_space<vmem>>, %arg3: memref<1x32xf32, #tpu.memory_space<vmem>>, %arg4: memref<32x96xbf16, #tpu.memory_space<vmem>>, %arg5: memref<1x96xf32, #tpu.memory_space<vmem>>, %arg6: memref<32x32xbf16, #tpu.memory_space<vmem>>, %arg7: memref<1x32xf32, #tpu.memory_space<vmem>>, %arg8: memref<1x32xf32, #tpu.memory_space<vmem>>, %arg9: memref<1x32xf32, #tpu.memory_space<vmem>>, %arg10: memref<32x128xbf16, #tpu.memory_space<vmem>>, %arg11: memref<1x128xf32, #tpu.memory_space<vmem>>, %arg12: memref<128x32xbf16, #tpu.memory_space<vmem>>, %arg13: memref<1x32xf32, #tpu.memory_space<vmem>>, %arg14: memref<1x8x32xf32, #tpu.memory_space<vmem>>) attributes {dimension_semantics = [#tpu.dimension_semantics<parallel>], iteration_bounds = array<i64: 2>, scalar_prefetch = 0 : i64, scratch_operands = 0 : i64, tpu.core_type = #tpu.core_type<tc>, window_params = [{transform_indices = @transform_0, window_bounds = array<i64: 1, 8, 32>}, {pipeline_mode = #tpu.pipeline_mode<synchronous>, transform_indices = @transform_1, window_bounds = array<i64: 1, 32>}, {pipeline_mode = #tpu.pipeline_mode<synchronous>, transform_indices = @transform_2, window_bounds = array<i64: 1, 32>}, {pipeline_mode = #tpu.pipeline_mode<synchronous>, transform_indices = @transform_3, window_bounds = array<i64: 32, 96>}, {pipeline_mode = #tpu.pipeline_mode<synchronous>, transform_indices = @transform_4, window_bounds = array<i64: 1, 96>}, {pipeline_mode = #tpu.pipeline_mode<synchronous>, transform_indices = @transform_5, window_bounds = array<i64: 32, 32>}, {pipeline_mode = #tpu.pipeline_mode<synchronous>, transform_indices = @transform_6, window_bounds = array<i64: 1, 32>}, {pipeline_mode = #tpu.pipeline_mode<synchronous>, transform_indices = @transform_7, window_bounds = array<i64: 1, 32>}, {pipeline_mode = #tpu.pipeline_mode<synchronous>, transform_indices = @transform_8, window_bounds = array<i64: 1, 32>}, {pipeline_mode = #tpu.pipeline_mode<synchronous>, transform_indices = @transform_9, window_bounds = array<i64: 32, 128>}, {pipeline_mode = #tpu.pipeline_mode<synchronous>, transform_indices = @transform_10, window_bounds = array<i64: 1, 128>}, {pipeline_mode = #tpu.pipeline_mode<synchronous>, transform_indices = @transform_11, window_bounds = array<i64: 128, 32>}, {pipeline_mode = #tpu.pipeline_mode<synchronous>, transform_indices = @transform_12, window_bounds = array<i64: 1, 32>}, {transform_indices = @transform_13, window_bounds = array<i64: 1, 8, 32>}]} {
    %c0 = arith.constant 0 : index
    %c0_0 = arith.constant 0 : index
    %c0_1 = arith.constant 0 : index
    %0 = vector.load %arg1[%c0, %c0_0, %c0_1] : memref<1x8x32xf32, #tpu.memory_space<vmem>>, vector<1x8x32xf32>
    %1 = vector.shape_cast %0 : vector<1x8x32xf32> to vector<8x32xf32>
    %c0_2 = arith.constant 0 : index
    %c0_3 = arith.constant 0 : index
    %2 = vector.load %arg2[%c0_2, %c0_3] : memref<1x32xf32, #tpu.memory_space<vmem>>, vector<1x32xf32>
    %3 = vector.shape_cast %2 : vector<1x32xf32> to vector<32xf32>
    %c0_4 = arith.constant 0 : index
    %c0_5 = arith.constant 0 : index
    %4 = vector.load %arg3[%c0_4, %c0_5] : memref<1x32xf32, #tpu.memory_space<vmem>>, vector<1x32xf32>
    %5 = vector.shape_cast %4 : vector<1x32xf32> to vector<32xf32>
    %cst = arith.constant dense<0.000000e+00> : vector<8xf32>
    %6 = vector.multi_reduction <add>, %1, %cst [1] : vector<8x32xf32> to vector<8xf32>
    %7 = vector.shape_cast %6 : vector<8xf32> to vector<8x1xf32>
    %cst_6 = arith.constant 3.200000e+01 : f32
    %8 = vector.broadcast %cst_6 : f32 to vector<8x1xf32>
    %9 = arith.divf %7, %8 : vector<8x1xf32>
    %10 = vector.broadcast %9 : vector<8x1xf32> to vector<8x32xf32>
    %11 = arith.subf %1, %10 : vector<8x32xf32>
    %12 = vector.broadcast %9 : vector<8x1xf32> to vector<8x32xf32>
    %13 = arith.subf %1, %12 : vector<8x32xf32>
    %14 = arith.mulf %11, %13 : vector<8x32xf32>
    %cst_7 = arith.constant dense<0.000000e+00> : vector<8xf32>
    %15 = vector.multi_reduction <add>, %14, %cst_7 [1] : vector<8x32xf32> to vector<8xf32>
    %16 = vector.shape_cast %15 : vector<8xf32> to vector<8x1xf32>
    %cst_8 = arith.constant 3.200000e+01 : f32
    %17 = vector.broadcast %cst_8 : f32 to vector<8x1xf32>
    %18 = arith.divf %16, %17 : vector<8x1xf32>
    %19 = vector.broadcast %9 : vector<8x1xf32> to vector<8x32xf32>
    %20 = arith.subf %1, %19 : vector<8x32xf32>
    %cst_9 = arith.constant 9.99999974E-6 : f32
    %21 = vector.broadcast %cst_9 : f32 to vector<8x1xf32>
    %22 = arith.addf %18, %21 : vector<8x1xf32>
    %23 = math.rsqrt %22 : vector<8x1xf32>
    %24 = vector.broadcast %23 : vector<8x1xf32> to vector<8x32xf32>
    %25 = arith.mulf %20, %24 : vector<8x32xf32>
    %26 = vector.shape_cast %3 : vector<32xf32> to vector<1x32xf32>
    %27 = vector.broadcast %26 : vector<1x32xf32> to vector<8x32xf32>
    %28 = arith.mulf %25, %27 : vector<8x32xf32>
    %29 = vector.shape_cast %5 : vector<32xf32> to vector<1x32xf32>
    %30 = vector.broadcast %29 : vector<1x32xf32> to vector<8x32xf32>
    %31 = arith.addf %28, %30 : vector<8x32xf32>
    %32 = arith.truncf %31 : vector<8x32xf32> to vector<8x32xbf16>
    %c0_10 = arith.constant 0 : index
    %c0_11 = arith.constant 0 : index
    %33 = vector.load %arg4[%c0_10, %c0_11] : memref<32x96xbf16, #tpu.memory_space<vmem>>, vector<32x96xbf16>
    %cst_12 = arith.constant dense<0.000000e+00> : vector<8x96xf32>
    %34 = tpu.matmul %32, %33, %cst_12 {dimension_numbers = #tpu.dot_dimension_numbers<[1], [0], [0], [1], [0, 0, 1, 1], [], []>} : vector<8x32xbf16>, vector<32x96xbf16>, vector<8x96xf32> -> vector<8x96xf32>
    %c0_13 = arith.constant 0 : index
    %c0_14 = arith.constant 0 : index
    %35 = vector.load %arg5[%c0_13, %c0_14] : memref<1x96xf32, #tpu.memory_space<vmem>>, vector<1x96xf32>
    %36 = vector.shape_cast %35 : vector<1x96xf32> to vector<96xf32>
    %37 = vector.shape_cast %36 : vector<96xf32> to vector<1x96xf32>
    %38 = vector.broadcast %37 : vector<1x96xf32> to vector<8x96xf32>
    %39 = arith.addf %34, %38 : vector<8x96xf32>
    %40 = vector.extract_strided_slice %39 {offsets = [0, 0], sizes = [8, 32], strides = [1, 1]} : vector<8x96xf32> to vector<8x32xf32>
    %41 = vector.extract_strided_slice %39 {offsets = [0, 32], sizes = [8, 32], strides = [1, 1]} : vector<8x96xf32> to vector<8x32xf32>
    %42 = vector.extract_strided_slice %39 {offsets = [0, 64], sizes = [8, 32], strides = [1, 1]} : vector<8x96xf32> to vector<8x32xf32>
    %c0_15 = arith.constant 0 : index
    %c0_16 = arith.constant 0 : index
    %43 = vector.load %arg7[%c0_15, %c0_16] : memref<1x32xf32, #tpu.memory_space<vmem>>, vector<1x32xf32>
    %44 = vector.shape_cast %43 : vector<1x32xf32> to vector<32xf32>
    %45 = vector.shape_cast %44 : vector<32xf32> to vector<1x32xf32>
    %46 = vector.broadcast %45 : vector<1x32xf32> to vector<8x32xf32>
    %47 = arith.addf %1, %46 : vector<8x32xf32>
    %48 = vector.extract_strided_slice %40 {offsets = [0, 0], sizes = [8, 8], strides = [1, 1]} : vector<8x32xf32> to vector<8x8xf32>
    %49 = vector.shape_cast %48 : vector<8x8xf32> to vector<1x8x8xf32>
    %50 = vector.extract_strided_slice %41 {offsets = [0, 0], sizes = [8, 8], strides = [1, 1]} : vector<8x32xf32> to vector<8x8xf32>
    %51 = vector.shape_cast %50 : vector<8x8xf32> to vector<1x8x8xf32>
    %52 = vector.extract_strided_slice %42 {offsets = [0, 0], sizes = [8, 8], strides = [1, 1]} : vector<8x32xf32> to vector<8x8xf32>
    %53 = vector.shape_cast %52 : vector<8x8xf32> to vector<1x8x8xf32>
    %54 = arith.truncf %49 : vector<1x8x8xf32> to vector<1x8x8xbf16>
    %55 = arith.truncf %51 : vector<1x8x8xf32> to vector<1x8x8xbf16>
    "tpu.trace_start"() <{level = 10 : i32, message = "bqd,bkd->bqk"}> : () -> ()
    %cst_17 = arith.constant dense<0.000000e+00> : vector<1x8x8xf32>
    %56 = tpu.matmul %54, %55, %cst_17 {dimension_numbers = #tpu.dot_dimension_numbers<[2], [2], [1], [1], [0, 0, 0, 1, 1, 1], [0], [0]>} : vector<1x8x8xbf16>, vector<1x8x8xbf16>, vector<1x8x8xf32> -> vector<1x8x8xf32>
    "tpu.trace_stop"() : () -> ()
    %cst_18 = arith.constant dense<0xFF800000> : vector<1x8xf32>
    %57 = vector.multi_reduction <maximumf>, %56, %cst_18 [2] : vector<1x8x8xf32> to vector<1x8xf32>
    %58 = vector.shape_cast %57 : vector<1x8xf32> to vector<1x8x1xf32>
    %59 = vector.broadcast %58 : vector<1x8x1xf32> to vector<1x8x8xf32>
    %60 = arith.subf %56, %59 : vector<1x8x8xf32>
    %61 = math.exp %60 : vector<1x8x8xf32>
    %cst_19 = arith.constant dense<0.000000e+00> : vector<1x8xf32>
    %62 = vector.multi_reduction <add>, %61, %cst_19 [2] : vector<1x8x8xf32> to vector<1x8xf32>
    %63 = vector.shape_cast %62 : vector<1x8xf32> to vector<1x8x1xf32>
    %64 = tpu.reciprocal %63 {approx = true} : vector<1x8x1xf32> -> vector<1x8x1xf32>
    %65 = arith.truncf %61 : vector<1x8x8xf32> to vector<1x8x8xbf16>
    %66 = arith.truncf %53 : vector<1x8x8xf32> to vector<1x8x8xbf16>
    "tpu.trace_start"() <{level = 10 : i32, message = "bqk,bkd->bqd"}> : () -> ()
    %cst_20 = arith.constant dense<0.000000e+00> : vector<1x8x8xf32>
    %67 = tpu.matmul %65, %66, %cst_20 {dimension_numbers = #tpu.dot_dimension_numbers<[2], [1], [1], [2], [0, 0, 0, 1, 1, 2], [0], [0]>} : vector<1x8x8xbf16>, vector<1x8x8xbf16>, vector<1x8x8xf32> -> vector<1x8x8xf32>
    "tpu.trace_stop"() : () -> ()
    %68 = vector.broadcast %64 : vector<1x8x1xf32> to vector<1x8x8xf32>
    %69 = arith.mulf %67, %68 : vector<1x8x8xf32>
    %70 = vector.shape_cast %69 : vector<1x8x8xf32> to vector<8x8xf32>
    %71 = arith.truncf %70 : vector<8x8xf32> to vector<8x8xbf16>
    %c0_21 = arith.constant 0 : index
    %c0_22 = arith.constant 0 : index
    %72 = vector.load %arg6[%c0_21, %c0_22] : memref<32x32xbf16, #tpu.memory_space<vmem>>, vector<8x32xbf16>
    %cst_23 = arith.constant dense<0.000000e+00> : vector<8x32xf32>
    %73 = tpu.matmul %71, %72, %cst_23 {dimension_numbers = #tpu.dot_dimension_numbers<[1], [0], [0], [1], [0, 0, 1, 1], [], []>} : vector<8x8xbf16>, vector<8x32xbf16>, vector<8x32xf32> -> vector<8x32xf32>
    %74 = arith.addf %47, %73 : vector<8x32xf32>
    %75 = vector.extract_strided_slice %40 {offsets = [0, 8], sizes = [8, 8], strides = [1, 1]} : vector<8x32xf32> to vector<8x8xf32>
    %76 = vector.shape_cast %75 : vector<8x8xf32> to vector<1x8x8xf32>
    %77 = vector.extract_strided_slice %41 {offsets = [0, 8], sizes = [8, 8], strides = [1, 1]} : vector<8x32xf32> to vector<8x8xf32>
    %78 = vector.shape_cast %77 : vector<8x8xf32> to vector<1x8x8xf32>
    %79 = vector.extract_strided_slice %42 {offsets = [0, 8], sizes = [8, 8], strides = [1, 1]} : vector<8x32xf32> to vector<8x8xf32>
    %80 = vector.shape_cast %79 : vector<8x8xf32> to vector<1x8x8xf32>
    %81 = arith.truncf %76 : vector<1x8x8xf32> to vector<1x8x8xbf16>
    %82 = arith.truncf %78 : vector<1x8x8xf32> to vector<1x8x8xbf16>
    "tpu.trace_start"() <{level = 10 : i32, message = "bqd,bkd->bqk"}> : () -> ()
    %cst_24 = arith.constant dense<0.000000e+00> : vector<1x8x8xf32>
    %83 = tpu.matmul %81, %82, %cst_24 {dimension_numbers = #tpu.dot_dimension_numbers<[2], [2], [1], [1], [0, 0, 0, 1, 1, 1], [0], [0]>} : vector<1x8x8xbf16>, vector<1x8x8xbf16>, vector<1x8x8xf32> -> vector<1x8x8xf32>
    "tpu.trace_stop"() : () -> ()
    %cst_25 = arith.constant dense<0xFF800000> : vector<1x8xf32>
    %84 = vector.multi_reduction <maximumf>, %83, %cst_25 [2] : vector<1x8x8xf32> to vector<1x8xf32>
    %85 = vector.shape_cast %84 : vector<1x8xf32> to vector<1x8x1xf32>
    %86 = vector.broadcast %85 : vector<1x8x1xf32> to vector<1x8x8xf32>
    %87 = arith.subf %83, %86 : vector<1x8x8xf32>
    %88 = math.exp %87 : vector<1x8x8xf32>
    %cst_26 = arith.constant dense<0.000000e+00> : vector<1x8xf32>
    %89 = vector.multi_reduction <add>, %88, %cst_26 [2] : vector<1x8x8xf32> to vector<1x8xf32>
    %90 = vector.shape_cast %89 : vector<1x8xf32> to vector<1x8x1xf32>
    %91 = tpu.reciprocal %90 {approx = true} : vector<1x8x1xf32> -> vector<1x8x1xf32>
    %92 = arith.truncf %88 : vector<1x8x8xf32> to vector<1x8x8xbf16>
    %93 = arith.truncf %80 : vector<1x8x8xf32> to vector<1x8x8xbf16>
    "tpu.trace_start"() <{level = 10 : i32, message = "bqk,bkd->bqd"}> : () -> ()
    %cst_27 = arith.constant dense<0.000000e+00> : vector<1x8x8xf32>
    %94 = tpu.matmul %92, %93, %cst_27 {dimension_numbers = #tpu.dot_dimension_numbers<[2], [1], [1], [2], [0, 0, 0, 1, 1, 2], [0], [0]>} : vector<1x8x8xbf16>, vector<1x8x8xbf16>, vector<1x8x8xf32> -> vector<1x8x8xf32>
    "tpu.trace_stop"() : () -> ()
    %95 = vector.broadcast %91 : vector<1x8x1xf32> to vector<1x8x8xf32>
    %96 = arith.mulf %94, %95 : vector<1x8x8xf32>
    %97 = vector.shape_cast %96 : vector<1x8x8xf32> to vector<8x8xf32>
    %98 = arith.truncf %97 : vector<8x8xf32> to vector<8x8xbf16>
    %c8 = arith.constant 8 : index
    %c0_28 = arith.constant 0 : index
    %99 = vector.load %arg6[%c8, %c0_28] : memref<32x32xbf16, #tpu.memory_space<vmem>>, vector<8x32xbf16>
    %cst_29 = arith.constant dense<0.000000e+00> : vector<8x32xf32>
    %100 = tpu.matmul %98, %99, %cst_29 {dimension_numbers = #tpu.dot_dimension_numbers<[1], [0], [0], [1], [0, 0, 1, 1], [], []>} : vector<8x8xbf16>, vector<8x32xbf16>, vector<8x32xf32> -> vector<8x32xf32>
    %101 = arith.addf %74, %100 : vector<8x32xf32>
    %102 = vector.extract_strided_slice %40 {offsets = [0, 16], sizes = [8, 8], strides = [1, 1]} : vector<8x32xf32> to vector<8x8xf32>
    %103 = vector.shape_cast %102 : vector<8x8xf32> to vector<1x8x8xf32>
    %104 = vector.extract_strided_slice %41 {offsets = [0, 16], sizes = [8, 8], strides = [1, 1]} : vector<8x32xf32> to vector<8x8xf32>
    %105 = vector.shape_cast %104 : vector<8x8xf32> to vector<1x8x8xf32>
    %106 = vector.extract_strided_slice %42 {offsets = [0, 16], sizes = [8, 8], strides = [1, 1]} : vector<8x32xf32> to vector<8x8xf32>
    %107 = vector.shape_cast %106 : vector<8x8xf32> to vector<1x8x8xf32>
    %108 = arith.truncf %103 : vector<1x8x8xf32> to vector<1x8x8xbf16>
    %109 = arith.truncf %105 : vector<1x8x8xf32> to vector<1x8x8xbf16>
    "tpu.trace_start"() <{level = 10 : i32, message = "bqd,bkd->bqk"}> : () -> ()
    %cst_30 = arith.constant dense<0.000000e+00> : vector<1x8x8xf32>
    %110 = tpu.matmul %108, %109, %cst_30 {dimension_numbers = #tpu.dot_dimension_numbers<[2], [2], [1], [1], [0, 0, 0, 1, 1, 1], [0], [0]>} : vector<1x8x8xbf16>, vector<1x8x8xbf16>, vector<1x8x8xf32> -> vector<1x8x8xf32>
    "tpu.trace_stop"() : () -> ()
    %cst_31 = arith.constant dense<0xFF800000> : vector<1x8xf32>
    %111 = vector.multi_reduction <maximumf>, %110, %cst_31 [2] : vector<1x8x8xf32> to vector<1x8xf32>
    %112 = vector.shape_cast %111 : vector<1x8xf32> to vector<1x8x1xf32>
    %113 = vector.broadcast %112 : vector<1x8x1xf32> to vector<1x8x8xf32>
    %114 = arith.subf %110, %113 : vector<1x8x8xf32>
    %115 = math.exp %114 : vector<1x8x8xf32>
    %cst_32 = arith.constant dense<0.000000e+00> : vector<1x8xf32>
    %116 = vector.multi_reduction <add>, %115, %cst_32 [2] : vector<1x8x8xf32> to vector<1x8xf32>
    %117 = vector.shape_cast %116 : vector<1x8xf32> to vector<1x8x1xf32>
    %118 = tpu.reciprocal %117 {approx = true} : vector<1x8x1xf32> -> vector<1x8x1xf32>
    %119 = arith.truncf %115 : vector<1x8x8xf32> to vector<1x8x8xbf16>
    %120 = arith.truncf %107 : vector<1x8x8xf32> to vector<1x8x8xbf16>
    "tpu.trace_start"() <{level = 10 : i32, message = "bqk,bkd->bqd"}> : () -> ()
    %cst_33 = arith.constant dense<0.000000e+00> : vector<1x8x8xf32>
    %121 = tpu.matmul %119, %120, %cst_33 {dimension_numbers = #tpu.dot_dimension_numbers<[2], [1], [1], [2], [0, 0, 0, 1, 1, 2], [0], [0]>} : vector<1x8x8xbf16>, vector<1x8x8xbf16>, vector<1x8x8xf32> -> vector<1x8x8xf32>
    "tpu.trace_stop"() : () -> ()
    %122 = vector.broadcast %118 : vector<1x8x1xf32> to vector<1x8x8xf32>
    %123 = arith.mulf %121, %122 : vector<1x8x8xf32>
    %124 = vector.shape_cast %123 : vector<1x8x8xf32> to vector<8x8xf32>
    %125 = arith.truncf %124 : vector<8x8xf32> to vector<8x8xbf16>
    %c16 = arith.constant 16 : index
    %c0_34 = arith.constant 0 : index
    %126 = vector.load %arg6[%c16, %c0_34] : memref<32x32xbf16, #tpu.memory_space<vmem>>, vector<8x32xbf16>
    %cst_35 = arith.constant dense<0.000000e+00> : vector<8x32xf32>
    %127 = tpu.matmul %125, %126, %cst_35 {dimension_numbers = #tpu.dot_dimension_numbers<[1], [0], [0], [1], [0, 0, 1, 1], [], []>} : vector<8x8xbf16>, vector<8x32xbf16>, vector<8x32xf32> -> vector<8x32xf32>
    %128 = arith.addf %101, %127 : vector<8x32xf32>
    %129 = vector.extract_strided_slice %40 {offsets = [0, 24], sizes = [8, 8], strides = [1, 1]} : vector<8x32xf32> to vector<8x8xf32>
    %130 = vector.shape_cast %129 : vector<8x8xf32> to vector<1x8x8xf32>
    %131 = vector.extract_strided_slice %41 {offsets = [0, 24], sizes = [8, 8], strides = [1, 1]} : vector<8x32xf32> to vector<8x8xf32>
    %132 = vector.shape_cast %131 : vector<8x8xf32> to vector<1x8x8xf32>
    %133 = vector.extract_strided_slice %42 {offsets = [0, 24], sizes = [8, 8], strides = [1, 1]} : vector<8x32xf32> to vector<8x8xf32>
    %134 = vector.shape_cast %133 : vector<8x8xf32> to vector<1x8x8xf32>
    %135 = arith.truncf %130 : vector<1x8x8xf32> to vector<1x8x8xbf16>
    %136 = arith.truncf %132 : vector<1x8x8xf32> to vector<1x8x8xbf16>
    "tpu.trace_start"() <{level = 10 : i32, message = "bqd,bkd->bqk"}> : () -> ()
    %cst_36 = arith.constant dense<0.000000e+00> : vector<1x8x8xf32>
    %137 = tpu.matmul %135, %136, %cst_36 {dimension_numbers = #tpu.dot_dimension_numbers<[2], [2], [1], [1], [0, 0, 0, 1, 1, 1], [0], [0]>} : vector<1x8x8xbf16>, vector<1x8x8xbf16>, vector<1x8x8xf32> -> vector<1x8x8xf32>
    "tpu.trace_stop"() : () -> ()
    %cst_37 = arith.constant dense<0xFF800000> : vector<1x8xf32>
    %138 = vector.multi_reduction <maximumf>, %137, %cst_37 [2] : vector<1x8x8xf32> to vector<1x8xf32>
    %139 = vector.shape_cast %138 : vector<1x8xf32> to vector<1x8x1xf32>
    %140 = vector.broadcast %139 : vector<1x8x1xf32> to vector<1x8x8xf32>
    %141 = arith.subf %137, %140 : vector<1x8x8xf32>
    %142 = math.exp %141 : vector<1x8x8xf32>
    %cst_38 = arith.constant dense<0.000000e+00> : vector<1x8xf32>
    %143 = vector.multi_reduction <add>, %142, %cst_38 [2] : vector<1x8x8xf32> to vector<1x8xf32>
    %144 = vector.shape_cast %143 : vector<1x8xf32> to vector<1x8x1xf32>
    %145 = tpu.reciprocal %144 {approx = true} : vector<1x8x1xf32> -> vector<1x8x1xf32>
    %146 = arith.truncf %142 : vector<1x8x8xf32> to vector<1x8x8xbf16>
    %147 = arith.truncf %134 : vector<1x8x8xf32> to vector<1x8x8xbf16>
    "tpu.trace_start"() <{level = 10 : i32, message = "bqk,bkd->bqd"}> : () -> ()
    %cst_39 = arith.constant dense<0.000000e+00> : vector<1x8x8xf32>
    %148 = tpu.matmul %146, %147, %cst_39 {dimension_numbers = #tpu.dot_dimension_numbers<[2], [1], [1], [2], [0, 0, 0, 1, 1, 2], [0], [0]>} : vector<1x8x8xbf16>, vector<1x8x8xbf16>, vector<1x8x8xf32> -> vector<1x8x8xf32>
    "tpu.trace_stop"() : () -> ()
    %149 = vector.broadcast %145 : vector<1x8x1xf32> to vector<1x8x8xf32>
    %150 = arith.mulf %148, %149 : vector<1x8x8xf32>
    %151 = vector.shape_cast %150 : vector<1x8x8xf32> to vector<8x8xf32>
    %152 = arith.truncf %151 : vector<8x8xf32> to vector<8x8xbf16>
    %c24 = arith.constant 24 : index
    %c0_40 = arith.constant 0 : index
    %153 = vector.load %arg6[%c24, %c0_40] : memref<32x32xbf16, #tpu.memory_space<vmem>>, vector<8x32xbf16>
    %cst_41 = arith.constant dense<0.000000e+00> : vector<8x32xf32>
    %154 = tpu.matmul %152, %153, %cst_41 {dimension_numbers = #tpu.dot_dimension_numbers<[1], [0], [0], [1], [0, 0, 1, 1], [], []>} : vector<8x8xbf16>, vector<8x32xbf16>, vector<8x32xf32> -> vector<8x32xf32>
    %155 = arith.addf %128, %154 : vector<8x32xf32>
    %c0_42 = arith.constant 0 : index
    %c0_43 = arith.constant 0 : index
    %156 = vector.load %arg8[%c0_42, %c0_43] : memref<1x32xf32, #tpu.memory_space<vmem>>, vector<1x32xf32>
    %157 = vector.shape_cast %156 : vector<1x32xf32> to vector<32xf32>
    %c0_44 = arith.constant 0 : index
    %c0_45 = arith.constant 0 : index
    %158 = vector.load %arg9[%c0_44, %c0_45] : memref<1x32xf32, #tpu.memory_space<vmem>>, vector<1x32xf32>
    %159 = vector.shape_cast %158 : vector<1x32xf32> to vector<32xf32>
    %cst_46 = arith.constant dense<0.000000e+00> : vector<8xf32>
    %160 = vector.multi_reduction <add>, %155, %cst_46 [1] : vector<8x32xf32> to vector<8xf32>
    %161 = vector.shape_cast %160 : vector<8xf32> to vector<8x1xf32>
    %cst_47 = arith.constant 3.200000e+01 : f32
    %162 = vector.broadcast %cst_47 : f32 to vector<8x1xf32>
    %163 = arith.divf %161, %162 : vector<8x1xf32>
    %164 = vector.broadcast %163 : vector<8x1xf32> to vector<8x32xf32>
    %165 = arith.subf %155, %164 : vector<8x32xf32>
    %166 = vector.broadcast %163 : vector<8x1xf32> to vector<8x32xf32>
    %167 = arith.subf %155, %166 : vector<8x32xf32>
    %168 = arith.mulf %165, %167 : vector<8x32xf32>
    %cst_48 = arith.constant dense<0.000000e+00> : vector<8xf32>
    %169 = vector.multi_reduction <add>, %168, %cst_48 [1] : vector<8x32xf32> to vector<8xf32>
    %170 = vector.shape_cast %169 : vector<8xf32> to vector<8x1xf32>
    %cst_49 = arith.constant 3.200000e+01 : f32
    %171 = vector.broadcast %cst_49 : f32 to vector<8x1xf32>
    %172 = arith.divf %170, %171 : vector<8x1xf32>
    %173 = vector.broadcast %163 : vector<8x1xf32> to vector<8x32xf32>
    %174 = arith.subf %155, %173 : vector<8x32xf32>
    %cst_50 = arith.constant 9.99999974E-6 : f32
    %175 = vector.broadcast %cst_50 : f32 to vector<8x1xf32>
    %176 = arith.addf %172, %175 : vector<8x1xf32>
    %177 = math.rsqrt %176 : vector<8x1xf32>
    %178 = vector.broadcast %177 : vector<8x1xf32> to vector<8x32xf32>
    %179 = arith.mulf %174, %178 : vector<8x32xf32>
    %180 = vector.shape_cast %157 : vector<32xf32> to vector<1x32xf32>
    %181 = vector.broadcast %180 : vector<1x32xf32> to vector<8x32xf32>
    %182 = arith.mulf %179, %181 : vector<8x32xf32>
    %183 = vector.shape_cast %159 : vector<32xf32> to vector<1x32xf32>
    %184 = vector.broadcast %183 : vector<1x32xf32> to vector<8x32xf32>
    %185 = arith.addf %182, %184 : vector<8x32xf32>
    %186 = arith.truncf %185 : vector<8x32xf32> to vector<8x32xbf16>
    %c0_51 = arith.constant 0 : index
    %c0_52 = arith.constant 0 : index
    %187 = vector.load %arg10[%c0_51, %c0_52] : memref<32x128xbf16, #tpu.memory_space<vmem>>, vector<32x128xbf16>
    %cst_53 = arith.constant dense<0.000000e+00> : vector<8x128xf32>
    %188 = tpu.matmul %186, %187, %cst_53 {dimension_numbers = #tpu.dot_dimension_numbers<[1], [0], [0], [1], [0, 0, 1, 1], [], []>} : vector<8x32xbf16>, vector<32x128xbf16>, vector<8x128xf32> -> vector<8x128xf32>
    %c0_54 = arith.constant 0 : index
    %c0_55 = arith.constant 0 : index
    %189 = vector.load %arg11[%c0_54, %c0_55] : memref<1x128xf32, #tpu.memory_space<vmem>>, vector<1x128xf32>
    %190 = vector.shape_cast %189 : vector<1x128xf32> to vector<128xf32>
    %191 = vector.shape_cast %190 : vector<128xf32> to vector<1x128xf32>
    %192 = vector.broadcast %191 : vector<1x128xf32> to vector<8x128xf32>
    %193 = arith.addf %188, %192 : vector<8x128xf32>
    %cst_56 = arith.constant 1.702000e+00 : f32
    %194 = vector.broadcast %cst_56 : f32 to vector<8x128xf32>
    %195 = arith.mulf %194, %193 : vector<8x128xf32>
    %196 = arith.negf %195 : vector<8x128xf32>
    %197 = math.exp %196 : vector<8x128xf32>
    %cst_57 = arith.constant 1.000000e+00 : f32
    %198 = vector.broadcast %cst_57 : f32 to vector<8x128xf32>
    %199 = arith.addf %198, %197 : vector<8x128xf32>
    %200 = arith.divf %198, %199 : vector<8x128xf32>
    %201 = arith.mulf %193, %200 : vector<8x128xf32>
    %202 = arith.truncf %201 : vector<8x128xf32> to vector<8x128xbf16>
    %c0_58 = arith.constant 0 : index
    %c0_59 = arith.constant 0 : index
    %203 = vector.load %arg12[%c0_58, %c0_59] : memref<128x32xbf16, #tpu.memory_space<vmem>>, vector<128x32xbf16>
    %cst_60 = arith.constant dense<0.000000e+00> : vector<8x32xf32>
    %204 = tpu.matmul %202, %203, %cst_60 {dimension_numbers = #tpu.dot_dimension_numbers<[1], [0], [0], [1], [0, 0, 1, 1], [], []>} : vector<8x128xbf16>, vector<128x32xbf16>, vector<8x32xf32> -> vector<8x32xf32>
    %c0_61 = arith.constant 0 : index
    %c0_62 = arith.constant 0 : index
    %205 = vector.load %arg13[%c0_61, %c0_62] : memref<1x32xf32, #tpu.memory_space<vmem>>, vector<1x32xf32>
    %206 = vector.shape_cast %205 : vector<1x32xf32> to vector<32xf32>
    %207 = vector.shape_cast %206 : vector<32xf32> to vector<1x32xf32>
    %208 = vector.broadcast %207 : vector<1x32xf32> to vector<8x32xf32>
    %209 = arith.addf %204, %208 : vector<8x32xf32>
    %210 = arith.addf %155, %209 : vector<8x32xf32>
    %211 = vector.shape_cast %210 : vector<8x32xf32> to vector<1x8x32xf32>
    %c0_63 = arith.constant 0 : index
    %c0_64 = arith.constant 0 : index
    %c0_65 = arith.constant 0 : index
    %212 = vector.load %arg14[%c0_63, %c0_64, %c0_65] : memref<1x8x32xf32, #tpu.memory_space<vmem>>, vector<1x8x32xf32>
    tpu.vector_store %arg14[%c0_63, %c0_64, %c0_65], %211 {strides = array<i32>} : memref<1x8x32xf32, #tpu.memory_space<vmem>>, vector<1x8x32xf32>,
    return
  }
  func.func @transform_0(%arg0: i32) -> (i32, i32, i32) {
    %c0_i32 = arith.constant 0 : i32
    %c0_i32_0 = arith.constant 0 : i32
    %c0_i32_1 = arith.constant 0 : i32
    return %arg0, %c0_i32, %c0_i32_0 : i32, i32, i32
  }
  func.func @transform_1(%arg0: i32) -> (i32, i32) {
    %c0_i32 = arith.constant 0 : i32
    %c0_i32_0 = arith.constant 0 : i32
    %c0_i32_1 = arith.constant 0 : i32
    return %c0_i32, %c0_i32_0 : i32, i32
  }
  func.func @transform_2(%arg0: i32) -> (i32, i32) {
    %c0_i32 = arith.constant 0 : i32
    %c0_i32_0 = arith.constant 0 : i32
    %c0_i32_1 = arith.constant 0 : i32
    return %c0_i32, %c0_i32_0 : i32, i32
  }
  func.func @transform_3(%arg0: i32) -> (i32, i32) {
    %c0_i32 = arith.constant 0 : i32
    %c0_i32_0 = arith.constant 0 : i32
    %c0_i32_1 = arith.constant 0 : i32
    return %c0_i32, %c0_i32_0 : i32, i32
  }
  func.func @transform_4(%arg0: i32) -> (i32, i32) {
    %c0_i32 = arith.constant 0 : i32
    %c0_i32_0 = arith.constant 0 : i32
    %c0_i32_1 = arith.constant 0 : i32
    return %c0_i32, %c0_i32_0 : i32, i32
  }
  func.func @transform_5(%arg0: i32) -> (i32, i32) {
    %c0_i32 = arith.constant 0 : i32
    %c0_i32_0 = arith.constant 0 : i32
    %c0_i32_1 = arith.constant 0 : i32
    return %c0_i32, %c0_i32_0 : i32, i32
  }
  func.func @transform_6(%arg0: i32) -> (i32, i32) {
    %c0_i32 = arith.constant 0 : i32
    %c0_i32_0 = arith.constant 0 : i32
    %c0_i32_1 = arith.constant 0 : i32
    return %c0_i32, %c0_i32_0 : i32, i32
  }
  func.func @transform_7(%arg0: i32) -> (i32, i32) {
    %c0_i32 = arith.constant 0 : i32
    %c0_i32_0 = arith.constant 0 : i32
    %c0_i32_1 = arith.constant 0 : i32
    return %c0_i32, %c0_i32_0 : i32, i32
  }
  func.func @transform_8(%arg0: i32) -> (i32, i32) {
    %c0_i32 = arith.constant 0 : i32
    %c0_i32_0 = arith.constant 0 : i32
    %c0_i32_1 = arith.constant 0 : i32
    return %c0_i32, %c0_i32_0 : i32, i32
  }
  func.func @transform_9(%arg0: i32) -> (i32, i32) {
    %c0_i32 = arith.constant 0 : i32
    %c0_i32_0 = arith.constant 0 : i32
    %c0_i32_1 = arith.constant 0 : i32
    return %c0_i32, %c0_i32_0 : i32, i32
  }
  func.func @transform_10(%arg0: i32) -> (i32, i32) {
    %c0_i32 = arith.constant 0 : i32
    %c0_i32_0 = arith.constant 0 : i32
    %c0_i32_1 = arith.constant 0 : i32
    return %c0_i32, %c0_i32_0 : i32, i32
  }
  func.func @transform_11(%arg0: i32) -> (i32, i32) {
    %c0_i32 = arith.constant 0 : i32
    %c0_i32_0 = arith.constant 0 : i32
    %c0_i32_1 = arith.constant 0 : i32
    return %c0_i32, %c0_i32_0 : i32, i32
  }
  func.func @transform_12(%arg0: i32) -> (i32, i32) {
    %c0_i32 = arith.constant 0 : i32
    %c0_i32_0 = arith.constant 0 : i32
    %c0_i32_1 = arith.constant 0 : i32
    return %c0_i32, %c0_i32_0 : i32, i32
  }
  func.func @transform_13(%arg0: i32) -> (i32, i32, i32) {
    %c0_i32 = arith.constant 0 : i32
    %c0_i32_0 = arith.constant 0 : i32
    %c0_i32_1 = arith.constant 0 : i32
    return %arg0, %c0_i32, %c0_i32_0 : i32, i32, i32
  }
}

</mosaic_0001>

<llo_original>
// kernel: tpu_custom_call.1
$region0: #{tpu_custom_call.1}
  #allocation0 [shape = 'u32[]', space=smem, size = 0x4, offset = 0x4, fixed_abs, tag = 'smem constant byte address 0x4 - core index']
  #allocation1 [shape = 'u32[72,128]{1,0:T(1,128)}', space=vmem, size = 0x9000, scoped, tag = 'internal scratch']
  %s0 = inlined_call_operand.vmem [shape: f32[2,8,32], index: 0, kind: input, shape index: {}]
  %s1 = inlined_call_operand.vmem [shape: f32[1,32], index: 1, kind: input, shape index: {}]
  %s2 = inlined_call_operand.vmem [shape: f32[1,32], index: 2, kind: input, shape index: {}]
  %s3 = inlined_call_operand.vmem [shape: bf16[32,96], index: 3, kind: input, shape index: {}]
  %s4 = inlined_call_operand.vmem [shape: f32[1,96], index: 4, kind: input, shape index: {}]
  %s5 = inlined_call_operand.vmem [shape: bf16[32,32], index: 5, kind: input, shape index: {}]
  %s6 = inlined_call_operand.vmem [shape: f32[1,32], index: 6, kind: input, shape index: {}]
  %s7 = inlined_call_operand.vmem [shape: f32[1,32], index: 7, kind: input, shape index: {}]
  %s8 = inlined_call_operand.vmem [shape: f32[1,32], index: 8, kind: input, shape index: {}]
  %s9 = inlined_call_operand.vmem [shape: bf16[32,128], index: 9, kind: input, shape index: {}]
  %s10 = inlined_call_operand.vmem [shape: f32[1,128], index: 10, kind: input, shape index: {}]
  %s11 = inlined_call_operand.vmem [shape: bf16[128,32], index: 11, kind: input, shape index: {}]
  %s12 = inlined_call_operand.vmem [shape: f32[1,32], index: 12, kind: input, shape index: {}]
  %s13 = inlined_call_operand.hbm [shape: f32[2,8,32], index: 13, kind: output, shape index: {}]
  %s14 = sld [smem:[#allocation0]]
  $region85: #{tpu_custom_call.1} parent=0
    _
  %s16 = ssub.s32 1, %s14
  %s17 = scalar_select 0, %s16, %s14
  $region1: #{tpu_custom_call.1} parent=0
    #allocation2 [shape = 'u8[8192]{0}', space=vmem, size = 0x2000, scoped, tag = 'output window, operand 0']
    #allocation3 [shape = 's32[2]{0}', space=sflag, size = 0x8, scoped, tag = 'scoped memory for tpu_custom_call.1']
    %18 = vsyncpa [#allocation3], 0
    %s19 = scalar_lea.sflag [#allocation3], 1
    %20 = vsyncpa %s19, 0
    loop: start=0, step=1, limit=4
    $region2: #{tpu_custom_call.1} parent=1 // loop_pre_header
      _
    $region3: #{tpu_custom_call.1} parent=1 // loop_header
      %s22 = sphi 0, %s26
      %p23 = scmp.ge.s32.totalorder %s22, 4
      %s32 = sphi 0, %s34
      %s35 = sphi 0, %s32
      %s36 = sphi 0, %s35
      %s52 = sphi 0, %s36
      %s56 = sphi 0, %s56
      %s58 = sphi 0, %s56
      %s59 = sphi 0, %s58
      %s73 = sphi 0, %s59
      %s77 = sphi 0, %s77
      %s79 = sphi 0, %s77
      %s80 = sphi 0, %s79
      %s94 = sphi 0, %s80
      %s98 = sphi 0, %s98
      %s100 = sphi 0, %s98
      %s101 = sphi 0, %s100
      %s115 = sphi 0, %s101
      %s119 = sphi 0, %s119
      %s121 = sphi 0, %s119
      %s122 = sphi 0, %s121
      %s136 = sphi 0, %s122
      %s140 = sphi 0, %s140
      %s142 = sphi 0, %s140
      %s143 = sphi 0, %s142
      %s157 = sphi 0, %s143
      %s161 = sphi 0, %s161
      %s163 = sphi 0, %s161
      %s164 = sphi 0, %s163
      %s178 = sphi 0, %s164
      %s182 = sphi 0, %s182
      %s184 = sphi 0, %s182
      %s185 = sphi 0, %s184
      %s199 = sphi 0, %s185
      %s203 = sphi 0, %s203
      %s205 = sphi 0, %s203
      %s206 = sphi 0, %s205
      %s220 = sphi 0, %s206
      %s224 = sphi 0, %s224
      %s226 = sphi 0, %s224
      %s227 = sphi 0, %s226
      %s241 = sphi 0, %s227
      %s245 = sphi 0, %s245
      %s247 = sphi 0, %s245
      %s248 = sphi 0, %s247
      %s262 = sphi 0, %s248
      %s266 = sphi 0, %s266
      %s268 = sphi 0, %s266
      %s269 = sphi 0, %s268
      %s283 = sphi 0, %s269
      %s287 = sphi 0, %s287
      %s289 = sphi 0, %s287
      %s290 = sphi 0, %s289
      %s304 = sphi 0, %s290
      %s310 = sphi 0, %s312
      %s313 = sphi 0, %s310
      %s314 = sphi 0, %s313
      %s330 = sphi 0, %s314
    $region4: #{tpu_custom_call.1} parent=1 // loop_header_branch
      %25 = sbr.rel (%p23) target = $region8
    $region5: #{tpu_custom_call.1} parent=1 // loop_body
      %s27 = ssub.s32 %s22, 1
      %s28 = ssub.s32 %s22, 2
      %s29 = sadd.s32 %s22, 1
      %s30 = ssub.s32 %s22, %s29
      %p31 = scmp.eq.s32.totalorder %s30, 0
      %s33 = sadd.s32 %s32, 1
      %s34 = scalar_select %p31, %s32, %s33
      %p37 = pneg %p31
      %p38 = scmp.eq.s32.totalorder %s22, 1
      %p39 = por %p37, %p38
      %p40 = scmp.ne.s32.totalorder %s32, %s35
      %p41 = scmp.eq.s32.totalorder %s22, 0
      %p42 = por %p40, %p41
      %p43 = scmp.ne.s32.totalorder %s32, %s35
      %p44 = scmp.eq.s32.totalorder %s27, 1
      %p45 = por %p43, %p44
      %p46 = scmp.ne.s32.totalorder %s35, %s36
      %p47 = scmp.eq.s32.totalorder %s27, 0
      %p48 = por %p46, %p47
      %p49 = scmp.ne.s32.totalorder %s35, %s36
      %p50 = scmp.eq.s32.totalorder %s28, 1
      %p51 = por %p49, %p50
      %p53 = scmp.ne.s32.totalorder %s36, %s52
      %p54 = scmp.eq.s32.totalorder %s28, 0
      %p55 = por %p53, %p54
      %s57 = sadd.s32 %s56, 1
      %p60 = scmp.eq.s32.totalorder %s22, 1
      %p61 = scmp.ne.s32.totalorder %s56, %s58
      %p62 = scmp.eq.s32.totalorder %s22, 0
      %p63 = por %p61, %p62
      %p64 = scmp.ne.s32.totalorder %s56, %s58
      %p65 = scmp.eq.s32.totalorder %s27, 1
      %p66 = por %p64, %p65
      %p67 = scmp.ne.s32.totalorder %s58, %s59
      %p68 = scmp.eq.s32.totalorder %s27, 0
      %p69 = por %p67, %p68
      %p70 = scmp.ne.s32.totalorder %s58, %s59
      %p71 = scmp.eq.s32.totalorder %s28, 1
      %p72 = por %p70, %p71
      %p74 = scmp.ne.s32.totalorder %s59, %s73
      %p75 = scmp.eq.s32.totalorder %s28, 0
      %p76 = por %p74, %p75
      %s78 = sadd.s32 %s77, 1
      %p81 = scmp.eq.s32.totalorder %s22, 1
      %p82 = scmp.ne.s32.totalorder %s77, %s79
      %p83 = scmp.eq.s32.totalorder %s22, 0
      %p84 = por %p82, %p83
      %p85 = scmp.ne.s32.totalorder %s77, %s79
      %p86 = scmp.eq.s32.totalorder %s27, 1
      %p87 = por %p85, %p86
      %p88 = scmp.ne.s32.totalorder %s79, %s80
      %p89 = scmp.eq.s32.totalorder %s27, 0
      %p90 = por %p88, %p89
      %p91 = scmp.ne.s32.totalorder %s79, %s80
      %p92 = scmp.eq.s32.totalorder %s28, 1
      %p93 = por %p91, %p92
      %p95 = scmp.ne.s32.totalorder %s80, %s94
      %p96 = scmp.eq.s32.totalorder %s28, 0
      %p97 = por %p95, %p96
      %s99 = sadd.s32 %s98, 1
      %p102 = scmp.eq.s32.totalorder %s22, 1
      %p103 = scmp.ne.s32.totalorder %s98, %s100
      %p104 = scmp.eq.s32.totalorder %s22, 0
      %p105 = por %p103, %p104
      %p106 = scmp.ne.s32.totalorder %s98, %s100
      %p107 = scmp.eq.s32.totalorder %s27, 1
      %p108 = por %p106, %p107
      %p109 = scmp.ne.s32.totalorder %s100, %s101
      %p110 = scmp.eq.s32.totalorder %s27, 0
      %p111 = por %p109, %p110
      %p112 = scmp.ne.s32.totalorder %s100, %s101
      %p113 = scmp.eq.s32.totalorder %s28, 1
      %p114 = por %p112, %p113
      %p116 = scmp.ne.s32.totalorder %s101, %s115
      %p117 = scmp.eq.s32.totalorder %s28, 0
      %p118 = por %p116, %p117
      %s120 = sadd.s32 %s119, 1
      %p123 = scmp.eq.s32.totalorder %s22, 1
      %p124 = scmp.ne.s32.totalorder %s119, %s121
      %p125 = scmp.eq.s32.totalorder %s22, 0
      %p126 = por %p124, %p125
      %p127 = scmp.ne.s32.totalorder %s119, %s121
      %p128 = scmp.eq.s32.totalorder %s27, 1
      %p129 = por %p127, %p128
      %p130 = scmp.ne.s32.totalorder %s121, %s122
      %p131 = scmp.eq.s32.totalorder %s27, 0
      %p132 = por %p130, %p131
      %p133 = scmp.ne.s32.totalorder %s121, %s122
      %p134 = scmp.eq.s32.totalorder %s28, 1
      %p135 = por %p133, %p134
      %p137 = scmp.ne.s32.totalorder %s122, %s136
      %p138 = scmp.eq.s32.totalorder %s28, 0
      %p139 = por %p137, %p138
      %s141 = sadd.s32 %s140, 1
      %p144 = scmp.eq.s32.totalorder %s22, 1
      %p145 = scmp.ne.s32.totalorder %s140, %s142
      %p146 = scmp.eq.s32.totalorder %s22, 0
      %p147 = por %p145, %p146
      %p148 = scmp.ne.s32.totalorder %s140, %s142
      %p149 = scmp.eq.s32.totalorder %s27, 1
      %p150 = por %p148, %p149
      %p151 = scmp.ne.s32.totalorder %s142, %s143
      %p152 = scmp.eq.s32.totalorder %s27, 0
      %p153 = por %p151, %p152
      %p154 = scmp.ne.s32.totalorder %s142, %s143
      %p155 = scmp.eq.s32.totalorder %s28, 1
      %p156 = por %p154, %p155
      %p158 = scmp.ne.s32.totalorder %s143, %s157
      %p159 = scmp.eq.s32.totalorder %s28, 0
      %p160 = por %p158, %p159
      %s162 = sadd.s32 %s161, 1
      %p165 = scmp.eq.s32.totalorder %s22, 1
      %p166 = scmp.ne.s32.totalorder %s161, %s163
      %p167 = scmp.eq.s32.totalorder %s22, 0
      %p168 = por %p166, %p167
      %p169 = scmp.ne.s32.totalorder %s161, %s163
      %p170 = scmp.eq.s32.totalorder %s27, 1
      %p171 = por %p169, %p170
      %p172 = scmp.ne.s32.totalorder %s163, %s164
      %p173 = scmp.eq.s32.totalorder %s27, 0
      %p174 = por %p172, %p173
      %p175 = scmp.ne.s32.totalorder %s163, %s164
      %p176 = scmp.eq.s32.totalorder %s28, 1
      %p177 = por %p175, %p176
      %p179 = scmp.ne.s32.totalorder %s164, %s178
      %p180 = scmp.eq.s32.totalorder %s28, 0
      %p181 = por %p179, %p180
      %s183 = sadd.s32 %s182, 1
      %p186 = scmp.eq.s32.totalorder %s22, 1
      %p187 = scmp.ne.s32.totalorder %s182, %s184
      %p188 = scmp.eq.s32.totalorder %s22, 0
      %p189 = por %p187, %p188
      %p190 = scmp.ne.s32.totalorder %s182, %s184
      %p191 = scmp.eq.s32.totalorder %s27, 1
      %p192 = por %p190, %p191
      %p193 = scmp.ne.s32.totalorder %s184, %s185
      %p194 = scmp.eq.s32.totalorder %s27, 0
      %p195 = por %p193, %p194
      %p196 = scmp.ne.s32.totalorder %s184, %s185
      %p197 = scmp.eq.s32.totalorder %s28, 1
      %p198 = por %p196, %p197
      %p200 = scmp.ne.s32.totalorder %s185, %s199
      %p201 = scmp.eq.s32.totalorder %s28, 0
      %p202 = por %p200, %p201
      %s204 = sadd.s32 %s203, 1
      %p207 = scmp.eq.s32.totalorder %s22, 1
      %p208 = scmp.ne.s32.totalorder %s203, %s205
      %p209 = scmp.eq.s32.totalorder %s22, 0
      %p210 = por %p208, %p209
      %p211 = scmp.ne.s32.totalorder %s203, %s205
      %p212 = scmp.eq.s32.totalorder %s27, 1
      %p213 = por %p211, %p212
      %p214 = scmp.ne.s32.totalorder %s205, %s206
      %p215 = scmp.eq.s32.totalorder %s27, 0
      %p216 = por %p214, %p215
      %p217 = scmp.ne.s32.totalorder %s205, %s206
      %p218 = scmp.eq.s32.totalorder %s28, 1
      %p219 = por %p217, %p218
      %p221 = scmp.ne.s32.totalorder %s206, %s220
      %p222 = scmp.eq.s32.totalorder %s28, 0
      %p223 = por %p221, %p222
      %s225 = sadd.s32 %s224, 1
      %p228 = scmp.eq.s32.totalorder %s22, 1
      %p229 = scmp.ne.s32.totalorder %s224, %s226
      %p230 = scmp.eq.s32.totalorder %s22, 0
      %p231 = por %p229, %p230
      %p232 = scmp.ne.s32.totalorder %s224, %s226
      %p233 = scmp.eq.s32.totalorder %s27, 1
      %p234 = por %p232, %p233
      %p235 = scmp.ne.s32.totalorder %s226, %s227
      %p236 = scmp.eq.s32.totalorder %s27, 0
      %p237 = por %p235, %p236
      %p238 = scmp.ne.s32.totalorder %s226, %s227
      %p239 = scmp.eq.s32.totalorder %s28, 1
      %p240 = por %p238, %p239
      %p242 = scmp.ne.s32.totalorder %s227, %s241
      %p243 = scmp.eq.s32.totalorder %s28, 0
      %p244 = por %p242, %p243
      %s246 = sadd.s32 %s245, 1
      %p249 = scmp.eq.s32.totalorder %s22, 1
      %p250 = scmp.ne.s32.totalorder %s245, %s247
      %p251 = scmp.eq.s32.totalorder %s22, 0
      %p252 = por %p250, %p251
      %p253 = scmp.ne.s32.totalorder %s245, %s247
      %p254 = scmp.eq.s32.totalorder %s27, 1
      %p255 = por %p253, %p254
      %p256 = scmp.ne.s32.totalorder %s247, %s248
      %p257 = scmp.eq.s32.totalorder %s27, 0
      %p258 = por %p256, %p257
      %p259 = scmp.ne.s32.totalorder %s247, %s248
      %p260 = scmp.eq.s32.totalorder %s28, 1
      %p261 = por %p259, %p260
      %p263 = scmp.ne.s32.totalorder %s248, %s262
      %p264 = scmp.eq.s32.totalorder %s28, 0
      %p265 = por %p263, %p264
      %s267 = sadd.s32 %s266, 1
      %p270 = scmp.eq.s32.totalorder %s22, 1
      %p271 = scmp.ne.s32.totalorder %s266, %s268
      %p272 = scmp.eq.s32.totalorder %s22, 0
      %p273 = por %p271, %p272
      %p274 = scmp.ne.s32.totalorder %s266, %s268
      %p275 = scmp.eq.s32.totalorder %s27, 1
      %p276 = por %p274, %p275
      %p277 = scmp.ne.s32.totalorder %s268, %s269
      %p278 = scmp.eq.s32.totalorder %s27, 0
      %p279 = por %p277, %p278
      %p280 = scmp.ne.s32.totalorder %s268, %s269
      %p281 = scmp.eq.s32.totalorder %s28, 1
      %p282 = por %p280, %p281
      %p284 = scmp.ne.s32.totalorder %s269, %s283
      %p285 = scmp.eq.s32.totalorder %s28, 0
      %p286 = por %p284, %p285
      %s288 = sadd.s32 %s287, 1
      %p291 = scmp.eq.s32.totalorder %s22, 1
      %p292 = scmp.ne.s32.totalorder %s287, %s289
      %p293 = scmp.eq.s32.totalorder %s22, 0
      %p294 = por %p292, %p293
      %p295 = scmp.ne.s32.totalorder %s287, %s289
      %p296 = scmp.eq.s32.totalorder %s27, 1
      %p297 = por %p295, %p296
      %p298 = scmp.ne.s32.totalorder %s289, %s290
      %p299 = scmp.eq.s32.totalorder %s27, 0
      %p300 = por %p298, %p299
      %p301 = scmp.ne.s32.totalorder %s289, %s290
      %p302 = scmp.eq.s32.totalorder %s28, 1
      %p303 = por %p301, %p302
      %p305 = scmp.ne.s32.totalorder %s290, %s304
      %p306 = scmp.eq.s32.totalorder %s28, 0
      %p307 = por %p305, %p306
      %s308 = ssub.s32 %s22, %s29
      %p309 = scmp.eq.s32.totalorder %s308, 0
      %s311 = sadd.s32 %s310, 1
      %s312 = scalar_select %p309, %s310, %s311
      %p315 = pneg %p309
      %p316 = scmp.eq.s32.totalorder %s22, 1
      %p317 = por %p315, %p316
      %p318 = scmp.ne.s32.totalorder %s310, %s313
      %p319 = scmp.eq.s32.totalorder %s22, 0
      %p320 = por %p318, %p319
      %p321 = scmp.ne.s32.totalorder %s310, %s313
      %p322 = scmp.eq.s32.totalorder %s27, 1
      %p323 = por %p321, %p322
      %p324 = scmp.ne.s32.totalorder %s313, %s314
      %p325 = scmp.eq.s32.totalorder %s27, 0
      %p326 = por %p324, %p325
      %p327 = scmp.ne.s32.totalorder %s313, %s314
      %p328 = scmp.eq.s32.totalorder %s28, 1
      %p329 = por %p327, %p328
      %p331 = scmp.ne.s32.totalorder %s314, %s330
      %p332 = scmp.eq.s32.totalorder %s28, 0
      %p333 = por %p331, %p332
      %p334 = scmp.le.s32.totalorder 1, %s22
      %p335 = scmp.lt.s32.totalorder %s22, 3
      %p336 = pnand %p334, %p335
      %p337 = pneg %p336
      // Predicated region
      $region9: #{tpu_custom_call.1} parent=5 // pred_check
        _
      $region10: #{tpu_custom_call.1} parent=5 // pred_check_branch
        %339 = sbr.rel (%p336) target = $region12
      $region11: #{tpu_custom_call.1} parent=5 // pred_region
        %s340 = ssub.s32 %s22, 1
        // Predicated region
        $region13: #{tpu_custom_call.1} parent=11 // pred_check
          %p341 = pneg %p69
        $region14: #{tpu_custom_call.1} parent=11 // pred_check_branch
          %343 = sbr.rel (%p341) target = $region16
        $region15: #{tpu_custom_call.1} parent=11 // pred_region
          _
        $region16: #{tpu_custom_call.1} parent=11 // pred_fallthru
          _
        // Predicated region
        $region17: #{tpu_custom_call.1} parent=11 // pred_check
          %p344 = pneg %p90
        $region18: #{tpu_custom_call.1} parent=11 // pred_check_branch
          %346 = sbr.rel (%p344) target = $region20
        $region19: #{tpu_custom_call.1} parent=11 // pred_region
          _
        $region20: #{tpu_custom_call.1} parent=11 // pred_fallthru
          _
        // Predicated region
        $region21: #{tpu_custom_call.1} parent=11 // pred_check
          %p347 = pneg %p111
        $region22: #{tpu_custom_call.1} parent=11 // pred_check_branch
          %349 = sbr.rel (%p347) target = $region24
        $region23: #{tpu_custom_call.1} parent=11 // pred_region
          _
        $region24: #{tpu_custom_call.1} parent=11 // pred_fallthru
          _
        // Predicated region
        $region25: #{tpu_custom_call.1} parent=11 // pred_check
          %p350 = pneg %p132
        $region26: #{tpu_custom_call.1} parent=11 // pred_check_branch
          %352 = sbr.rel (%p350) target = $region28
        $region27: #{tpu_custom_call.1} parent=11 // pred_region
          _
        $region28: #{tpu_custom_call.1} parent=11 // pred_fallthru
          _
        // Predicated region
        $region29: #{tpu_custom_call.1} parent=11 // pred_check
          %p353 = pneg %p153
        $region30: #{tpu_custom_call.1} parent=11 // pred_check_branch
          %355 = sbr.rel (%p353) target = $region32
        $region31: #{tpu_custom_call.1} parent=11 // pred_region
          _
        $region32: #{tpu_custom_call.1} parent=11 // pred_fallthru
          _
        // Predicated region
        $region33: #{tpu_custom_call.1} parent=11 // pred_check
          %p356 = pneg %p174
        $region34: #{tpu_custom_call.1} parent=11 // pred_check_branch
          %358 = sbr.rel (%p356) target = $region36
        $region35: #{tpu_custom_call.1} parent=11 // pred_region
          _
        $region36: #{tpu_custom_call.1} parent=11 // pred_fallthru
          _
        // Predicated region
        $region37: #{tpu_custom_call.1} parent=11 // pred_check
          %p359 = pneg %p195
        $region38: #{tpu_custom_call.1} parent=11 // pred_check_branch
          %361 = sbr.rel (%p359) target = $region40
        $region39: #{tpu_custom_call.1} parent=11 // pred_region
          _
        $region40: #{tpu_custom_call.1} parent=11 // pred_fallthru
          _
        // Predicated region
        $region41: #{tpu_custom_call.1} parent=11 // pred_check
          %p362 = pneg %p216
        $region42: #{tpu_custom_call.1} parent=11 // pred_check_branch
          %364 = sbr.rel (%p362) target = $region44
        $region43: #{tpu_custom_call.1} parent=11 // pred_region
          _
        $region44: #{tpu_custom_call.1} parent=11 // pred_fallthru
          _
        // Predicated region
        $region45: #{tpu_custom_call.1} parent=11 // pred_check
          %p365 = pneg %p237
        $region46: #{tpu_custom_call.1} parent=11 // pred_check_branch
          %367 = sbr.rel (%p365) target = $region48
        $region47: #{tpu_custom_call.1} parent=11 // pred_region
          _
        $region48: #{tpu_custom_call.1} parent=11 // pred_fallthru
          _
        // Predicated region
        $region49: #{tpu_custom_call.1} parent=11 // pred_check
          %p368 = pneg %p258
        $region50: #{tpu_custom_call.1} parent=11 // pred_check_branch
          %370 = sbr.rel (%p368) target = $region52
        $region51: #{tpu_custom_call.1} parent=11 // pred_region
          _
        $region52: #{tpu_custom_call.1} parent=11 // pred_fallthru
          _
        // Predicated region
        $region53: #{tpu_custom_call.1} parent=11 // pred_check
          %p371 = pneg %p279
        $region54: #{tpu_custom_call.1} parent=11 // pred_check_branch
          %373 = sbr.rel (%p371) target = $region56
        $region55: #{tpu_custom_call.1} parent=11 // pred_region
          _
        $region56: #{tpu_custom_call.1} parent=11 // pred_fallthru
          _
        // Predicated region
        $region57: #{tpu_custom_call.1} parent=11 // pred_check
          %p374 = pneg %p300
        $region58: #{tpu_custom_call.1} parent=11 // pred_check_branch
          %376 = sbr.rel (%p374) target = $region60
        $region59: #{tpu_custom_call.1} parent=11 // pred_region
          _
        $region60: #{tpu_custom_call.1} parent=11 // pred_fallthru
          _
      $region12: #{tpu_custom_call.1} parent=5 // pred_fallthru
        _
      %p377 = scmp.lt.s32.totalorder %s22, 2
      // Predicated region
      $region61: #{tpu_custom_call.1} parent=5 // pred_check
        %p378 = pneg %p377
      $region62: #{tpu_custom_call.1} parent=5 // pred_check_branch
        %380 = sbr.rel (%p378) target = $region64
      $region63: #{tpu_custom_call.1} parent=5 // pred_region
        // Predicated region
        $region65: #{tpu_custom_call.1} parent=63 // pred_check
          %p381 = pneg %p42
        $region66: #{tpu_custom_call.1} parent=63 // pred_check_branch
          %383 = sbr.rel (%p381) target = $region68
        $region67: #{tpu_custom_call.1} parent=63 // pred_region
          %p384 = scmp.lt.s32.totalorder %s22, 1
          %s385 = scalar_select %p384, %s22, 1
          %s386 = smul.addr %s385, 8
          %s387 = scalar_lea.vmem %s0, %s386
        $region68: #{tpu_custom_call.1} parent=63 // pred_fallthru
          _
      $region64: #{tpu_custom_call.1} parent=5 // pred_fallthru
        _
      %p388 = scmp.le.s32.totalorder 1, %s22
      %p389 = scmp.lt.s32.totalorder %s22, 3
      %p390 = pnand %p388, %p389
      %p391 = pneg %p390
      // Predicated region
      $region69: #{tpu_custom_call.1} parent=5 // pred_check
        _
      $region70: #{tpu_custom_call.1} parent=5 // pred_check_branch
        %393 = sbr.rel (%p390) target = $region72
      $region71: #{tpu_custom_call.1} parent=5 // pred_region
        %s394 = ssub.s32 %s22, 1
        %p395 = scmp.lt.s32.totalorder %s27, 1
        %s396 = scalar_select %p395, %s27, 1
        %s397 = smul.addr %s396, 8
        %s398 = scalar_lea.vmem %s0, %s397
        %p399 = pneg %p48
        %p400 = pneg %p45
        %p401 = pneg %p69
        %p402 = pneg %p66
        %p403 = pneg %p90
        %p404 = pneg %p87
        %p405 = pneg %p111
        %p406 = pneg %p108
        %p407 = pneg %p132
        %p408 = pneg %p129
        %p409 = pneg %p153
        %p410 = pneg %p150
        %p411 = pneg %p174
        %p412 = pneg %p171
        %p413 = pneg %p195
        %p414 = pneg %p192
        %p415 = pneg %p216
        %p416 = pneg %p213
        %p417 = pneg %p237
        %p418 = pneg %p234
        %p419 = pneg %p258
        %p420 = pneg %p255
        %p421 = pneg %p279
        %p422 = pneg %p276
        %p423 = pneg %p300
        %p424 = pneg %p297
        %p425 = pneg %p326
        %p426 = pneg %p323
        %s427 = sand.u32 %s313, 1
        %s428 = scalar_lea.sflag [#allocation3], %s427
        %s429 = sand.u32 %s313, 1
        %s430 = smul.addr %s429, 8
        %s431 = scalar_lea.vmem [#allocation2], %s430
        %p432 = scmp.lt.s32.totalorder %s27, 1
        %s433 = scalar_select %p432, %s27, 1
        %s434 = smul.addr %s433, 8
        %s435 = scalar_lea.vmem %s0, %s434
        %v437 = vld [vmem:[%s435] sm:$0xff]
        %v438 = vld [vmem:[%s1] sm:$0x1]
        %v439 = vld [vmem:[%s2] sm:$0x1]
        %vm440 = vcmask 261120
        %v441 = vsel %vm440, %v437, 0.0
        %442 = vadd.xlane.f32.xlu0 %v441
        %v443 = vpop.xlane.xlu0 %442
        %v444 = vrcp.pop 32.0
        %v445 = vmul.f32 32.0, %v444
        %v446 = vsub.f32 1.0, %v445
        %v447 = vmul.f32 %v444, %v446
        %v448 = vadd.f32 %v444, %v447
        %vm449 = vweird.f32 %v444
        %v450 = vsel %vm449, %v444, %v448
        %v451 = vmul.f32 %v443, %v450
        %v452 = vsub.f32 %v437, %v451
        %v453 = vmul.f32 %v452, %v452
        %v454 = vsel %vm440, %v453, 0.0
        %455 = vadd.xlane.f32.xlu0 %v454
        %v456 = vpop.xlane.xlu0 %455
        %v457 = vmul.f32 %v456, %v450
        %v458 = vadd.f32 %v457, 1e-05
        %v459 = vrsqrt.pop %v458
        %v460 = vmul.f32 %v459, %v458
        %v461 = vmul.f32 %v460, %v459
        %v462 = vmul.f32 0.5, %v461
        %v463 = vsub.f32 1.5, %v462
        %v464 = vmul.f32 %v459, %v463
        %vm465 = vweird.f32 %v458
        %vm466 = vweird.f32 %v459
        %vm467 = vmor %vm465, %vm466
        %v468 = vsel %vm467, %v459, %v464
        %v469 = vmul.f32 %v452, %v468
        %v471 = vperm.slane %v438, 0
        %v473 = vmul.f32 %v469, %v471
        %v475 = vperm.slane %v439, 0
        %v477 = vadd.f32 %v473, %v475
        %v478 = vpack.c.bf16 %v477, %v477
        %v479 = vld [vmem:[%s3] sm:$0xf]
        %v480 = vld [vmem:[%s3 + $0x4] sm:$0xf]
        %v481 = vld [vmem:[%s3 + $0x8] sm:$0xf]
        %v482 = vld [vmem:[%s3 + $0xc] sm:$0xf]
        %v483 = vld [vmem:[%s4] sm:$0x1]
        %v485 = vperm.slane %v483, 0
        %v491 = vunpack.c.l.b16 %v479
        %v492 = vunpack.c.l.b16 %v480
        %v493 = vunpack.c.l.b16 %v481
        %v494 = vunpack.c.l.b16 %v482
        %v495 = vpack.c.b16 %v492, %v491
        %v496 = vpack.c.b16 %v494, %v493
        %v500 = vsel %vm440, %v478, 0
        %502 = vmatpush.bf16.msra.mxu0 0
        %503 = vmatpush.bf16.msra.mxu0 0
        %504 = vmatpush.bf16.msra.mxu0 0
        %505 = vmatpush.bf16.msra.mxu0 0
        %506 = vmatpush.bf16.msra.mxu0 0
        %507 = vmatpush.bf16.msra.mxu0 0
        %508 = vmatpush.bf16.msra.mxu0 %v496
        %509 = vmatpush.bf16.msra.mxu0 %v495
        %510 = vmatmul.bf16.gmra.mxu0 %v500
        %v511 = vpop.f32.mrf.mxu0
        %v512 = vadd.f32 %v485, %v511
        %v513 = vpop.f32.mrf.mxu0
        %514 = vdwg.mxu0
        %v515 = vld [vmem:[%s6] sm:$0x1]
        %v517 = vperm.slane %v515, 0
        %v519 = vadd.f32 %v437, %v517
        %v520 = vpack.c.bf16 %v512, %v512
        %v522 = vunpack.c.l.b16 %v520
        %v523 = vpack.c.b16 %v522, %v522
        %524 = vrot.lane.b32.xlu0 %v523, 96
        %v525 = vpop.permute.xlu0 %524
        %vm526 = vcmask 64512
        %v528 = vsel %vm526, %v520, 0
        %v531 = vsel %vm526, %v525, 0
        %533 = vmatpush.bf16.xpose.msra.mxu0 0
        %534 = vmatpush.bf16.xpose.msra.mxu0 0
        %535 = vmatpush.bf16.xpose.msra.mxu0 0
        %536 = vmatpush.bf16.xpose.msra.mxu0 0
        %537 = vmatpush.bf16.xpose.msra.mxu0 0
        %538 = vmatpush.bf16.xpose.msra.mxu0 0
        %539 = vmatpush.bf16.xpose.msra.mxu0 0
        %540 = vmatpush.bf16.xpose.msra.mxu0 %v531
        %541 = vmatmul.bf16.gmra.mxu0 %v528
        %v542 = vpop.f32.mrf.mxu0
        %v543 = vadd.f32 0.0, %v542
        %v544 = vpop.f32.mrf.mxu0
        %545 = vdwg.mxu0
        %v546 = vsel %vm526, %v543, -inf
        %547 = vmax.xlane.f32.xlu0 %v546
        %v548 = vpop.xlane.xlu0 %547
        %v549 = vsub.f32 %v543, %v548
        %v550 = vmul.f32 %v549, 1.442695
        %v551 = vpow.pop %v550
        %v552 = vsel %vm526, %v551, 0.0
        %553 = vadd.xlane.f32.xlu0 %v552
        %v554 = vpop.xlane.xlu0 %553
        %v555 = vrcp.pop %v554
        %v556 = vpack.c.bf16 %v551, %v551
        %557 = vrot.lane.b32.xlu0 %v523, 64
        %v558 = vpop.permute.xlu0 %557
        %v560 = vsel %vm526, %v556, 0
        %vm562 = vcmask 1043456
        %v564 = vsel %vm562, %v558, 0
        %566 = vmatpush.bf16.msra.mxu0 0
        %567 = vmatpush.bf16.msra.mxu0 0
        %568 = vmatpush.bf16.msra.mxu0 0
        %569 = vmatpush.bf16.msra.mxu0 0
        %570 = vmatpush.bf16.msra.mxu0 0
        %571 = vmatpush.bf16.msra.mxu0 0
        %572 = vmatpush.bf16.msra.mxu0 0
        %573 = vmatpush.bf16.msra.mxu0 %v564
        %574 = vmatmul.bf16.gmra.mxu0 %v560
        %v575 = vpop.f32.mrf.mxu0
        %v576 = vadd.f32 0.0, %v575
        %v577 = vpop.f32.mrf.mxu0
        %578 = vdwg.mxu0
        %v579 = vmul.f32 %v576, %v555
        %v580 = vpack.c.bf16 %v579, %v579
        %v581 = vld [vmem:[%s5] sm:$0xf]
        %v583 = vsel %vm526, %v580, 0
        %v586 = vsel %vm562, %v581, 0
        %588 = vmatpush.bf16.msra.mxu0 0
        %589 = vmatpush.bf16.msra.mxu0 0
        %590 = vmatpush.bf16.msra.mxu0 0
        %591 = vmatpush.bf16.msra.mxu0 0
        %592 = vmatpush.bf16.msra.mxu0 0
        %593 = vmatpush.bf16.msra.mxu0 0
        %594 = vmatpush.bf16.msra.mxu0 0
        %595 = vmatpush.bf16.msra.mxu0 %v586
        %596 = vmatmul.bf16.gmra.mxu0 %v583
        %v597 = vpop.f32.mrf.mxu0
        %v598 = vadd.f32 0.0, %v597
        %v599 = vpop.f32.mrf.mxu0
        %600 = vdwg.mxu0
        %v601 = vadd.f32 %v519, %v598
        %602 = vrot.lane.b32.xlu0 %v523, 120
        %v603 = vpop.permute.xlu0 %602
        %604 = vrot.lane.b32.xlu0 %v523, 88
        %v605 = vpop.permute.xlu0 %604
        %v607 = vsel %vm526, %v603, 0
        %v610 = vsel %vm526, %v605, 0
        %612 = vmatpush.bf16.xpose.msra.mxu0 0
        %613 = vmatpush.bf16.xpose.msra.mxu0 0
        %614 = vmatpush.bf16.xpose.msra.mxu0 0
        %615 = vmatpush.bf16.xpose.msra.mxu0 0
        %616 = vmatpush.bf16.xpose.msra.mxu0 0
        %617 = vmatpush.bf16.xpose.msra.mxu0 0
        %618 = vmatpush.bf16.xpose.msra.mxu0 0
        %619 = vmatpush.bf16.xpose.msra.mxu0 %v610
        %620 = vmatmul.bf16.gmra.mxu0 %v607
        %v621 = vpop.f32.mrf.mxu0
        %v622 = vadd.f32 0.0, %v621
        %v623 = vpop.f32.mrf.mxu0
        %624 = vdwg.mxu0
        %v625 = vsel %vm526, %v622, -inf
        %626 = vmax.xlane.f32.xlu0 %v625
        %v627 = vpop.xlane.xlu0 %626
        %v628 = vsub.f32 %v622, %v627
        %v629 = vmul.f32 %v628, 1.442695
        %v630 = vpow.pop %v629
        %v631 = vsel %vm526, %v630, 0.0
        %632 = vadd.xlane.f32.xlu0 %v631
        %v633 = vpop.xlane.xlu0 %632
        %v634 = vrcp.pop %v633
        %v635 = vpack.c.bf16 %v630, %v630
        %636 = vrot.lane.b32.xlu0 %v523, 56
        %v637 = vpop.permute.xlu0 %636
        %v639 = vsel %vm526, %v635, 0
        %v642 = vsel %vm562, %v637, 0
        %644 = vmatpush.bf16.msra.mxu0 0
        %645 = vmatpush.bf16.msra.mxu0 0
        %646 = vmatpush.bf16.msra.mxu0 0
        %647 = vmatpush.bf16.msra.mxu0 0
        %648 = vmatpush.bf16.msra.mxu0 0
        %649 = vmatpush.bf16.msra.mxu0 0
        %650 = vmatpush.bf16.msra.mxu0 0
        %651 = vmatpush.bf16.msra.mxu0 %v642
        %652 = vmatmul.bf16.gmra.mxu0 %v639
        %v653 = vpop.f32.mrf.mxu0
        %v654 = vadd.f32 0.0, %v653
        %v655 = vpop.f32.mrf.mxu0
        %656 = vdwg.mxu0
        %v657 = vmul.f32 %v654, %v634
        %v658 = vpack.c.bf16 %v657, %v657
        %v659 = vld [vmem:[%s5 + $0x4] sm:$0xf]
        %v661 = vsel %vm526, %v658, 0
        %v664 = vsel %vm562, %v659, 0
        %666 = vmatpush.bf16.msra.mxu0 0
        %667 = vmatpush.bf16.msra.mxu0 0
        %668 = vmatpush.bf16.msra.mxu0 0
        %669 = vmatpush.bf16.msra.mxu0 0
        %670 = vmatpush.bf16.msra.mxu0 0
        %671 = vmatpush.bf16.msra.mxu0 0
        %672 = vmatpush.bf16.msra.mxu0 0
        %673 = vmatpush.bf16.msra.mxu0 %v664
        %674 = vmatmul.bf16.gmra.mxu0 %v661
        %v675 = vpop.f32.mrf.mxu0
        %v676 = vadd.f32 0.0, %v675
        %v677 = vpop.f32.mrf.mxu0
        %678 = vdwg.mxu0
        %v679 = vadd.f32 %v601, %v676
        %680 = vrot.lane.b32.xlu0 %v523, 112
        %v681 = vpop.permute.xlu0 %680
        %682 = vrot.lane.b32.xlu0 %v523, 80
        %v683 = vpop.permute.xlu0 %682
        %v685 = vsel %vm526, %v681, 0
        %v688 = vsel %vm526, %v683, 0
        %690 = vmatpush.bf16.xpose.msra.mxu0 0
        %691 = vmatpush.bf16.xpose.msra.mxu0 0
        %692 = vmatpush.bf16.xpose.msra.mxu0 0
        %693 = vmatpush.bf16.xpose.msra.mxu0 0
        %694 = vmatpush.bf16.xpose.msra.mxu0 0
        %695 = vmatpush.bf16.xpose.msra.mxu0 0
        %696 = vmatpush.bf16.xpose.msra.mxu0 0
        %697 = vmatpush.bf16.xpose.msra.mxu0 %v688
        %698 = vmatmul.bf16.gmra.mxu0 %v685
        %v699 = vpop.f32.mrf.mxu0
        %v700 = vadd.f32 0.0, %v699
        %v701 = vpop.f32.mrf.mxu0
        %702 = vdwg.mxu0
        %v703 = vsel %vm526, %v700, -inf
        %704 = vmax.xlane.f32.xlu0 %v703
        %v705 = vpop.xlane.xlu0 %704
        %v706 = vsub.f32 %v700, %v705
        %v707 = vmul.f32 %v706, 1.442695
        %v708 = vpow.pop %v707
        %v709 = vsel %vm526, %v708, 0.0
        %710 = vadd.xlane.f32.xlu0 %v709
        %v711 = vpop.xlane.xlu0 %710
        %v712 = vrcp.pop %v711
        %v713 = vpack.c.bf16 %v708, %v708
        %714 = vrot.lane.b32.xlu0 %v523, 48
        %v715 = vpop.permute.xlu0 %714
        %v717 = vsel %vm526, %v713, 0
        %v720 = vsel %vm562, %v715, 0
        %722 = vmatpush.bf16.msra.mxu0 0
        %723 = vmatpush.bf16.msra.mxu0 0
        %724 = vmatpush.bf16.msra.mxu0 0
        %725 = vmatpush.bf16.msra.mxu0 0
        %726 = vmatpush.bf16.msra.mxu0 0
        %727 = vmatpush.bf16.msra.mxu0 0
        %728 = vmatpush.bf16.msra.mxu0 0
        %729 = vmatpush.bf16.msra.mxu0 %v720
        %730 = vmatmul.bf16.gmra.mxu0 %v717
        %v731 = vpop.f32.mrf.mxu0
        %v732 = vadd.f32 0.0, %v731
        %v733 = vpop.f32.mrf.mxu0
        %734 = vdwg.mxu0
        %v735 = vmul.f32 %v732, %v712
        %v736 = vpack.c.bf16 %v735, %v735
        %v737 = vld [vmem:[%s5 + $0x8] sm:$0xf]
        %v739 = vsel %vm526, %v736, 0
        %v742 = vsel %vm562, %v737, 0
        %744 = vmatpush.bf16.msra.mxu0 0
        %745 = vmatpush.bf16.msra.mxu0 0
        %746 = vmatpush.bf16.msra.mxu0 0
        %747 = vmatpush.bf16.msra.mxu0 0
        %748 = vmatpush.bf16.msra.mxu0 0
        %749 = vmatpush.bf16.msra.mxu0 0
        %750 = vmatpush.bf16.msra.mxu0 0
        %751 = vmatpush.bf16.msra.mxu0 %v742
        %752 = vmatmul.bf16.gmra.mxu0 %v739
        %v753 = vpop.f32.mrf.mxu0
        %v754 = vadd.f32 0.0, %v753
        %v755 = vpop.f32.mrf.mxu0
        %756 = vdwg.mxu0
        %v757 = vadd.f32 %v679, %v754
        %758 = vrot.lane.b32.xlu0 %v523, 104
        %v759 = vpop.permute.xlu0 %758
        %760 = vrot.lane.b32.xlu0 %v523, 72
        %v761 = vpop.permute.xlu0 %760
        %v763 = vsel %vm526, %v759, 0
        %v766 = vsel %vm526, %v761, 0
        %768 = vmatpush.bf16.xpose.msra.mxu0 0
        %769 = vmatpush.bf16.xpose.msra.mxu0 0
        %770 = vmatpush.bf16.xpose.msra.mxu0 0
        %771 = vmatpush.bf16.xpose.msra.mxu0 0
        %772 = vmatpush.bf16.xpose.msra.mxu0 0
        %773 = vmatpush.bf16.xpose.msra.mxu0 0
        %774 = vmatpush.bf16.xpose.msra.mxu0 0
        %775 = vmatpush.bf16.xpose.msra.mxu0 %v766
        %776 = vmatmul.bf16.gmra.mxu0 %v763
        %v777 = vpop.f32.mrf.mxu0
        %v778 = vadd.f32 0.0, %v777
        %v779 = vpop.f32.mrf.mxu0
        %780 = vdwg.mxu0
        %v781 = vsel %vm526, %v778, -inf
        %782 = vmax.xlane.f32.xlu0 %v781
        %v783 = vpop.xlane.xlu0 %782
        %v784 = vsub.f32 %v778, %v783
        %v785 = vmul.f32 %v784, 1.442695
        %v786 = vpow.pop %v785
        %v787 = vsel %vm526, %v786, 0.0
        %788 = vadd.xlane.f32.xlu0 %v787
        %v789 = vpop.xlane.xlu0 %788
        %v790 = vrcp.pop %v789
        %v791 = vpack.c.bf16 %v786, %v786
        %792 = vrot.lane.b32.xlu0 %v523, 40
        %v793 = vpop.permute.xlu0 %792
        %v795 = vsel %vm526, %v791, 0
        %v798 = vsel %vm562, %v793, 0
        %800 = vmatpush.bf16.msra.mxu0 0
        %801 = vmatpush.bf16.msra.mxu0 0
        %802 = vmatpush.bf16.msra.mxu0 0
        %803 = vmatpush.bf16.msra.mxu0 0
        %804 = vmatpush.bf16.msra.mxu0 0
        %805 = vmatpush.bf16.msra.mxu0 0
        %806 = vmatpush.bf16.msra.mxu0 0
        %807 = vmatpush.bf16.msra.mxu0 %v798
        %808 = vmatmul.bf16.gmra.mxu0 %v795
        %v809 = vpop.f32.mrf.mxu0
        %v810 = vadd.f32 0.0, %v809
        %v811 = vpop.f32.mrf.mxu0
        %812 = vdwg.mxu0
        %v813 = vmul.f32 %v810, %v790
        %v814 = vpack.c.bf16 %v813, %v813
        %v815 = vld [vmem:[%s5 + $0xc] sm:$0xf]
        %v817 = vsel %vm526, %v814, 0
        %v820 = vsel %vm562, %v815, 0
        %822 = vmatpush.bf16.msra.mxu0 0
        %823 = vmatpush.bf16.msra.mxu0 0
        %824 = vmatpush.bf16.msra.mxu0 0
        %825 = vmatpush.bf16.msra.mxu0 0
        %826 = vmatpush.bf16.msra.mxu0 0
        %827 = vmatpush.bf16.msra.mxu0 0
        %828 = vmatpush.bf16.msra.mxu0 0
        %829 = vmatpush.bf16.msra.mxu0 %v820
        %830 = vmatmul.bf16.gmra.mxu0 %v817
        %v831 = vpop.f32.mrf.mxu0
        %v832 = vadd.f32 0.0, %v831
        %v833 = vpop.f32.mrf.mxu0
        %834 = vdwg.mxu0
        %v835 = vadd.f32 %v757, %v832
        %v836 = vld [vmem:[%s7] sm:$0x1]
        %v837 = vld [vmem:[%s8] sm:$0x1]
        %v838 = vsel %vm440, %v835, 0.0
        %839 = vadd.xlane.f32.xlu0 %v838
        %v840 = vpop.xlane.xlu0 %839
        %v841 = vmul.f32 %v840, %v450
        %v842 = vsub.f32 %v835, %v841
        %v843 = vmul.f32 %v842, %v842
        %v844 = vsel %vm440, %v843, 0.0
        %845 = vadd.xlane.f32.xlu0 %v844
        %v846 = vpop.xlane.xlu0 %845
        %v847 = vmul.f32 %v846, %v450
        %v848 = vadd.f32 %v847, 1e-05
        %v849 = vrsqrt.pop %v848
        %v850 = vmul.f32 %v849, %v848
        %v851 = vmul.f32 %v850, %v849
        %v852 = vmul.f32 0.5, %v851
        %v853 = vsub.f32 1.5, %v852
        %v854 = vmul.f32 %v849, %v853
        %vm855 = vweird.f32 %v848
        %vm856 = vweird.f32 %v849
        %vm857 = vmor %vm855, %vm856
        %v858 = vsel %vm857, %v849, %v854
        %v859 = vmul.f32 %v842, %v858
        %v861 = vperm.slane %v836, 0
        %v863 = vmul.f32 %v859, %v861
        %v865 = vperm.slane %v837, 0
        %v867 = vadd.f32 %v863, %v865
        %v868 = vpack.c.bf16 %v867, %v867
        %v869 = vld [vmem:[%s9] sm:$0xf]
        %v870 = vld [vmem:[%s9 + $0x4] sm:$0xf]
        %v871 = vld [vmem:[%s9 + $0x8] sm:$0xf]
        %v872 = vld [vmem:[%s9 + $0xc] sm:$0xf]
        %v873 = vld [vmem:[%s10] sm:$0x1]
        %v875 = vperm.slane %v873, 0
        %v881 = vunpack.c.l.b16 %v869
        %v882 = vunpack.c.l.b16 %v870
        %v883 = vunpack.c.l.b16 %v871
        %v884 = vunpack.c.l.b16 %v872
        %v885 = vpack.c.b16 %v882, %v881
        %v886 = vpack.c.b16 %v884, %v883
        %v890 = vsel %vm440, %v868, 0
        %892 = vmatpush.bf16.msra.mxu0 0
        %893 = vmatpush.bf16.msra.mxu0 0
        %894 = vmatpush.bf16.msra.mxu0 0
        %895 = vmatpush.bf16.msra.mxu0 0
        %896 = vmatpush.bf16.msra.mxu0 0
        %897 = vmatpush.bf16.msra.mxu0 0
        %898 = vmatpush.bf16.msra.mxu0 %v886
        %899 = vmatpush.bf16.msra.mxu0 %v885
        %900 = vmatmul.bf16.gmra.mxu0 %v890
        %v901 = vpop.f32.mrf.mxu0
        %v902 = vadd.f32 %v875, %v901
        %v903 = vpop.f32.mrf.mxu0
        %904 = vdwg.mxu0
        %v905 = vmul.f32 %v902, 1.702
        %v906 = vxor.u32 %v905, 2147483648
        %v907 = vmul.f32 %v906, 1.442695
        %v908 = vpow.pop %v907
        %v909 = vadd.f32 %v908, 1.0
        %v910 = vrcp.pop %v909
        %v911 = vmul.f32 %v909, %v910
        %v912 = vsub.f32 1.0, %v911
        %v913 = vmul.f32 %v910, %v912
        %v914 = vadd.f32 %v910, %v913
        %vm915 = vweird.f32 %v909
        %vm916 = vweird.f32 %v910
        %vm917 = vmor %vm915, %vm916
        %v918 = vsel %vm917, %v910, %v914
        %v919 = vand.u32 2147483647, %v909
        %vm920 = vcmp.eq.f32.partialorder %v919, 8.507059e+37
        %v921 = vand.u32 %v909, 2147483648
        %v922 = vor.u32 1.1754944e-38, %v921
        %v923 = vsel %vm920, %v922, %v918
        %v924 = vmul.f32 1.0, %v923
        %v925 = vmul.f32 %v902, %v924
        %v926 = vpack.c.bf16 %v925, %v925
        %v927 = vld [vmem:[%s11] sm:$0xf]
        %v928 = vld [vmem:[%s11 + $0x4] sm:$0xf]
        %v929 = vld [vmem:[%s11 + $0x8] sm:$0xf]
        %v930 = vld [vmem:[%s11 + $0xc] sm:$0xf]
        %v931 = vld [vmem:[%s11 + $0x10] sm:$0xf]
        %v932 = vld [vmem:[%s11 + $0x14] sm:$0xf]
        %v933 = vld [vmem:[%s11 + $0x18] sm:$0xf]
        %v934 = vld [vmem:[%s11 + $0x1c] sm:$0xf]
        %v935 = vld [vmem:[%s11 + $0x20] sm:$0xf]
        %v936 = vld [vmem:[%s11 + $0x24] sm:$0xf]
        %v937 = vld [vmem:[%s11 + $0x28] sm:$0xf]
        %v938 = vld [vmem:[%s11 + $0x2c] sm:$0xf]
        %v939 = vld [vmem:[%s11 + $0x30] sm:$0xf]
        %v940 = vld [vmem:[%s11 + $0x34] sm:$0xf]
        %v941 = vld [vmem:[%s11 + $0x38] sm:$0xf]
        %v942 = vld [vmem:[%s11 + $0x3c] sm:$0xf]
        %v943 = vld [vmem:[%s12] sm:$0x1]
        %v945 = vperm.slane %v943, 0
        %v963 = vunpack.c.l.b16 %v927
        %v964 = vunpack.c.l.b16 %v928
        %v965 = vunpack.c.l.b16 %v929
        %v966 = vunpack.c.l.b16 %v930
        %v967 = vunpack.c.l.b16 %v931
        %v968 = vunpack.c.l.b16 %v932
        %v969 = vunpack.c.l.b16 %v933
        %v970 = vunpack.c.l.b16 %v934
        %v971 = vunpack.c.l.b16 %v935
        %v972 = vunpack.c.l.b16 %v936
        %v973 = vunpack.c.l.b16 %v937
        %v974 = vunpack.c.l.b16 %v938
        %v975 = vunpack.c.l.b16 %v939
        %v976 = vunpack.c.l.b16 %v940
        %v977 = vunpack.c.l.b16 %v941
        %v978 = vunpack.c.l.b16 %v942
        %v979 = vpack.c.b16 %v964, %v963
        %v980 = vpack.c.b16 %v966, %v965
        %v981 = vpack.c.b16 %v968, %v967
        %v982 = vpack.c.b16 %v970, %v969
        %v983 = vpack.c.b16 %v972, %v971
        %v984 = vpack.c.b16 %v974, %v973
        %v985 = vpack.c.b16 %v976, %v975
        %v986 = vpack.c.b16 %v978, %v977
        %995 = vmatpush.bf16.msra.mxu0 %v986
        %996 = vmatpush.bf16.msra.mxu0 %v985
        %997 = vmatpush.bf16.msra.mxu0 %v984
        %998 = vmatpush.bf16.msra.mxu0 %v983
        %999 = vmatpush.bf16.msra.mxu0 %v982
        %1000 = vmatpush.bf16.msra.mxu0 %v981
        %1001 = vmatpush.bf16.msra.mxu0 %v980
        %1002 = vmatpush.bf16.msra.mxu0 %v979
        %1003 = vmatmul.bf16.gmra.mxu0 %v926
        %v1004 = vpop.f32.mrf.mxu0
        %v1005 = vadd.f32 %v945, %v1004
        %v1006 = vpop.f32.mrf.mxu0
        %1007 = vdwg.mxu0
        %v1008 = vadd.f32 %v835, %v1005
        %1009 = vst.msk [vmem:[%s431] sm:$0xff] %vm440, %v1008
        %s1010 = sand.u32 %s313, 1
        %s1011 = scalar_lea.sflag [#allocation3], %s1010
        %s1012 = sand.u32 %s313, 1
        %s1013 = smul.addr %s1012, 8
        %s1014 = scalar_lea.vmem [#allocation2], %s1013
        // Predicated region
        $region73: #{tpu_custom_call.1} parent=71 // pred_check
          %p1015 = pneg %p323
        $region74: #{tpu_custom_call.1} parent=71 // pred_check_branch
          %1017 = sbr.rel (%p1015) target = $region76
        $region75: #{tpu_custom_call.1} parent=71 // pred_region
          %1019 = vsyncadd %s1011, 0
          %s1020 = smul.addr %s27, 8
          %s1021 = scalar_lea.hbm %s13, %s1020
          %s1023 = sshll.u32 %s1014, 4
          %s1024 = int_to_ptr.vmem [resolvable:$true] %s1023
          %s1025 = sshll.u32 %s1021, 4
          %s1026 = int_to_ptr.hbm [resolvable:$true] %s1025
          %1028 = dma.vmem_to_hbm [thread:$0]  %s1024, 128, %s1026, %s1011
        $region76: #{tpu_custom_call.1} parent=71 // pred_fallthru
          _
      $region72: #{tpu_custom_call.1} parent=5 // pred_fallthru
        _
      %p1029 = scmp.le.s32.totalorder 2, %s22
      // Predicated region
      $region77: #{tpu_custom_call.1} parent=5 // pred_check
        %p1030 = pneg %p1029
      $region78: #{tpu_custom_call.1} parent=5 // pred_check_branch
        %1032 = sbr.rel (%p1030) target = $region80
      $region79: #{tpu_custom_call.1} parent=5 // pred_region
        %s1033 = ssub.s32 %s22, 2
        // Predicated region
        $region81: #{tpu_custom_call.1} parent=79 // pred_check
          %p1034 = pneg %p329
        $region82: #{tpu_custom_call.1} parent=79 // pred_check_branch
          %1036 = sbr.rel (%p1034) target = $region84
        $region83: #{tpu_custom_call.1} parent=79 // pred_region
          %s1037 = sand.u32 %s314, 1
          %s1038 = scalar_lea.sflag [#allocation3], %s1037
          %s1039 = sand.u32 %s314, 1
          %s1040 = smul.addr %s1039, 8
          %s1041 = scalar_lea.vmem [#allocation2], %s1040
          %1043 = dma.done %s1038, 128
        $region84: #{tpu_custom_call.1} parent=79 // pred_fallthru
          _
      $region80: #{tpu_custom_call.1} parent=5 // pred_fallthru
        _
    $region6: #{tpu_custom_call.1} parent=1 // loop_footer
      %s26 = sadd.s32 1, %s22
    $region7: #{tpu_custom_call.1} parent=1 // loop_footer_branch
      %21 = sbr.rel target = $region3
    $region8: #{tpu_custom_call.1} parent=1 // loop_exit
      _
    %1044 = vsyncpa [#allocation3], 1
    %s1045 = scalar_lea.sflag [#allocation3], 1
    %1046 = vsyncpa %s1045, 1

// kernel: tpu_custom_call.1
$region0: #{tpu_custom_call.1}
  #allocation0 [shape = 'u32[]', space=smem, size = 0x4, offset = 0x4, fixed_abs, tag = 'smem constant byte address 0x4 - core index']
  #allocation1 [shape = 'u32[72,128]{1,0:T(1,128)}', space=vmem, size = 0x9000, scoped, tag = 'internal scratch']
  %s0 = inlined_call_operand.vmem [shape: f32[2,8,32], index: 0, kind: input, shape index: {}]
  %s1 = inlined_call_operand.vmem [shape: f32[1,32], index: 1, kind: input, shape index: {}]
  %s2 = inlined_call_operand.vmem [shape: f32[1,32], index: 2, kind: input, shape index: {}]
  %s3 = inlined_call_operand.vmem [shape: bf16[32,96], index: 3, kind: input, shape index: {}]
  %s4 = inlined_call_operand.vmem [shape: f32[1,96], index: 4, kind: input, shape index: {}]
  %s5 = inlined_call_operand.vmem [shape: bf16[32,32], index: 5, kind: input, shape index: {}]
  %s6 = inlined_call_operand.vmem [shape: f32[1,32], index: 6, kind: input, shape index: {}]
  %s7 = inlined_call_operand.vmem [shape: f32[1,32], index: 7, kind: input, shape index: {}]
  %s8 = inlined_call_operand.vmem [shape: f32[1,32], index: 8, kind: input, shape index: {}]
  %s9 = inlined_call_operand.vmem [shape: bf16[32,128], index: 9, kind: input, shape index: {}]
  %s10 = inlined_call_operand.vmem [shape: f32[1,128], index: 10, kind: input, shape index: {}]
  %s11 = inlined_call_operand.vmem [shape: bf16[128,32], index: 11, kind: input, shape index: {}]
  %s12 = inlined_call_operand.vmem [shape: f32[1,32], index: 12, kind: input, shape index: {}]
  %s13 = inlined_call_operand.hbm [shape: f32[2,8,32], index: 13, kind: output, shape index: {}]
  %s14 = sld [smem:[#allocation0]]
  $region85: #{tpu_custom_call.1} parent=0
    _
  %s16 = ssub.s32 1, %s14
  %s17 = scalar_select 0, %s16, %s14
  $region1: #{tpu_custom_call.1} parent=0
    #allocation2 [shape = 'u8[8192]{0}', space=vmem, size = 0x2000, scoped, tag = 'output window, operand 0']
    #allocation3 [shape = 's32[2]{0}', space=sflag, size = 0x8, scoped, tag = 'scoped memory for tpu_custom_call.1']
    %18 = vsyncpa [#allocation3], 0
    %s19 = scalar_lea.sflag [#allocation3], 1
    %20 = vsyncpa %s19, 0
    loop: start=0, step=1, limit=4
    $region2: #{tpu_custom_call.1} parent=1 // loop_pre_header
      _
    $region3: #{tpu_custom_call.1} parent=1 // loop_header
      %s22 = sphi 0, %s26
      %p23 = scmp.ge.s32.totalorder %s22, 4
      %s32 = sphi 0, %s34
      %s35 = sphi 0, %s32
      %s36 = sphi 0, %s35
      %s52 = sphi 0, %s36
      %s56 = sphi 0, %s56
      %s58 = sphi 0, %s56
      %s59 = sphi 0, %s58
      %s73 = sphi 0, %s59
      %s77 = sphi 0, %s77
      %s79 = sphi 0, %s77
      %s80 = sphi 0, %s79
      %s94 = sphi 0, %s80
      %s98 = sphi 0, %s98
      %s100 = sphi 0, %s98
      %s101 = sphi 0, %s100
      %s115 = sphi 0, %s101
      %s119 = sphi 0, %s119
      %s121 = sphi 0, %s119
      %s122 = sphi 0, %s121
      %s136 = sphi 0, %s122
      %s140 = sphi 0, %s140
      %s142 = sphi 0, %s140
      %s143 = sphi 0, %s142
      %s157 = sphi 0, %s143
      %s161 = sphi 0, %s161
      %s163 = sphi 0, %s161
      %s164 = sphi 0, %s163
      %s178 = sphi 0, %s164
      %s182 = sphi 0, %s182
      %s184 = sphi 0, %s182
      %s185 = sphi 0, %s184
      %s199 = sphi 0, %s185
      %s203 = sphi 0, %s203
      %s205 = sphi 0, %s203
      %s206 = sphi 0, %s205
      %s220 = sphi 0, %s206
      %s224 = sphi 0, %s224
      %s226 = sphi 0, %s224
      %s227 = sphi 0, %s226
      %s241 = sphi 0, %s227
      %s245 = sphi 0, %s245
      %s247 = sphi 0, %s245
      %s248 = sphi 0, %s247
      %s262 = sphi 0, %s248
      %s266 = sphi 0, %s266
      %s268 = sphi 0, %s266
      %s269 = sphi 0, %s268
      %s283 = sphi 0, %s269
      %s287 = sphi 0, %s287
      %s289 = sphi 0, %s287
      %s290 = sphi 0, %s289
      %s304 = sphi 0, %s290
      %s310 = sphi 0, %s312
      %s313 = sphi 0, %s310
      %s314 = sphi 0, %s313
      %s330 = sphi 0, %s314
    $region4: #{tpu_custom_call.1} parent=1 // loop_header_branch
      %25 = sbr.rel (%p23) target = $region8
    $region5: #{tpu_custom_call.1} parent=1 // loop_body
      %s27 = ssub.s32 %s22, 1
      %s28 = ssub.s32 %s22, 2
      %s29 = sadd.s32 %s22, 1
      %s30 = ssub.s32 %s22, %s29
      %p31 = scmp.eq.s32.totalorder %s30, 0
      %s33 = sadd.s32 %s32, 1
      %s34 = scalar_select %p31, %s32, %s33
      %p37 = pneg %p31
      %p38 = scmp.eq.s32.totalorder %s22, 1
      %p39 = por %p37, %p38
      %p40 = scmp.ne.s32.totalorder %s32, %s35
      %p41 = scmp.eq.s32.totalorder %s22, 0
      %p42 = por %p40, %p41
      %p43 = scmp.ne.s32.totalorder %s32, %s35
      %p44 = scmp.eq.s32.totalorder %s27, 1
      %p45 = por %p43, %p44
      %p46 = scmp.ne.s32.totalorder %s35, %s36
      %p47 = scmp.eq.s32.totalorder %s27, 0
      %p48 = por %p46, %p47
      %p49 = scmp.ne.s32.totalorder %s35, %s36
      %p50 = scmp.eq.s32.totalorder %s28, 1
      %p51 = por %p49, %p50
      %p53 = scmp.ne.s32.totalorder %s36, %s52
      %p54 = scmp.eq.s32.totalorder %s28, 0
      %p55 = por %p53, %p54
      %s57 = sadd.s32 %s56, 1
      %p60 = scmp.eq.s32.totalorder %s22, 1
      %p61 = scmp.ne.s32.totalorder %s56, %s58
      %p62 = scmp.eq.s32.totalorder %s22, 0
      %p63 = por %p61, %p62
      %p64 = scmp.ne.s32.totalorder %s56, %s58
      %p65 = scmp.eq.s32.totalorder %s27, 1
      %p66 = por %p64, %p65
      %p67 = scmp.ne.s32.totalorder %s58, %s59
      %p68 = scmp.eq.s32.totalorder %s27, 0
      %p69 = por %p67, %p68
      %p70 = scmp.ne.s32.totalorder %s58, %s59
      %p71 = scmp.eq.s32.totalorder %s28, 1
      %p72 = por %p70, %p71
      %p74 = scmp.ne.s32.totalorder %s59, %s73
      %p75 = scmp.eq.s32.totalorder %s28, 0
      %p76 = por %p74, %p75
      %s78 = sadd.s32 %s77, 1
      %p81 = scmp.eq.s32.totalorder %s22, 1
      %p82 = scmp.ne.s32.totalorder %s77, %s79
      %p83 = scmp.eq.s32.totalorder %s22, 0
      %p84 = por %p82, %p83
      %p85 = scmp.ne.s32.totalorder %s77, %s79
      %p86 = scmp.eq.s32.totalorder %s27, 1
      %p87 = por %p85, %p86
      %p88 = scmp.ne.s32.totalorder %s79, %s80
      %p89 = scmp.eq.s32.totalorder %s27, 0
      %p90 = por %p88, %p89
      %p91 = scmp.ne.s32.totalorder %s79, %s80
      %p92 = scmp.eq.s32.totalorder %s28, 1
      %p93 = por %p91, %p92
      %p95 = scmp.ne.s32.totalorder %s80, %s94
      %p96 = scmp.eq.s32.totalorder %s28, 0
      %p97 = por %p95, %p96
      %s99 = sadd.s32 %s98, 1
      %p102 = scmp.eq.s32.totalorder %s22, 1
      %p103 = scmp.ne.s32.totalorder %s98, %s100
      %p104 = scmp.eq.s32.totalorder %s22, 0
      %p105 = por %p103, %p104
      %p106 = scmp.ne.s32.totalorder %s98, %s100
      %p107 = scmp.eq.s32.totalorder %s27, 1
      %p108 = por %p106, %p107
      %p109 = scmp.ne.s32.totalorder %s100, %s101
      %p110 = scmp.eq.s32.totalorder %s27, 0
      %p111 = por %p109, %p110
      %p112 = scmp.ne.s32.totalorder %s100, %s101
      %p113 = scmp.eq.s32.totalorder %s28, 1
      %p114 = por %p112, %p113
      %p116 = scmp.ne.s32.totalorder %s101, %s115
      %p117 = scmp.eq.s32.totalorder %s28, 0
      %p118 = por %p116, %p117
      %s120 = sadd.s32 %s119, 1
      %p123 = scmp.eq.s32.totalorder %s22, 1
      %p124 = scmp.ne.s32.totalorder %s119, %s121
      %p125 = scmp.eq.s32.totalorder %s22, 0
      %p126 = por %p124, %p125
      %p127 = scmp.ne.s32.totalorder %s119, %s121
      %p128 = scmp.eq.s32.totalorder %s27, 1
      %p129 = por %p127, %p128
      %p130 = scmp.ne.s32.totalorder %s121, %s122
      %p131 = scmp.eq.s32.totalorder %s27, 0
      %p132 = por %p130, %p131
      %p133 = scmp.ne.s32.totalorder %s121, %s122
      %p134 = scmp.eq.s32.totalorder %s28, 1
      %p135 = por %p133, %p134
      %p137 = scmp.ne.s32.totalorder %s122, %s136
      %p138 = scmp.eq.s32.totalorder %s28, 0
      %p139 = por %p137, %p138
      %s141 = sadd.s32 %s140, 1
      %p144 = scmp.eq.s32.totalorder %s22, 1
      %p145 = scmp.ne.s32.totalorder %s140, %s142
      %p146 = scmp.eq.s32.totalorder %s22, 0
      %p147 = por %p145, %p146
      %p148 = scmp.ne.s32.totalorder %s140, %s142
      %p149 = scmp.eq.s32.totalorder %s27, 1
      %p150 = por %p148, %p149
      %p151 = scmp.ne.s32.totalorder %s142, %s143
      %p152 = scmp.eq.s32.totalorder %s27, 0
      %p153 = por %p151, %p152
      %p154 = scmp.ne.s32.totalorder %s142, %s143
      %p155 = scmp.eq.s32.totalorder %s28, 1
      %p156 = por %p154, %p155
      %p158 = scmp.ne.s32.totalorder %s143, %s157
      %p159 = scmp.eq.s32.totalorder %s28, 0
      %p160 = por %p158, %p159
      %s162 = sadd.s32 %s161, 1
      %p165 = scmp.eq.s32.totalorder %s22, 1
      %p166 = scmp.ne.s32.totalorder %s161, %s163
      %p167 = scmp.eq.s32.totalorder %s22, 0
      %p168 = por %p166, %p167
      %p169 = scmp.ne.s32.totalorder %s161, %s163
      %p170 = scmp.eq.s32.totalorder %s27, 1
      %p171 = por %p169, %p170
      %p172 = scmp.ne.s32.totalorder %s163, %s164
      %p173 = scmp.eq.s32.totalorder %s27, 0
      %p174 = por %p172, %p173
      %p175 = scmp.ne.s32.totalorder %s163, %s164
      %p176 = scmp.eq.s32.totalorder %s28, 1
      %p177 = por %p175, %p176
      %p179 = scmp.ne.s32.totalorder %s164, %s178
      %p180 = scmp.eq.s32.totalorder %s28, 0
      %p181 = por %p179, %p180
      %s183 = sadd.s32 %s182, 1
      %p186 = scmp.eq.s32.totalorder %s22, 1
      %p187 = scmp.ne.s32.totalorder %s182, %s184
      %p188 = scmp.eq.s32.totalorder %s22, 0
      %p189 = por %p187, %p188
      %p190 = scmp.ne.s32.totalorder %s182, %s184
      %p191 = scmp.eq.s32.totalorder %s27, 1
      %p192 = por %p190, %p191
      %p193 = scmp.ne.s32.totalorder %s184, %s185
      %p194 = scmp.eq.s32.totalorder %s27, 0
      %p195 = por %p193, %p194
      %p196 = scmp.ne.s32.totalorder %s184, %s185
      %p197 = scmp.eq.s32.totalorder %s28, 1
      %p198 = por %p196, %p197
      %p200 = scmp.ne.s32.totalorder %s185, %s199
      %p201 = scmp.eq.s32.totalorder %s28, 0
      %p202 = por %p200, %p201
      %s204 = sadd.s32 %s203, 1
      %p207 = scmp.eq.s32.totalorder %s22, 1
      %p208 = scmp.ne.s32.totalorder %s203, %s205
      %p209 = scmp.eq.s32.totalorder %s22, 0
      %p210 = por %p208, %p209
      %p211 = scmp.ne.s32.totalorder %s203, %s205
      %p212 = scmp.eq.s32.totalorder %s27, 1
      %p213 = por %p211, %p212
      %p214 = scmp.ne.s32.totalorder %s205, %s206
      %p215 = scmp.eq.s32.totalorder %s27, 0
      %p216 = por %p214, %p215
      %p217 = scmp.ne.s32.totalorder %s205, %s206
      %p218 = scmp.eq.s32.totalorder %s28, 1
      %p219 = por %p217, %p218
      %p221 = scmp.ne.s32.totalorder %s206, %s220
      %p222 = scmp.eq.s32.totalorder %s28, 0
      %p223 = por %p221, %p222
      %s225 = sadd.s32 %s224, 1
      %p228 = scmp.eq.s32.totalorder %s22, 1
      %p229 = scmp.ne.s32.totalorder %s224, %s226
      %p230 = scmp.eq.s32.totalorder %s22, 0
      %p231 = por %p229, %p230
      %p232 = scmp.ne.s32.totalorder %s224, %s226
      %p233 = scmp.eq.s32.totalorder %s27, 1
      %p234 = por %p232, %p233
      %p235 = scmp.ne.s32.totalorder %s226, %s227
      %p236 = scmp.eq.s32.totalorder %s27, 0
      %p237 = por %p235, %p236
      %p238 = scmp.ne.s32.totalorder %s226, %s227
      %p239 = scmp.eq.s32.totalorder %s28, 1
      %p240 = por %p238, %p239
      %p242 = scmp.ne.s32.totalorder %s227, %s241
      %p243 = scmp.eq.s32.totalorder %s28, 0
      %p244 = por %p242, %p243
      %s246 = sadd.s32 %s245, 1
      %p249 = scmp.eq.s32.totalorder %s22, 1
      %p250 = scmp.ne.s32.totalorder %s245, %s247
      %p251 = scmp.eq.s32.totalorder %s22, 0
      %p252 = por %p250, %p251
      %p253 = scmp.ne.s32.totalorder %s245, %s247
      %p254 = scmp.eq.s32.totalorder %s27, 1
      %p255 = por %p253, %p254
      %p256 = scmp.ne.s32.totalorder %s247, %s248
      %p257 = scmp.eq.s32.totalorder %s27, 0
      %p258 = por %p256, %p257
      %p259 = scmp.ne.s32.totalorder %s247, %s248
      %p260 = scmp.eq.s32.totalorder %s28, 1
      %p261 = por %p259, %p260
      %p263 = scmp.ne.s32.totalorder %s248, %s262
      %p264 = scmp.eq.s32.totalorder %s28, 0
      %p265 = por %p263, %p264
      %s267 = sadd.s32 %s266, 1
      %p270 = scmp.eq.s32.totalorder %s22, 1
      %p271 = scmp.ne.s32.totalorder %s266, %s268
      %p272 = scmp.eq.s32.totalorder %s22, 0
      %p273 = por %p271, %p272
      %p274 = scmp.ne.s32.totalorder %s266, %s268
      %p275 = scmp.eq.s32.totalorder %s27, 1
      %p276 = por %p274, %p275
      %p277 = scmp.ne.s32.totalorder %s268, %s269
      %p278 = scmp.eq.s32.totalorder %s27, 0
      %p279 = por %p277, %p278
      %p280 = scmp.ne.s32.totalorder %s268, %s269
      %p281 = scmp.eq.s32.totalorder %s28, 1
      %p282 = por %p280, %p281
      %p284 = scmp.ne.s32.totalorder %s269, %s283
      %p285 = scmp.eq.s32.totalorder %s28, 0
      %p286 = por %p284, %p285
      %s288 = sadd.s32 %s287, 1
      %p291 = scmp.eq.s32.totalorder %s22, 1
      %p292 = scmp.ne.s32.totalorder %s287, %s289
      %p293 = scmp.eq.s32.totalorder %s22, 0
      %p294 = por %p292, %p293
      %p295 = scmp.ne.s32.totalorder %s287, %s289
      %p296 = scmp.eq.s32.totalorder %s27, 1
      %p297 = por %p295, %p296
      %p298 = scmp.ne.s32.totalorder %s289, %s290
      %p299 = scmp.eq.s32.totalorder %s27, 0
      %p300 = por %p298, %p299
      %p301 = scmp.ne.s32.totalorder %s289, %s290
      %p302 = scmp.eq.s32.totalorder %s28, 1
      %p303 = por %p301, %p302
      %p305 = scmp.ne.s32.totalorder %s290, %s304
      %p306 = scmp.eq.s32.totalorder %s28, 0
      %p307 = por %p305, %p306
      %s308 = ssub.s32 %s22, %s29
      %p309 = scmp.eq.s32.totalorder %s308, 0
      %s311 = sadd.s32 %s310, 1
      %s312 = scalar_select %p309, %s310, %s311
      %p315 = pneg %p309
      %p316 = scmp.eq.s32.totalorder %s22, 1
      %p317 = por %p315, %p316
      %p318 = scmp.ne.s32.totalorder %s310, %s313
      %p319 = scmp.eq.s32.totalorder %s22, 0
      %p320 = por %p318, %p319
      %p321 = scmp.ne.s32.totalorder %s310, %s313
      %p322 = scmp.eq.s32.totalorder %s27, 1
      %p323 = por %p321, %p322
      %p324 = scmp.ne.s32.totalorder %s313, %s314
      %p325 = scmp.eq.s32.totalorder %s27, 0
      %p326 = por %p324, %p325
      %p327 = scmp.ne.s32.totalorder %s313, %s314
      %p328 = scmp.eq.s32.totalorder %s28, 1
      %p329 = por %p327, %p328
      %p331 = scmp.ne.s32.totalorder %s314, %s330
      %p332 = scmp.eq.s32.totalorder %s28, 0
      %p333 = por %p331, %p332
      %p334 = scmp.le.s32.totalorder 1, %s22
      %p335 = scmp.lt.s32.totalorder %s22, 3
      %p336 = pnand %p334, %p335
      %p337 = pneg %p336
      // Predicated region
      $region9: #{tpu_custom_call.1} parent=5 // pred_check
        _
      $region10: #{tpu_custom_call.1} parent=5 // pred_check_branch
        %339 = sbr.rel (%p336) target = $region12
      $region11: #{tpu_custom_call.1} parent=5 // pred_region
        %s340 = ssub.s32 %s22, 1
        // Predicated region
        $region13: #{tpu_custom_call.1} parent=11 // pred_check
          %p341 = pneg %p69
        $region14: #{tpu_custom_call.1} parent=11 // pred_check_branch
          %343 = sbr.rel (%p341) target = $region16
        $region15: #{tpu_custom_call.1} parent=11 // pred_region
          _
        $region16: #{tpu_custom_call.1} parent=11 // pred_fallthru
          _
        // Predicated region
        $region17: #{tpu_custom_call.1} parent=11 // pred_check
          %p344 = pneg %p90
        $region18: #{tpu_custom_call.1} parent=11 // pred_check_branch
          %346 = sbr.rel (%p344) target = $region20
        $region19: #{tpu_custom_call.1} parent=11 // pred_region
          _
        $region20: #{tpu_custom_call.1} parent=11 // pred_fallthru
          _
        // Predicated region
        $region21: #{tpu_custom_call.1} parent=11 // pred_check
          %p347 = pneg %p111
        $region22: #{tpu_custom_call.1} parent=11 // pred_check_branch
          %349 = sbr.rel (%p347) target = $region24
        $region23: #{tpu_custom_call.1} parent=11 // pred_region
          _
        $region24: #{tpu_custom_call.1} parent=11 // pred_fallthru
          _
        // Predicated region
        $region25: #{tpu_custom_call.1} parent=11 // pred_check
          %p350 = pneg %p132
        $region26: #{tpu_custom_call.1} parent=11 // pred_check_branch
          %352 = sbr.rel (%p350) target = $region28
        $region27: #{tpu_custom_call.1} parent=11 // pred_region
          _
        $region28: #{tpu_custom_call.1} parent=11 // pred_fallthru
          _
        // Predicated region
        $region29: #{tpu_custom_call.1} parent=11 // pred_check
          %p353 = pneg %p153
        $region30: #{tpu_custom_call.1} parent=11 // pred_check_branch
          %355 = sbr.rel (%p353) target = $region32
        $region31: #{tpu_custom_call.1} parent=11 // pred_region
          _
        $region32: #{tpu_custom_call.1} parent=11 // pred_fallthru
          _
        // Predicated region
        $region33: #{tpu_custom_call.1} parent=11 // pred_check
          %p356 = pneg %p174
        $region34: #{tpu_custom_call.1} parent=11 // pred_check_branch
          %358 = sbr.rel (%p356) target = $region36
        $region35: #{tpu_custom_call.1} parent=11 // pred_region
          _
        $region36: #{tpu_custom_call.1} parent=11 // pred_fallthru
          _
        // Predicated region
        $region37: #{tpu_custom_call.1} parent=11 // pred_check
          %p359 = pneg %p195
        $region38: #{tpu_custom_call.1} parent=11 // pred_check_branch
          %361 = sbr.rel (%p359) target = $region40
        $region39: #{tpu_custom_call.1} parent=11 // pred_region
          _
        $region40: #{tpu_custom_call.1} parent=11 // pred_fallthru
          _
        // Predicated region
        $region41: #{tpu_custom_call.1} parent=11 // pred_check
          %p362 = pneg %p216
        $region42: #{tpu_custom_call.1} parent=11 // pred_check_branch
          %364 = sbr.rel (%p362) target = $region44
        $region43: #{tpu_custom_call.1} parent=11 // pred_region
          _
        $region44: #{tpu_custom_call.1} parent=11 // pred_fallthru
          _
        // Predicated region
        $region45: #{tpu_custom_call.1} parent=11 // pred_check
          %p365 = pneg %p237
        $region46: #{tpu_custom_call.1} parent=11 // pred_check_branch
          %367 = sbr.rel (%p365) target = $region48
        $region47: #{tpu_custom_call.1} parent=11 // pred_region
          _
        $region48: #{tpu_custom_call.1} parent=11 // pred_fallthru
          _
        // Predicated region
        $region49: #{tpu_custom_call.1} parent=11 // pred_check
          %p368 = pneg %p258
        $region50: #{tpu_custom_call.1} parent=11 // pred_check_branch
          %370 = sbr.rel (%p368) target = $region52
        $region51: #{tpu_custom_call.1} parent=11 // pred_region
          _
        $region52: #{tpu_custom_call.1} parent=11 // pred_fallthru
          _
        // Predicated region
        $region53: #{tpu_custom_call.1} parent=11 // pred_check
          %p371 = pneg %p279
        $region54: #{tpu_custom_call.1} parent=11 // pred_check_branch
          %373 = sbr.rel (%p371) target = $region56
        $region55: #{tpu_custom_call.1} parent=11 // pred_region
          _
        $region56: #{tpu_custom_call.1} parent=11 // pred_fallthru
          _
        // Predicated region
        $region57: #{tpu_custom_call.1} parent=11 // pred_check
          %p374 = pneg %p300
        $region58: #{tpu_custom_call.1} parent=11 // pred_check_branch
          %376 = sbr.rel (%p374) target = $region60
        $region59: #{tpu_custom_call.1} parent=11 // pred_region
          _
        $region60: #{tpu_custom_call.1} parent=11 // pred_fallthru
          _
      $region12: #{tpu_custom_call.1} parent=5 // pred_fallthru
        _
      %p377 = scmp.lt.s32.totalorder %s22, 2
      // Predicated region
      $region61: #{tpu_custom_call.1} parent=5 // pred_check
        %p378 = pneg %p377
      $region62: #{tpu_custom_call.1} parent=5 // pred_check_branch
        %380 = sbr.rel (%p378) target = $region64
      $region63: #{tpu_custom_call.1} parent=5 // pred_region
        // Predicated region
        $region65: #{tpu_custom_call.1} parent=63 // pred_check
          %p381 = pneg %p42
        $region66: #{tpu_custom_call.1} parent=63 // pred_check_branch
          %383 = sbr.rel (%p381) target = $region68
        $region67: #{tpu_custom_call.1} parent=63 // pred_region
          %p384 = scmp.lt.s32.totalorder %s22, 1
          %s385 = scalar_select %p384, %s22, 1
          %s386 = smul.addr %s385, 8
          %s387 = scalar_lea.vmem %s0, %s386
        $region68: #{tpu_custom_call.1} parent=63 // pred_fallthru
          _
      $region64: #{tpu_custom_call.1} parent=5 // pred_fallthru
        _
      %p388 = scmp.le.s32.totalorder 1, %s22
      %p389 = scmp.lt.s32.totalorder %s22, 3
      %p390 = pnand %p388, %p389
      %p391 = pneg %p390
      // Predicated region
      $region69: #{tpu_custom_call.1} parent=5 // pred_check
        _
      $region70: #{tpu_custom_call.1} parent=5 // pred_check_branch
        %393 = sbr.rel (%p390) target = $region72
      $region71: #{tpu_custom_call.1} parent=5 // pred_region
        %s394 = ssub.s32 %s22, 1
        %p395 = scmp.lt.s32.totalorder %s27, 1
        %s396 = scalar_select %p395, %s27, 1
        %s397 = smul.addr %s396, 8
        %s398 = scalar_lea.vmem %s0, %s397
        %p399 = pneg %p48
        %p400 = pneg %p45
        %p401 = pneg %p69
        %p402 = pneg %p66
        %p403 = pneg %p90
        %p404 = pneg %p87
        %p405 = pneg %p111
        %p406 = pneg %p108
        %p407 = pneg %p132
        %p408 = pneg %p129
        %p409 = pneg %p153
        %p410 = pneg %p150
        %p411 = pneg %p174
        %p412 = pneg %p171
        %p413 = pneg %p195
        %p414 = pneg %p192
        %p415 = pneg %p216
        %p416 = pneg %p213
        %p417 = pneg %p237
        %p418 = pneg %p234
        %p419 = pneg %p258
        %p420 = pneg %p255
        %p421 = pneg %p279
        %p422 = pneg %p276
        %p423 = pneg %p300
        %p424 = pneg %p297
        %p425 = pneg %p326
        %p426 = pneg %p323
        %s427 = sand.u32 %s313, 1
        %s428 = scalar_lea.sflag [#allocation3], %s427
        %s429 = sand.u32 %s313, 1
        %s430 = smul.addr %s429, 8
        %s431 = scalar_lea.vmem [#allocation2], %s430
        %p432 = scmp.lt.s32.totalorder %s27, 1
        %s433 = scalar_select %p432, %s27, 1
        %s434 = smul.addr %s433, 8
        %s435 = scalar_lea.vmem %s0, %s434
        %v437 = vld [vmem:[%s435] sm:$0xff]
        %v438 = vld [vmem:[%s1] sm:$0x1]
        %v439 = vld [vmem:[%s2] sm:$0x1]
        %vm440 = vcmask 261120
        %v441 = vsel %vm440, %v437, 0.0
        %442 = vadd.xlane.f32.xlu0 %v441
        %v443 = vpop.xlane.xlu0 %442
        %v444 = vrcp.pop 32.0
        %v445 = vmul.f32 32.0, %v444
        %v446 = vsub.f32 1.0, %v445
        %v447 = vmul.f32 %v444, %v446
        %v448 = vadd.f32 %v444, %v447
        %vm449 = vweird.f32 %v444
        %v450 = vsel %vm449, %v444, %v448
        %v451 = vmul.f32 %v443, %v450
        %v452 = vsub.f32 %v437, %v451
        %v453 = vmul.f32 %v452, %v452
        %v454 = vsel %vm440, %v453, 0.0
        %455 = vadd.xlane.f32.xlu0 %v454
        %v456 = vpop.xlane.xlu0 %455
        %v457 = vmul.f32 %v456, %v450
        %v458 = vadd.f32 %v457, 1e-05
        %v459 = vrsqrt.pop %v458
        %v460 = vmul.f32 %v459, %v458
        %v461 = vmul.f32 %v460, %v459
        %v462 = vmul.f32 0.5, %v461
        %v463 = vsub.f32 1.5, %v462
        %v464 = vmul.f32 %v459, %v463
        %vm465 = vweird.f32 %v458
        %vm466 = vweird.f32 %v459
        %vm467 = vmor %vm465, %vm466
        %v468 = vsel %vm467, %v459, %v464
        %v469 = vmul.f32 %v452, %v468
        %v471 = vperm.slane %v438, 0
        %v473 = vmul.f32 %v469, %v471
        %v475 = vperm.slane %v439, 0
        %v477 = vadd.f32 %v473, %v475
        %v478 = vpack.c.bf16 %v477, %v477
        %v479 = vld [vmem:[%s3] sm:$0xf]
        %v480 = vld [vmem:[%s3 + $0x4] sm:$0xf]
        %v481 = vld [vmem:[%s3 + $0x8] sm:$0xf]
        %v482 = vld [vmem:[%s3 + $0xc] sm:$0xf]
        %v483 = vld [vmem:[%s4] sm:$0x1]
        %v485 = vperm.slane %v483, 0
        %v491 = vunpack.c.l.b16 %v479
        %v492 = vunpack.c.l.b16 %v480
        %v493 = vunpack.c.l.b16 %v481
        %v494 = vunpack.c.l.b16 %v482
        %v495 = vpack.c.b16 %v492, %v491
        %v496 = vpack.c.b16 %v494, %v493
        %v500 = vsel %vm440, %v478, 0
        %502 = vmatpush.bf16.msra.mxu0 0
        %503 = vmatpush.bf16.msra.mxu0 0
        %504 = vmatpush.bf16.msra.mxu0 0
        %505 = vmatpush.bf16.msra.mxu0 0
        %506 = vmatpush.bf16.msra.mxu0 0
        %507 = vmatpush.bf16.msra.mxu0 0
        %508 = vmatpush.bf16.msra.mxu0 %v496
        %509 = vmatpush.bf16.msra.mxu0 %v495
        %510 = vmatmul.bf16.gmra.mxu0 %v500
        %v511 = vpop.f32.mrf.mxu0
        %v512 = vadd.f32 %v485, %v511
        %v513 = vpop.f32.mrf.mxu0
        %514 = vdwg.mxu0
        %v515 = vld [vmem:[%s6] sm:$0x1]
        %v517 = vperm.slane %v515, 0
        %v519 = vadd.f32 %v437, %v517
        %v520 = vpack.c.bf16 %v512, %v512
        %v522 = vunpack.c.l.b16 %v520
        %v523 = vpack.c.b16 %v522, %v522
        %524 = vrot.lane.b32.xlu0 %v523, 96
        %v525 = vpop.permute.xlu0 %524
        %vm526 = vcmask 64512
        %v528 = vsel %vm526, %v520, 0
        %v531 = vsel %vm526, %v525, 0
        %533 = vmatpush.bf16.xpose.msra.mxu0 0
        %534 = vmatpush.bf16.xpose.msra.mxu0 0
        %535 = vmatpush.bf16.xpose.msra.mxu0 0
        %536 = vmatpush.bf16.xpose.msra.mxu0 0
        %537 = vmatpush.bf16.xpose.msra.mxu0 0
        %538 = vmatpush.bf16.xpose.msra.mxu0 0
        %539 = vmatpush.bf16.xpose.msra.mxu0 0
        %540 = vmatpush.bf16.xpose.msra.mxu0 %v531
        %541 = vmatmul.bf16.gmra.mxu0 %v528
        %v542 = vpop.f32.mrf.mxu0
        %v543 = vadd.f32 0.0, %v542
        %v544 = vpop.f32.mrf.mxu0
        %545 = vdwg.mxu0
        %v546 = vsel %vm526, %v543, -inf
        %547 = vmax.xlane.f32.xlu0 %v546
        %v548 = vpop.xlane.xlu0 %547
        %v549 = vsub.f32 %v543, %v548
        %v550 = vmul.f32 %v549, 1.442695
        %v551 = vpow.pop %v550
        %v552 = vsel %vm526, %v551, 0.0
        %553 = vadd.xlane.f32.xlu0 %v552
        %v554 = vpop.xlane.xlu0 %553
        %v555 = vrcp.pop %v554
        %v556 = vpack.c.bf16 %v551, %v551
        %557 = vrot.lane.b32.xlu0 %v523, 64
        %v558 = vpop.permute.xlu0 %557
        %v560 = vsel %vm526, %v556, 0
        %vm562 = vcmask 1043456
        %v564 = vsel %vm562, %v558, 0
        %566 = vmatpush.bf16.msra.mxu0 0
        %567 = vmatpush.bf16.msra.mxu0 0
        %568 = vmatpush.bf16.msra.mxu0 0
        %569 = vmatpush.bf16.msra.mxu0 0
        %570 = vmatpush.bf16.msra.mxu0 0
        %571 = vmatpush.bf16.msra.mxu0 0
        %572 = vmatpush.bf16.msra.mxu0 0
        %573 = vmatpush.bf16.msra.mxu0 %v564
        %574 = vmatmul.bf16.gmra.mxu0 %v560
        %v575 = vpop.f32.mrf.mxu0
        %v576 = vadd.f32 0.0, %v575
        %v577 = vpop.f32.mrf.mxu0
        %578 = vdwg.mxu0
        %v579 = vmul.f32 %v576, %v555
        %v580 = vpack.c.bf16 %v579, %v579
        %v581 = vld [vmem:[%s5] sm:$0xf]
        %v583 = vsel %vm526, %v580, 0
        %v586 = vsel %vm562, %v581, 0
        %588 = vmatpush.bf16.msra.mxu0 0
        %589 = vmatpush.bf16.msra.mxu0 0
        %590 = vmatpush.bf16.msra.mxu0 0
        %591 = vmatpush.bf16.msra.mxu0 0
        %592 = vmatpush.bf16.msra.mxu0 0
        %593 = vmatpush.bf16.msra.mxu0 0
        %594 = vmatpush.bf16.msra.mxu0 0
        %595 = vmatpush.bf16.msra.mxu0 %v586
        %596 = vmatmul.bf16.gmra.mxu0 %v583
        %v597 = vpop.f32.mrf.mxu0
        %v598 = vadd.f32 0.0, %v597
        %v599 = vpop.f32.mrf.mxu0
        %600 = vdwg.mxu0
        %v601 = vadd.f32 %v519, %v598
        %602 = vrot.lane.b32.xlu0 %v523, 120
        %v603 = vpop.permute.xlu0 %602
        %604 = vrot.lane.b32.xlu0 %v523, 88
        %v605 = vpop.permute.xlu0 %604
        %v607 = vsel %vm526, %v603, 0
        %v610 = vsel %vm526, %v605, 0
        %612 = vmatpush.bf16.xpose.msra.mxu0 0
        %613 = vmatpush.bf16.xpose.msra.mxu0 0
        %614 = vmatpush.bf16.xpose.msra.mxu0 0
        %615 = vmatpush.bf16.xpose.msra.mxu0 0
        %616 = vmatpush.bf16.xpose.msra.mxu0 0
        %617 = vmatpush.bf16.xpose.msra.mxu0 0
        %618 = vmatpush.bf16.xpose.msra.mxu0 0
        %619 = vmatpush.bf16.xpose.msra.mxu0 %v610
        %620 = vmatmul.bf16.gmra.mxu0 %v607
        %v621 = vpop.f32.mrf.mxu0
        %v622 = vadd.f32 0.0, %v621
        %v623 = vpop.f32.mrf.mxu0
        %624 = vdwg.mxu0
        %v625 = vsel %vm526, %v622, -inf
        %626 = vmax.xlane.f32.xlu0 %v625
        %v627 = vpop.xlane.xlu0 %626
        %v628 = vsub.f32 %v622, %v627
        %v629 = vmul.f32 %v628, 1.442695
        %v630 = vpow.pop %v629
        %v631 = vsel %vm526, %v630, 0.0
        %632 = vadd.xlane.f32.xlu0 %v631
        %v633 = vpop.xlane.xlu0 %632
        %v634 = vrcp.pop %v633
        %v635 = vpack.c.bf16 %v630, %v630
        %636 = vrot.lane.b32.xlu0 %v523, 56
        %v637 = vpop.permute.xlu0 %636
        %v639 = vsel %vm526, %v635, 0
        %v642 = vsel %vm562, %v637, 0
        %644 = vmatpush.bf16.msra.mxu0 0
        %645 = vmatpush.bf16.msra.mxu0 0
        %646 = vmatpush.bf16.msra.mxu0 0
        %647 = vmatpush.bf16.msra.mxu0 0
        %648 = vmatpush.bf16.msra.mxu0 0
        %649 = vmatpush.bf16.msra.mxu0 0
        %650 = vmatpush.bf16.msra.mxu0 0
        %651 = vmatpush.bf16.msra.mxu0 %v642
        %652 = vmatmul.bf16.gmra.mxu0 %v639
        %v653 = vpop.f32.mrf.mxu0
        %v654 = vadd.f32 0.0, %v653
        %v655 = vpop.f32.mrf.mxu0
        %656 = vdwg.mxu0
        %v657 = vmul.f32 %v654, %v634
        %v658 = vpack.c.bf16 %v657, %v657
        %v659 = vld [vmem:[%s5 + $0x4] sm:$0xf]
        %v661 = vsel %vm526, %v658, 0
        %v664 = vsel %vm562, %v659, 0
        %666 = vmatpush.bf16.msra.mxu0 0
        %667 = vmatpush.bf16.msra.mxu0 0
        %668 = vmatpush.bf16.msra.mxu0 0
        %669 = vmatpush.bf16.msra.mxu0 0
        %670 = vmatpush.bf16.msra.mxu0 0
        %671 = vmatpush.bf16.msra.mxu0 0
        %672 = vmatpush.bf16.msra.mxu0 0
        %673 = vmatpush.bf16.msra.mxu0 %v664
        %674 = vmatmul.bf16.gmra.mxu0 %v661
        %v675 = vpop.f32.mrf.mxu0
        %v676 = vadd.f32 0.0, %v675
        %v677 = vpop.f32.mrf.mxu0
        %678 = vdwg.mxu0
        %v679 = vadd.f32 %v601, %v676
        %680 = vrot.lane.b32.xlu0 %v523, 112
        %v681 = vpop.permute.xlu0 %680
        %682 = vrot.lane.b32.xlu0 %v523, 80
        %v683 = vpop.permute.xlu0 %682
        %v685 = vsel %vm526, %v681, 0
        %v688 = vsel %vm526, %v683, 0
        %690 = vmatpush.bf16.xpose.msra.mxu0 0
        %691 = vmatpush.bf16.xpose.msra.mxu0 0
        %692 = vmatpush.bf16.xpose.msra.mxu0 0
        %693 = vmatpush.bf16.xpose.msra.mxu0 0
        %694 = vmatpush.bf16.xpose.msra.mxu0 0
        %695 = vmatpush.bf16.xpose.msra.mxu0 0
        %696 = vmatpush.bf16.xpose.msra.mxu0 0
        %697 = vmatpush.bf16.xpose.msra.mxu0 %v688
        %698 = vmatmul.bf16.gmra.mxu0 %v685
        %v699 = vpop.f32.mrf.mxu0
        %v700 = vadd.f32 0.0, %v699
        %v701 = vpop.f32.mrf.mxu0
        %702 = vdwg.mxu0
        %v703 = vsel %vm526, %v700, -inf
        %704 = vmax.xlane.f32.xlu0 %v703
        %v705 = vpop.xlane.xlu0 %704
        %v706 = vsub.f32 %v700, %v705
        %v707 = vmul.f32 %v706, 1.442695
        %v708 = vpow.pop %v707
        %v709 = vsel %vm526, %v708, 0.0
        %710 = vadd.xlane.f32.xlu0 %v709
        %v711 = vpop.xlane.xlu0 %710
        %v712 = vrcp.pop %v711
        %v713 = vpack.c.bf16 %v708, %v708
        %714 = vrot.lane.b32.xlu0 %v523, 48
        %v715 = vpop.permute.xlu0 %714
        %v717 = vsel %vm526, %v713, 0
        %v720 = vsel %vm562, %v715, 0
        %722 = vmatpush.bf16.msra.mxu0 0
        %723 = vmatpush.bf16.msra.mxu0 0
        %724 = vmatpush.bf16.msra.mxu0 0
        %725 = vmatpush.bf16.msra.mxu0 0
        %726 = vmatpush.bf16.msra.mxu0 0
        %727 = vmatpush.bf16.msra.mxu0 0
        %728 = vmatpush.bf16.msra.mxu0 0
        %729 = vmatpush.bf16.msra.mxu0 %v720
        %730 = vmatmul.bf16.gmra.mxu0 %v717
        %v731 = vpop.f32.mrf.mxu0
        %v732 = vadd.f32 0.0, %v731
        %v733 = vpop.f32.mrf.mxu0
        %734 = vdwg.mxu0
        %v735 = vmul.f32 %v732, %v712
        %v736 = vpack.c.bf16 %v735, %v735
        %v737 = vld [vmem:[%s5 + $0x8] sm:$0xf]
        %v739 = vsel %vm526, %v736, 0
        %v742 = vsel %vm562, %v737, 0
        %744 = vmatpush.bf16.msra.mxu0 0
        %745 = vmatpush.bf16.msra.mxu0 0
        %746 = vmatpush.bf16.msra.mxu0 0
        %747 = vmatpush.bf16.msra.mxu0 0
        %748 = vmatpush.bf16.msra.mxu0 0
        %749 = vmatpush.bf16.msra.mxu0 0
        %750 = vmatpush.bf16.msra.mxu0 0
        %751 = vmatpush.bf16.msra.mxu0 %v742
        %752 = vmatmul.bf16.gmra.mxu0 %v739
        %v753 = vpop.f32.mrf.mxu0
        %v754 = vadd.f32 0.0, %v753
        %v755 = vpop.f32.mrf.mxu0
        %756 = vdwg.mxu0
        %v757 = vadd.f32 %v679, %v754
        %758 = vrot.lane.b32.xlu0 %v523, 104
        %v759 = vpop.permute.xlu0 %758
        %760 = vrot.lane.b32.xlu0 %v523, 72
        %v761 = vpop.permute.xlu0 %760
        %v763 = vsel %vm526, %v759, 0
        %v766 = vsel %vm526, %v761, 0
        %768 = vmatpush.bf16.xpose.msra.mxu0 0
        %769 = vmatpush.bf16.xpose.msra.mxu0 0
        %770 = vmatpush.bf16.xpose.msra.mxu0 0
        %771 = vmatpush.bf16.xpose.msra.mxu0 0
        %772 = vmatpush.bf16.xpose.msra.mxu0 0
        %773 = vmatpush.bf16.xpose.msra.mxu0 0
        %774 = vmatpush.bf16.xpose.msra.mxu0 0
        %775 = vmatpush.bf16.xpose.msra.mxu0 %v766
        %776 = vmatmul.bf16.gmra.mxu0 %v763
        %v777 = vpop.f32.mrf.mxu0
        %v778 = vadd.f32 0.0, %v777
        %v779 = vpop.f32.mrf.mxu0
        %780 = vdwg.mxu0
        %v781 = vsel %vm526, %v778, -inf
        %782 = vmax.xlane.f32.xlu0 %v781
        %v783 = vpop.xlane.xlu0 %782
        %v784 = vsub.f32 %v778, %v783
        %v785 = vmul.f32 %v784, 1.442695
        %v786 = vpow.pop %v785
        %v787 = vsel %vm526, %v786, 0.0
        %788 = vadd.xlane.f32.xlu0 %v787
        %v789 = vpop.xlane.xlu0 %788
        %v790 = vrcp.pop %v789
        %v791 = vpack.c.bf16 %v786, %v786
        %792 = vrot.lane.b32.xlu0 %v523, 40
        %v793 = vpop.permute.xlu0 %792
        %v795 = vsel %vm526, %v791, 0
        %v798 = vsel %vm562, %v793, 0
        %800 = vmatpush.bf16.msra.mxu0 0
        %801 = vmatpush.bf16.msra.mxu0 0
        %802 = vmatpush.bf16.msra.mxu0 0
        %803 = vmatpush.bf16.msra.mxu0 0
        %804 = vmatpush.bf16.msra.mxu0 0
        %805 = vmatpush.bf16.msra.mxu0 0
        %806 = vmatpush.bf16.msra.mxu0 0
        %807 = vmatpush.bf16.msra.mxu0 %v798
        %808 = vmatmul.bf16.gmra.mxu0 %v795
        %v809 = vpop.f32.mrf.mxu0
        %v810 = vadd.f32 0.0, %v809
        %v811 = vpop.f32.mrf.mxu0
        %812 = vdwg.mxu0
        %v813 = vmul.f32 %v810, %v790
        %v814 = vpack.c.bf16 %v813, %v813
        %v815 = vld [vmem:[%s5 + $0xc] sm:$0xf]
        %v817 = vsel %vm526, %v814, 0
        %v820 = vsel %vm562, %v815, 0
        %822 = vmatpush.bf16.msra.mxu0 0
        %823 = vmatpush.bf16.msra.mxu0 0
        %824 = vmatpush.bf16.msra.mxu0 0
        %825 = vmatpush.bf16.msra.mxu0 0
        %826 = vmatpush.bf16.msra.mxu0 0
        %827 = vmatpush.bf16.msra.mxu0 0
        %828 = vmatpush.bf16.msra.mxu0 0
        %829 = vmatpush.bf16.msra.mxu0 %v820
        %830 = vmatmul.bf16.gmra.mxu0 %v817
        %v831 = vpop.f32.mrf.mxu0
        %v832 = vadd.f32 0.0, %v831
        %v833 = vpop.f32.mrf.mxu0
        %834 = vdwg.mxu0
        %v835 = vadd.f32 %v757, %v832
        %v836 = vld [vmem:[%s7] sm:$0x1]
        %v837 = vld [vmem:[%s8] sm:$0x1]
        %v838 = vsel %vm440, %v835, 0.0
        %839 = vadd.xlane.f32.xlu0 %v838
        %v840 = vpop.xlane.xlu0 %839
        %v841 = vmul.f32 %v840, %v450
        %v842 = vsub.f32 %v835, %v841
        %v843 = vmul.f32 %v842, %v842
        %v844 = vsel %vm440, %v843, 0.0
        %845 = vadd.xlane.f32.xlu0 %v844
        %v846 = vpop.xlane.xlu0 %845
        %v847 = vmul.f32 %v846, %v450
        %v848 = vadd.f32 %v847, 1e-05
        %v849 = vrsqrt.pop %v848
        %v850 = vmul.f32 %v849, %v848
        %v851 = vmul.f32 %v850, %v849
        %v852 = vmul.f32 0.5, %v851
        %v853 = vsub.f32 1.5, %v852
        %v854 = vmul.f32 %v849, %v853
        %vm855 = vweird.f32 %v848
        %vm856 = vweird.f32 %v849
        %vm857 = vmor %vm855, %vm856
        %v858 = vsel %vm857, %v849, %v854
        %v859 = vmul.f32 %v842, %v858
        %v861 = vperm.slane %v836, 0
        %v863 = vmul.f32 %v859, %v861
        %v865 = vperm.slane %v837, 0
        %v867 = vadd.f32 %v863, %v865
        %v868 = vpack.c.bf16 %v867, %v867
        %v869 = vld [vmem:[%s9] sm:$0xf]
        %v870 = vld [vmem:[%s9 + $0x4] sm:$0xf]
        %v871 = vld [vmem:[%s9 + $0x8] sm:$0xf]
        %v872 = vld [vmem:[%s9 + $0xc] sm:$0xf]
        %v873 = vld [vmem:[%s10] sm:$0x1]
        %v875 = vperm.slane %v873, 0
        %v881 = vunpack.c.l.b16 %v869
        %v882 = vunpack.c.l.b16 %v870
        %v883 = vunpack.c.l.b16 %v871
        %v884 = vunpack.c.l.b16 %v872
        %v885 = vpack.c.b16 %v882, %v881
        %v886 = vpack.c.b16 %v884, %v883
        %v890 = vsel %vm440, %v868, 0
        %892 = vmatpush.bf16.msra.mxu0 0
        %893 = vmatpush.bf16.msra.mxu0 0
        %894 = vmatpush.bf16.msra.mxu0 0
        %895 = vmatpush.bf16.msra.mxu0 0
        %896 = vmatpush.bf16.msra.mxu0 0
        %897 = vmatpush.bf16.msra.mxu0 0
        %898 = vmatpush.bf16.msra.mxu0 %v886
        %899 = vmatpush.bf16.msra.mxu0 %v885
        %900 = vmatmul.bf16.gmra.mxu0 %v890
        %v901 = vpop.f32.mrf.mxu0
        %v902 = vadd.f32 %v875, %v901
        %v903 = vpop.f32.mrf.mxu0
        %904 = vdwg.mxu0
        %v905 = vmul.f32 %v902, 1.702
        %v906 = vxor.u32 %v905, 2147483648
        %v907 = vmul.f32 %v906, 1.442695
        %v908 = vpow.pop %v907
        %v909 = vadd.f32 %v908, 1.0
        %v910 = vrcp.pop %v909
        %v911 = vmul.f32 %v909, %v910
        %v912 = vsub.f32 1.0, %v911
        %v913 = vmul.f32 %v910, %v912
        %v914 = vadd.f32 %v910, %v913
        %vm915 = vweird.f32 %v909
        %vm916 = vweird.f32 %v910
        %vm917 = vmor %vm915, %vm916
        %v918 = vsel %vm917, %v910, %v914
        %v919 = vand.u32 2147483647, %v909
        %vm920 = vcmp.eq.f32.partialorder %v919, 8.507059e+37
        %v921 = vand.u32 %v909, 2147483648
        %v922 = vor.u32 1.1754944e-38, %v921
        %v923 = vsel %vm920, %v922, %v918
        %v924 = vmul.f32 1.0, %v923
        %v925 = vmul.f32 %v902, %v924
        %v926 = vpack.c.bf16 %v925, %v925
        %v927 = vld [vmem:[%s11] sm:$0xf]
        %v928 = vld [vmem:[%s11 + $0x4] sm:$0xf]
        %v929 = vld [vmem:[%s11 + $0x8] sm:$0xf]
        %v930 = vld [vmem:[%s11 + $0xc] sm:$0xf]
        %v931 = vld [vmem:[%s11 + $0x10] sm:$0xf]
        %v932 = vld [vmem:[%s11 + $0x14] sm:$0xf]
        %v933 = vld [vmem:[%s11 + $0x18] sm:$0xf]
        %v934 = vld [vmem:[%s11 + $0x1c] sm:$0xf]
        %v935 = vld [vmem:[%s11 + $0x20] sm:$0xf]
        %v936 = vld [vmem:[%s11 + $0x24] sm:$0xf]
        %v937 = vld [vmem:[%s11 + $0x28] sm:$0xf]
        %v938 = vld [vmem:[%s11 + $0x2c] sm:$0xf]
        %v939 = vld [vmem:[%s11 + $0x30] sm:$0xf]
        %v940 = vld [vmem:[%s11 + $0x34] sm:$0xf]
        %v941 = vld [vmem:[%s11 + $0x38] sm:$0xf]
        %v942 = vld [vmem:[%s11 + $0x3c] sm:$0xf]
        %v943 = vld [vmem:[%s12] sm:$0x1]
        %v945 = vperm.slane %v943, 0
        %v963 = vunpack.c.l.b16 %v927
        %v964 = vunpack.c.l.b16 %v928
        %v965 = vunpack.c.l.b16 %v929
        %v966 = vunpack.c.l.b16 %v930
        %v967 = vunpack.c.l.b16 %v931
        %v968 = vunpack.c.l.b16 %v932
        %v969 = vunpack.c.l.b16 %v933
        %v970 = vunpack.c.l.b16 %v934
        %v971 = vunpack.c.l.b16 %v935
        %v972 = vunpack.c.l.b16 %v936
        %v973 = vunpack.c.l.b16 %v937
        %v974 = vunpack.c.l.b16 %v938
        %v975 = vunpack.c.l.b16 %v939
        %v976 = vunpack.c.l.b16 %v940
        %v977 = vunpack.c.l.b16 %v941
        %v978 = vunpack.c.l.b16 %v942
        %v979 = vpack.c.b16 %v964, %v963
        %v980 = vpack.c.b16 %v966, %v965
        %v981 = vpack.c.b16 %v968, %v967
        %v982 = vpack.c.b16 %v970, %v969
        %v983 = vpack.c.b16 %v972, %v971
        %v984 = vpack.c.b16 %v974, %v973
        %v985 = vpack.c.b16 %v976, %v975
        %v986 = vpack.c.b16 %v978, %v977
        %995 = vmatpush.bf16.msra.mxu0 %v986
        %996 = vmatpush.bf16.msra.mxu0 %v985
        %997 = vmatpush.bf16.msra.mxu0 %v984
        %998 = vmatpush.bf16.msra.mxu0 %v983
        %999 = vmatpush.bf16.msra.mxu0 %v982
        %1000 = vmatpush.bf16.msra.mxu0 %v981
        %1001 = vmatpush.bf16.msra.mxu0 %v980
        %1002 = vmatpush.bf16.msra.mxu0 %v979
        %1003 = vmatmul.bf16.gmra.mxu0 %v926
        %v1004 = vpop.f32.mrf.mxu0
        %v1005 = vadd.f32 %v945, %v1004
        %v1006 = vpop.f32.mrf.mxu0
        %1007 = vdwg.mxu0
        %v1008 = vadd.f32 %v835, %v1005
        %1009 = vst.msk [vmem:[%s431] sm:$0xff] %vm440, %v1008
        %s1010 = sand.u32 %s313, 1
        %s1011 = scalar_lea.sflag [#allocation3], %s1010
        %s1012 = sand.u32 %s313, 1
        %s1013 = smul.addr %s1012, 8
        %s1014 = scalar_lea.vmem [#allocation2], %s1013
        // Predicated region
        $region73: #{tpu_custom_call.1} parent=71 // pred_check
          %p1015 = pneg %p323
        $region74: #{tpu_custom_call.1} parent=71 // pred_check_branch
          %1017 = sbr.rel (%p1015) target = $region76
        $region75: #{tpu_custom_call.1} parent=71 // pred_region
          %1019 = vsyncadd %s1011, 0
          %s1020 = smul.addr %s27, 8
          %s1021 = scalar_lea.hbm %s13, %s1020
          %s1023 = sshll.u32 %s1014, 4
          %s1024 = int_to_ptr.vmem [resolvable:$true] %s1023
          %s1025 = sshll.u32 %s1021, 4
          %s1026 = int_to_ptr.hbm [resolvable:$true] %s1025
          %1028 = dma.vmem_to_hbm [thread:$0]  %s1024, 128, %s1026, %s1011
        $region76: #{tpu_custom_call.1} parent=71 // pred_fallthru
          _
      $region72: #{tpu_custom_call.1} parent=5 // pred_fallthru
        _
      %p1029 = scmp.le.s32.totalorder 2, %s22
      // Predicated region
      $region77: #{tpu_custom_call.1} parent=5 // pred_check
        %p1030 = pneg %p1029
      $region78: #{tpu_custom_call.1} parent=5 // pred_check_branch
        %1032 = sbr.rel (%p1030) target = $region80
      $region79: #{tpu_custom_call.1} parent=5 // pred_region
        %s1033 = ssub.s32 %s22, 2
        // Predicated region
        $region81: #{tpu_custom_call.1} parent=79 // pred_check
          %p1034 = pneg %p329
        $region82: #{tpu_custom_call.1} parent=79 // pred_check_branch
          %1036 = sbr.rel (%p1034) target = $region84
        $region83: #{tpu_custom_call.1} parent=79 // pred_region
          %s1037 = sand.u32 %s314, 1
          %s1038 = scalar_lea.sflag [#allocation3], %s1037
          %s1039 = sand.u32 %s314, 1
          %s1040 = smul.addr %s1039, 8
          %s1041 = scalar_lea.vmem [#allocation2], %s1040
          %1043 = dma.done %s1038, 128
        $region84: #{tpu_custom_call.1} parent=79 // pred_fallthru
          _
      $region80: #{tpu_custom_call.1} parent=5 // pred_fallthru
        _
    $region6: #{tpu_custom_call.1} parent=1 // loop_footer
      %s26 = sadd.s32 1, %s22
    $region7: #{tpu_custom_call.1} parent=1 // loop_footer_branch
      %21 = sbr.rel target = $region3
    $region8: #{tpu_custom_call.1} parent=1 // loop_exit
      _
    %1044 = vsyncpa [#allocation3], 1
    %s1045 = scalar_lea.sflag [#allocation3], 1
    %1046 = vsyncpa %s1045, 1

</llo_original>
